<compile_context>
chip_gen: v7x
topology: tpu7x:2x2x1
jax: 0.10.0
libtpu: 0.0.40
codegen_flags: <defaults>
</compile_context>

<pallas_src>
import jax
import jax.numpy as jnp
from jax.experimental import pallas as pl
from jax.experimental.pallas import tpu as pltpu

EPS_BN = 1e-5
H_DIM = 768          # T5 hidden
F3_DIM = 283         # third-level feature width
F3_PAD = 384         # padded to a multiple of 128
K_STACK = H_DIM + F3_PAD   # 1152 rows of the stacked align weights
A_DIM = 128          # align width
NC = 128             # lane-padded classifier head width (real head is 3)


def _bn_train(x, gamma, beta):
    # nn.BatchNorm1d training mode: per-feature batch mean, *biased* variance, eps=1e-5.
    mu = jnp.mean(x, axis=0, keepdims=True)
    var = jnp.mean(jnp.square(x - mu), axis=0, keepdims=True)
    return (x - mu) * jax.lax.rsqrt(var + EPS_BN) * gamma + beta


def _mlf_kernel(hidden_ref, mask_ref, feat3_ref, w_align_ref, w_cls_ref, vec_ref,
                out_ref, acc_emb, acc_msk, xa_buf):
    s = pl.program_id(0)

    @pl.when(s == 0)
    def _init():
        acc_emb[...] = jnp.zeros_like(acc_emb)
        acc_msk[...] = jnp.zeros_like(acc_msk)

    # --- T5_Encoder tail: attention-mask weighted sum pooling, accumulated over S tiles ---
    mask = mask_ref[...]                                   # (B, TS) f32
    hidden = hidden_ref[...].astype(jnp.float32)           # bf16 -> f32 before VPU math (v5e-safe)
    acc_emb[...] += jnp.sum(hidden * mask[:, :, None], axis=1)          # (B, H)
    acc_msk[...] = acc_msk[...] + jnp.sum(mask, axis=1, keepdims=True)  # lane-dense accumulator

    @pl.when(s == pl.num_programs(0) - 1)
    def _finalize():
        vec = vec_ref[...]                                 # (8, 256) packed per-feature params
        denom = jnp.maximum(acc_msk[:, 0:1], 1e-9)         # clamp(min=1e-9)
        x_pool = acc_emb[...] / denom                      # (B, 768) mean embeddings

        # --- align_x1 / align_x3: two small MXU dots against the stacked (1152,128) weight ---
        xa_buf[:, :A_DIM] = (jnp.dot(x_pool, w_align_ref[0:H_DIM, :],
                                     preferred_element_type=jnp.float32)
                             + vec[0:1, :A_DIM])
        xa_buf[:, A_DIM:] = (jnp.dot(feat3_ref[...], w_align_ref[H_DIM:, :],
                                     preferred_element_type=jnp.float32)
                             + vec[0:1, A_DIM:])
        # align BNs with weight1/weight3 folded into gamma/beta (exact)
        xa = _bn_train(xa_buf[...], vec[1:2, :], vec[2:3, :])
        # fusion BN (256)
        xf = _bn_train(xa, vec[3:4, :], vec[4:5, :])

        # --- classifier: Linear(256->128) + BN + ReLU + Dropout + Linear(128->3 padded) + Sigmoid ---
        h = jnp.dot(xf, w_cls_ref[0:2 * A_DIM, :],
                    preferred_element_type=jnp.float32) + vec[5:6, 0:128]
        h = _bn_train(h, vec[5:6, 128:256], vec[6:7, 0:128])
        h = jnp.maximum(h, 0.0)
        # TODO(synk): nn.Dropout(p=0.2) randomness is not reproducible; applied as identity (eval semantics).
        logits = jnp.dot(h, w_cls_ref[2 * A_DIM:, :],
                         preferred_element_type=jnp.float32) + vec[6:7, 128:256]
        out_ref[...] = jax.nn.sigmoid(logits)              # (B, 128); cols 3: are padding (sliced outside)


def multi_level_framework(last_hidden_state, attention_mask, third_level_feature,
                          packed_params, *, s_tile=128):
    """Runs the whole post-encoder pipeline in one S-tiled Pallas kernel."""
    w_align, w_cls, vec = packed_params
    B, S, H = last_hidden_state.shape

    # Sequence padding to a multiple of the S tile (zero mask => no contribution).
    s_pad = pl.cdiv(S, s_tile) * s_tile
    hidden = last_hidden_state.astype(jnp.bfloat16)        # halve the dominant DMA bytes
    mask = attention_mask.astype(jnp.float32)
    if s_pad != S:
        hidden = jnp.pad(hidden, ((0, 0), (0, s_pad - S), (0, 0)))
        mask = jnp.pad(mask, ((0, 0), (0, s_pad - S)))
    feat3 = third_level_feature.astype(jnp.float32)
    feat3 = jnp.pad(feat3, ((0, 0), (0, F3_PAD - feat3.shape[1])))
    num_tiles = s_pad // s_tile

    # Explicit VMEM budget sized from actual footprint (double-buffered inputs + scratch + margin).
    tile_bytes = B * s_tile * H * 2 + B * s_tile * 4
    param_bytes = (w_align.size + w_cls.size + vec.size + feat3.size) * 4
    out_bytes = B * NC * 4
    scratch_bytes = (B * H + B * NC + B * 2 * A_DIM) * 4
    vmem_limit = int(2 * (tile_bytes + param_bytes + out_bytes) + scratch_bytes + (4 << 20))

    out = pl.pallas_call(
        _mlf_kernel,
        out_shape=jax.ShapeDtypeStruct((B, NC), jnp.float32),
        grid_spec=pltpu.PrefetchScalarGridSpec(
            num_scalar_prefetch=0,
            grid=(num_tiles,),
            in_specs=[
                pl.BlockSpec((B, s_tile, H), lambda s: (0, s, 0)),      # hidden (bf16)
                pl.BlockSpec((B, s_tile), lambda s: (0, s)),            # mask
                pl.BlockSpec((B, F3_PAD), lambda s: (0, 0)),            # feat3 (padded)
                pl.BlockSpec((K_STACK, A_DIM), lambda s: (0, 0)),       # stacked [w_a1; w_a3_pad]
                pl.BlockSpec((2 * A_DIM + NC, NC), lambda s: (0, 0)),   # packed classifier weights
                pl.BlockSpec((8, 2 * A_DIM), lambda s: (0, 0)),         # packed per-feature params
            ],
            out_specs=pl.BlockSpec((B, NC), lambda s: (0, 0)),
            scratch_shapes=[
                pltpu.VMEM((B, H), jnp.float32),            # acc_emb
                pltpu.VMEM((B, NC), jnp.float32),           # acc_msk (lane-dense)
                pltpu.VMEM((B, 2 * A_DIM), jnp.float32),    # [align_x1 | align_x3] buffer
            ],
        ),
        compiler_params=pltpu.CompilerParams(
            dimension_semantics=("arbitrary",),
            vmem_limit_bytes=vmem_limit,
        ),
    )(hidden, mask, feat3, w_align, w_cls, vec)
    return out[:, :3]


def init_params(key):
    """Deterministic init mirroring the module's parameter shapes (linear weights stored transposed)."""
    ks = jax.random.split(key, 6)

    def linear(k, fin, fout):
        bound = 1.0 / (fin ** 0.5)
        kw, kb = jax.random.split(k)
        w = jax.random.uniform(kw, (fin, fout), jnp.float32, -bound, bound)   # W.T
        b = jax.random.uniform(kb, (1, fout), jnp.float32, -bound, bound)
        return w, b

    w_a1, b_a1 = linear(ks[0], H_DIM, A_DIM)
    w_a3, b_a3 = linear(ks[1], F3_DIM, A_DIM)
    w_c1, b_c1 = linear(ks[4], 2 * A_DIM, 128)
    w_c2, b_c2 = linear(ks[5], 128, 3)
    return dict(
        w_a1=w_a1, b_a1=b_a1, g_a1=jnp.ones((1, A_DIM), jnp.float32), be_a1=jnp.zeros((1, A_DIM), jnp.float32),
        w_a3=w_a3, b_a3=b_a3, g_a3=jnp.ones((1, A_DIM), jnp.float32), be_a3=jnp.zeros((1, A_DIM), jnp.float32),
        w1=jax.random.normal(ks[2], (1, A_DIM), jnp.float32),     # nn.Parameter(torch.randn(1,128))
        w3=jax.random.normal(ks[3], (1, A_DIM), jnp.float32),
        g_f=jnp.ones((1, 2 * A_DIM), jnp.float32), be_f=jnp.zeros((1, 2 * A_DIM), jnp.float32),
        w_c1=w_c1, b_c1=b_c1, g_c1=jnp.ones((1, 128), jnp.float32), be_c1=jnp.zeros((1, 128), jnp.float32),
        w_c2=w_c2, b_c2=b_c2,
    )


def pack_params(p):
    """Host-side folds + packing: 21 tensors -> 3 VMEM slabs."""
    # Stacked dense align weight (1152, 128): rows 0:768 = w_a1, rows 768:1051 = w_a3 (zero-padded).
    w_align = jnp.zeros((K_STACK, A_DIM), jnp.float32)
    w_align = w_align.at[:H_DIM, :].set(p['w_a1'])
    w_align = w_align.at[H_DIM:H_DIM + F3_DIM, :].set(p['w_a3'])

    # Packed classifier weights (384, 128): rows 0:256 = w_c1, rows 256:384 = w_c2 padded to 128 cols.
    w_cls = jnp.zeros((2 * A_DIM + NC, NC), jnp.float32)
    w_cls = w_cls.at[:2 * A_DIM, :].set(p['w_c1'])
    w_cls = w_cls.at[2 * A_DIM:, :3].set(p['w_c2'])

    # Per-feature params packed into one (8, 256) slab; weight1/weight3 folded into align-BN affine.
    vec = jnp.zeros((8, 2 * A_DIM), jnp.float32)
    vec = vec.at[0, :A_DIM].set(p['b_a1'][0]).at[0, A_DIM:].set(p['b_a3'][0])
    vec = vec.at[1, :A_DIM].set((p['g_a1'] * p['w1'])[0]).at[1, A_DIM:].set((p['g_a3'] * p['w3'])[0])
    vec = vec.at[2, :A_DIM].set((p['be_a1'] * p['w1'])[0]).at[2, A_DIM:].set((p['be_a3'] * p['w3'])[0])
    vec = vec.at[3].set(p['g_f'][0]).at[4].set(p['be_f'][0])
    vec = vec.at[5, :128].set(p['b_c1'][0]).at[5, 128:].set(p['g_c1'][0])
    vec = vec.at[6, :128].set(p['be_c1'][0]).at[6, 128:128 + 3].set(p['b_c2'][0])
    return w_align, w_cls, vec


def _dot_hi(a, b):
    return jnp.dot(a, b, precision=jax.lax.Precision.HIGHEST)


def ref_forward(hidden_bf16, mask, feat3, p):
    """Pure-JAX reference mirroring the original PyTorch module (unfolded params)."""
    hidden = hidden_bf16.astype(jnp.float32)
    m = mask.astype(jnp.float32)[:, :, None]
    sum_emb = jnp.sum(hidden * m, axis=1)
    x1 = sum_emb / jnp.maximum(jnp.sum(m, axis=1), 1e-9)
    x1 = _bn_train(_dot_hi(x1, p['w_a1']) + p['b_a1'], p['g_a1'], p['be_a1'])
    x3 = _bn_train(_dot_hi(feat3, p['w_a3']) + p['b_a3'], p['g_a3'], p['be_a3'])
    xf = jnp.concatenate([p['w1'] * x1, p['w3'] * x3], axis=-1)
    xf = _bn_train(xf, p['g_f'], p['be_f'])
    h = jnp.maximum(_bn_train(_dot_hi(xf, p['w_c1']) + p['b_c1'], p['g_c1'], p['be_c1']), 0.0)
    return jax.nn.sigmoid(_dot_hi(h, p['w_c2']) + p['b_c2'])


if __name__ == "__main__":
    B, S, VOCAB = 8, 200, 512

    key = jax.random.PRNGKey(0)
    k_ids, k_feat, k_emb, k_params = jax.random.split(key, 4)

    # Module inputs
    input_ids_1 = jax.random.randint(k_ids, (B, S), 0, VOCAB, dtype=jnp.int32)
    lengths = jnp.array([S, 180, 64, 200, 13, 97, 150, 32], dtype=jnp.int32)
    attention_mask_1 = (jnp.arange(S)[None, :] < lengths[:, None]).astype(jnp.float32)  # (B, S)
    third_level_feature = jax.random.normal(k_feat, (B, F3_DIM), jnp.float32)

    # TODO(synk): the pretrained T5EncoderModel stack has no self-contained Pallas equivalent;
    # a deterministic embedding lookup stands in for `last_hidden_state` (plain-JAX glue).
    emb_table = jax.random.normal(k_emb, (VOCAB, H_DIM), jnp.float32)
    last_hidden_state = emb_table[input_ids_1].astype(jnp.bfloat16)   # (B, S, 768) in bf16

    params = init_params(k_params)
    packed = pack_params(params)

    out = multi_level_framework(last_hidden_state, attention_mask_1, third_level_feature, packed)
    out = jax.block_until_ready(out)

    ref = ref_forward(last_hidden_state, attention_mask_1, third_level_feature, params)

    assert out.shape == (B, 3) and bool(jnp.all(jnp.isfinite(out)))
    assert bool(jnp.all((out >= 0.0) & (out <= 1.0)))                 # sigmoid output range
    assert bool(jnp.max(jnp.abs(out - ref)) < 5e-3), float(jnp.max(jnp.abs(out - ref)))
    print("KERNEL_OK")
</pallas_src>

<mosaic_0001>
module attributes {stable_mosaic.version = 11 : i64} {
  func.func @_mlf_kernel(%arg0: i32, %arg1: memref<8x128x768xbf16, #tpu.memory_space<vmem>>, %arg2: memref<8x128xf32, #tpu.memory_space<vmem>>, %arg3: memref<8x384xf32, #tpu.memory_space<vmem>>, %arg4: memref<1152x128xf32, #tpu.memory_space<vmem>>, %arg5: memref<384x128xf32, #tpu.memory_space<vmem>>, %arg6: memref<8x256xf32, #tpu.memory_space<vmem>>, %arg7: memref<8x128xf32, #tpu.memory_space<vmem>>, %arg8: memref<8x768xf32, #tpu.memory_space<vmem>>, %arg9: memref<8x128xf32, #tpu.memory_space<vmem>>, %arg10: memref<8x256xf32, #tpu.memory_space<vmem>>) attributes {dimension_semantics = [#tpu.dimension_semantics<arbitrary>], iteration_bounds = array<i64: 2>, scalar_prefetch = 0 : i64, scratch_operands = 3 : i64, tpu.core_type = #tpu.core_type<tc>, window_params = [{transform_indices = @transform_0, window_bounds = array<i64: 8, 128, 768>}, {transform_indices = @transform_1, window_bounds = array<i64: 8, 128>}, {pipeline_mode = #tpu.pipeline_mode<synchronous>, transform_indices = @transform_2, window_bounds = array<i64: 8, 384>}, {pipeline_mode = #tpu.pipeline_mode<synchronous>, transform_indices = @transform_3, window_bounds = array<i64: 1152, 128>}, {pipeline_mode = #tpu.pipeline_mode<synchronous>, transform_indices = @transform_4, window_bounds = array<i64: 384, 128>}, {pipeline_mode = #tpu.pipeline_mode<synchronous>, transform_indices = @transform_5, window_bounds = array<i64: 8, 256>}, {pipeline_mode = #tpu.pipeline_mode<synchronous>, transform_indices = @transform_6, window_bounds = array<i64: 8, 128>}]} {
    %c0_i32 = arith.constant 0 : i32
    %0 = arith.cmpi eq, %arg0, %c0_i32 : i32
    %1 = arith.extui %0 : i1 to i32
    %c0_i32_0 = arith.constant 0 : i32
    %2 = arith.cmpi ne, %1, %c0_i32_0 : i32
    scf.if %2 {
      %cst_15 = arith.constant 0.000000e+00 : f32
      %22 = vector.broadcast %cst_15 : f32 to vector<8x768xf32>
      %c0_16 = arith.constant 0 : index
      %c0_17 = arith.constant 0 : index
      %23 = vector.load %arg8[%c0_16, %c0_17] : memref<8x768xf32, #tpu.memory_space<vmem>>, vector<8x768xf32>
      tpu.vector_store %arg8[%c0_16, %c0_17], %22 {strides = array<i32>} : memref<8x768xf32, #tpu.memory_space<vmem>>, vector<8x768xf32>,
      %cst_18 = arith.constant 0.000000e+00 : f32
      %24 = vector.broadcast %cst_18 : f32 to vector<8x128xf32>
      %c0_19 = arith.constant 0 : index
      %c0_20 = arith.constant 0 : index
      %25 = vector.load %arg9[%c0_19, %c0_20] : memref<8x128xf32, #tpu.memory_space<vmem>>, vector<8x128xf32>
      tpu.vector_store %arg9[%c0_19, %c0_20], %24 {strides = array<i32>} : memref<8x128xf32, #tpu.memory_space<vmem>>, vector<8x128xf32>,
    } else {
    }
    %c0 = arith.constant 0 : index
    %c0_1 = arith.constant 0 : index
    %3 = vector.load %arg2[%c0, %c0_1] : memref<8x128xf32, #tpu.memory_space<vmem>>, vector<8x128xf32>
    %c0_2 = arith.constant 0 : index
    %c0_3 = arith.constant 0 : index
    %c0_4 = arith.constant 0 : index
    %4 = vector.load %arg1[%c0_2, %c0_3, %c0_4] : memref<8x128x768xbf16, #tpu.memory_space<vmem>>, vector<8x128x768xbf16>
    %5 = arith.extf %4 : vector<8x128x768xbf16> to vector<8x128x768xf32>
    %c0_5 = arith.constant 0 : index
    %c0_6 = arith.constant 0 : index
    %6 = vector.load %arg8[%c0_5, %c0_6] : memref<8x768xf32, #tpu.memory_space<vmem>>, vector<8x768xf32>
    %7 = vector.shape_cast %3 : vector<8x128xf32> to vector<8x128x1xf32>
    %8 = vector.broadcast %7 : vector<8x128x1xf32> to vector<8x128x768xf32>
    %9 = arith.mulf %5, %8 : vector<8x128x768xf32>
    %cst = arith.constant dense<0.000000e+00> : vector<8x768xf32>
    %10 = vector.multi_reduction <add>, %9, %cst [1] : vector<8x128x768xf32> to vector<8x768xf32>
    %11 = arith.addf %6, %10 : vector<8x768xf32>
    %c0_7 = arith.constant 0 : index
    %c0_8 = arith.constant 0 : index
    %12 = vector.load %arg8[%c0_7, %c0_8] : memref<8x768xf32, #tpu.memory_space<vmem>>, vector<8x768xf32>
    tpu.vector_store %arg8[%c0_7, %c0_8], %11 {strides = array<i32>} : memref<8x768xf32, #tpu.memory_space<vmem>>, vector<8x768xf32>,
    %c0_9 = arith.constant 0 : index
    %c0_10 = arith.constant 0 : index
    %13 = vector.load %arg9[%c0_9, %c0_10] : memref<8x128xf32, #tpu.memory_space<vmem>>, vector<8x128xf32>
    %cst_11 = arith.constant dense<0.000000e+00> : vector<8xf32>
    %14 = vector.multi_reduction <add>, %3, %cst_11 [1] : vector<8x128xf32> to vector<8xf32>
    %15 = vector.shape_cast %14 : vector<8xf32> to vector<8x1xf32>
    %16 = vector.broadcast %15 : vector<8x1xf32> to vector<8x128xf32>
    %17 = arith.addf %13, %16 : vector<8x128xf32>
    %c0_12 = arith.constant 0 : index
    %c0_13 = arith.constant 0 : index
    %18 = vector.load %arg9[%c0_12, %c0_13] : memref<8x128xf32, #tpu.memory_space<vmem>>, vector<8x128xf32>
    tpu.vector_store %arg9[%c0_12, %c0_13], %17 {strides = array<i32>} : memref<8x128xf32, #tpu.memory_space<vmem>>, vector<8x128xf32>,
    %c1_i32 = arith.constant 1 : i32
    %19 = arith.cmpi eq, %arg0, %c1_i32 : i32
    %20 = arith.extui %19 : i1 to i32
    %c0_i32_14 = arith.constant 0 : i32
    %21 = arith.cmpi ne, %20, %c0_i32_14 : i32
    scf.if %21 {
      %c0_15 = arith.constant 0 : index
      %c0_16 = arith.constant 0 : index
      %22 = vector.load %arg6[%c0_15, %c0_16] : memref<8x256xf32, #tpu.memory_space<vmem>>, vector<8x256xf32>
      %c0_17 = arith.constant 0 : index
      %c0_18 = arith.constant 0 : index
      %23 = vector.load %arg9[%c0_17, %c0_18] : memref<8x128xf32, #tpu.memory_space<vmem>>, vector<8x1xf32>
      %cst_19 = arith.constant 9.99999971E-10 : f32
      %24 = vector.broadcast %cst_19 : f32 to vector<8x1xf32>
      %25 = arith.maximumf %23, %24 : vector<8x1xf32>
      %c0_20 = arith.constant 0 : index
      %c0_21 = arith.constant 0 : index
      %26 = vector.load %arg8[%c0_20, %c0_21] : memref<8x768xf32, #tpu.memory_space<vmem>>, vector<8x768xf32>
      %27 = vector.broadcast %25 : vector<8x1xf32> to vector<8x768xf32>
      %28 = arith.divf %26, %27 : vector<8x768xf32>
      %c0_22 = arith.constant 0 : index
      %c0_23 = arith.constant 0 : index
      %29 = vector.load %arg4[%c0_22, %c0_23] : memref<1152x128xf32, #tpu.memory_space<vmem>>, vector<768x128xf32>
      %cst_24 = arith.constant dense<0.000000e+00> : vector<8x128xf32>
      %30 = tpu.matmul %28, %29, %cst_24 {dimension_numbers = #tpu.dot_dimension_numbers<[1], [0], [0], [1], [0, 0, 1, 1], [], []>} : vector<8x768xf32>, vector<768x128xf32>, vector<8x128xf32> -> vector<8x128xf32>
      %31 = vector.extract_strided_slice %22 {offsets = [0, 0], sizes = [1, 128], strides = [1, 1]} : vector<8x256xf32> to vector<1x128xf32>
      %32 = vector.broadcast %31 : vector<1x128xf32> to vector<8x128xf32>
      %33 = arith.addf %30, %32 : vector<8x128xf32>
      %c0_25 = arith.constant 0 : index
      %c0_26 = arith.constant 0 : index
      %34 = vector.load %arg10[%c0_25, %c0_26] : memref<8x256xf32, #tpu.memory_space<vmem>>, vector<8x128xf32>
      tpu.vector_store %arg10[%c0_25, %c0_26], %33 {strides = array<i32>} : memref<8x256xf32, #tpu.memory_space<vmem>>, vector<8x128xf32>,
      %c0_27 = arith.constant 0 : index
      %c0_28 = arith.constant 0 : index
      %35 = vector.load %arg3[%c0_27, %c0_28] : memref<8x384xf32, #tpu.memory_space<vmem>>, vector<8x384xf32>
      %c768 = arith.constant 768 : index
      %c0_29 = arith.constant 0 : index
      %36 = vector.load %arg4[%c768, %c0_29] : memref<1152x128xf32, #tpu.memory_space<vmem>>, vector<384x128xf32>
      %cst_30 = arith.constant dense<0.000000e+00> : vector<8x128xf32>
      %37 = tpu.matmul %35, %36, %cst_30 {dimension_numbers = #tpu.dot_dimension_numbers<[1], [0], [0], [1], [0, 0, 1, 1], [], []>} : vector<8x384xf32>, vector<384x128xf32>, vector<8x128xf32> -> vector<8x128xf32>
      %38 = vector.extract_strided_slice %22 {offsets = [0, 128], sizes = [1, 128], strides = [1, 1]} : vector<8x256xf32> to vector<1x128xf32>
      %39 = vector.broadcast %38 : vector<1x128xf32> to vector<8x128xf32>
      %40 = arith.addf %37, %39 : vector<8x128xf32>
      %c0_31 = arith.constant 0 : index
      %c128 = arith.constant 128 : index
      %41 = vector.load %arg10[%c0_31, %c128] : memref<8x256xf32, #tpu.memory_space<vmem>>, vector<8x128xf32>
      tpu.vector_store %arg10[%c0_31, %c128], %40 {strides = array<i32>} : memref<8x256xf32, #tpu.memory_space<vmem>>, vector<8x128xf32>,
      %c0_32 = arith.constant 0 : index
      %c0_33 = arith.constant 0 : index
      %42 = vector.load %arg10[%c0_32, %c0_33] : memref<8x256xf32, #tpu.memory_space<vmem>>, vector<8x256xf32>
      %43 = vector.extract_strided_slice %22 {offsets = [1, 0], sizes = [1, 256], strides = [1, 1]} : vector<8x256xf32> to vector<1x256xf32>
      %44 = vector.extract_strided_slice %22 {offsets = [2, 0], sizes = [1, 256], strides = [1, 1]} : vector<8x256xf32> to vector<1x256xf32>
      %cst_34 = arith.constant dense<0.000000e+00> : vector<256xf32>
      %45 = vector.multi_reduction <add>, %42, %cst_34 [0] : vector<8x256xf32> to vector<256xf32>
      %46 = vector.shape_cast %45 : vector<256xf32> to vector<1x256xf32>
      %cst_35 = arith.constant 8.000000e+00 : f32
      %47 = vector.broadcast %cst_35 : f32 to vector<1x256xf32>
      %48 = arith.divf %46, %47 : vector<1x256xf32>
      %49 = vector.broadcast %48 : vector<1x256xf32> to vector<8x256xf32>
      %50 = arith.subf %42, %49 : vector<8x256xf32>
      %51 = arith.mulf %50, %50 : vector<8x256xf32>
      %cst_36 = arith.constant dense<0.000000e+00> : vector<256xf32>
      %52 = vector.multi_reduction <add>, %51, %cst_36 [0] : vector<8x256xf32> to vector<256xf32>
      %53 = vector.shape_cast %52 : vector<256xf32> to vector<1x256xf32>
      %cst_37 = arith.constant 8.000000e+00 : f32
      %54 = vector.broadcast %cst_37 : f32 to vector<1x256xf32>
      %55 = arith.divf %53, %54 : vector<1x256xf32>
      %56 = vector.broadcast %48 : vector<1x256xf32> to vector<8x256xf32>
      %57 = arith.subf %42, %56 : vector<8x256xf32>
      %cst_38 = arith.constant 9.99999974E-6 : f32
      %58 = vector.broadcast %cst_38 : f32 to vector<1x256xf32>
      %59 = arith.addf %55, %58 : vector<1x256xf32>
      %60 = math.rsqrt %59 : vector<1x256xf32>
      %61 = vector.broadcast %60 : vector<1x256xf32> to vector<8x256xf32>
      %62 = arith.mulf %57, %61 : vector<8x256xf32>
      %63 = vector.broadcast %43 : vector<1x256xf32> to vector<8x256xf32>
      %64 = arith.mulf %62, %63 : vector<8x256xf32>
      %65 = vector.broadcast %44 : vector<1x256xf32> to vector<8x256xf32>
      %66 = arith.addf %64, %65 : vector<8x256xf32>
      %67 = vector.extract_strided_slice %22 {offsets = [3, 0], sizes = [1, 256], strides = [1, 1]} : vector<8x256xf32> to vector<1x256xf32>
      %68 = vector.extract_strided_slice %22 {offsets = [4, 0], sizes = [1, 256], strides = [1, 1]} : vector<8x256xf32> to vector<1x256xf32>
      %cst_39 = arith.constant dense<0.000000e+00> : vector<256xf32>
      %69 = vector.multi_reduction <add>, %66, %cst_39 [0] : vector<8x256xf32> to vector<256xf32>
      %70 = vector.shape_cast %69 : vector<256xf32> to vector<1x256xf32>
      %cst_40 = arith.constant 8.000000e+00 : f32
      %71 = vector.broadcast %cst_40 : f32 to vector<1x256xf32>
      %72 = arith.divf %70, %71 : vector<1x256xf32>
      %73 = vector.broadcast %72 : vector<1x256xf32> to vector<8x256xf32>
      %74 = arith.subf %66, %73 : vector<8x256xf32>
      %75 = arith.mulf %74, %74 : vector<8x256xf32>
      %cst_41 = arith.constant dense<0.000000e+00> : vector<256xf32>
      %76 = vector.multi_reduction <add>, %75, %cst_41 [0] : vector<8x256xf32> to vector<256xf32>
      %77 = vector.shape_cast %76 : vector<256xf32> to vector<1x256xf32>
      %cst_42 = arith.constant 8.000000e+00 : f32
      %78 = vector.broadcast %cst_42 : f32 to vector<1x256xf32>
      %79 = arith.divf %77, %78 : vector<1x256xf32>
      %80 = vector.broadcast %72 : vector<1x256xf32> to vector<8x256xf32>
      %81 = arith.subf %66, %80 : vector<8x256xf32>
      %cst_43 = arith.constant 9.99999974E-6 : f32
      %82 = vector.broadcast %cst_43 : f32 to vector<1x256xf32>
      %83 = arith.addf %79, %82 : vector<1x256xf32>
      %84 = math.rsqrt %83 : vector<1x256xf32>
      %85 = vector.broadcast %84 : vector<1x256xf32> to vector<8x256xf32>
      %86 = arith.mulf %81, %85 : vector<8x256xf32>
      %87 = vector.broadcast %67 : vector<1x256xf32> to vector<8x256xf32>
      %88 = arith.mulf %86, %87 : vector<8x256xf32>
      %89 = vector.broadcast %68 : vector<1x256xf32> to vector<8x256xf32>
      %90 = arith.addf %88, %89 : vector<8x256xf32>
      %c0_44 = arith.constant 0 : index
      %c0_45 = arith.constant 0 : index
      %91 = vector.load %arg5[%c0_44, %c0_45] : memref<384x128xf32, #tpu.memory_space<vmem>>, vector<256x128xf32>
      %cst_46 = arith.constant dense<0.000000e+00> : vector<8x128xf32>
      %92 = tpu.matmul %90, %91, %cst_46 {dimension_numbers = #tpu.dot_dimension_numbers<[1], [0], [0], [1], [0, 0, 1, 1], [], []>} : vector<8x256xf32>, vector<256x128xf32>, vector<8x128xf32> -> vector<8x128xf32>
      %93 = vector.extract_strided_slice %22 {offsets = [5, 0], sizes = [1, 128], strides = [1, 1]} : vector<8x256xf32> to vector<1x128xf32>
      %94 = vector.broadcast %93 : vector<1x128xf32> to vector<8x128xf32>
      %95 = arith.addf %92, %94 : vector<8x128xf32>
      %96 = vector.extract_strided_slice %22 {offsets = [5, 128], sizes = [1, 128], strides = [1, 1]} : vector<8x256xf32> to vector<1x128xf32>
      %97 = vector.extract_strided_slice %22 {offsets = [6, 0], sizes = [1, 128], strides = [1, 1]} : vector<8x256xf32> to vector<1x128xf32>
      %cst_47 = arith.constant dense<0.000000e+00> : vector<128xf32>
      %98 = vector.multi_reduction <add>, %95, %cst_47 [0] : vector<8x128xf32> to vector<128xf32>
      %99 = vector.shape_cast %98 : vector<128xf32> to vector<1x128xf32>
      %cst_48 = arith.constant 8.000000e+00 : f32
      %100 = vector.broadcast %cst_48 : f32 to vector<1x128xf32>
      %101 = arith.divf %99, %100 : vector<1x128xf32>
      %102 = vector.broadcast %101 : vector<1x128xf32> to vector<8x128xf32>
      %103 = arith.subf %95, %102 : vector<8x128xf32>
      %104 = arith.mulf %103, %103 : vector<8x128xf32>
      %cst_49 = arith.constant dense<0.000000e+00> : vector<128xf32>
      %105 = vector.multi_reduction <add>, %104, %cst_49 [0] : vector<8x128xf32> to vector<128xf32>
      %106 = vector.shape_cast %105 : vector<128xf32> to vector<1x128xf32>
      %cst_50 = arith.constant 8.000000e+00 : f32
      %107 = vector.broadcast %cst_50 : f32 to vector<1x128xf32>
      %108 = arith.divf %106, %107 : vector<1x128xf32>
      %109 = vector.broadcast %101 : vector<1x128xf32> to vector<8x128xf32>
      %110 = arith.subf %95, %109 : vector<8x128xf32>
      %cst_51 = arith.constant 9.99999974E-6 : f32
      %111 = vector.broadcast %cst_51 : f32 to vector<1x128xf32>
      %112 = arith.addf %108, %111 : vector<1x128xf32>
      %113 = math.rsqrt %112 : vector<1x128xf32>
      %114 = vector.broadcast %113 : vector<1x128xf32> to vector<8x128xf32>
      %115 = arith.mulf %110, %114 : vector<8x128xf32>
      %116 = vector.broadcast %96 : vector<1x128xf32> to vector<8x128xf32>
      %117 = arith.mulf %115, %116 : vector<8x128xf32>
      %118 = vector.broadcast %97 : vector<1x128xf32> to vector<8x128xf32>
      %119 = arith.addf %117, %118 : vector<8x128xf32>
      %cst_52 = arith.constant 0.000000e+00 : f32
      %120 = vector.broadcast %cst_52 : f32 to vector<8x128xf32>
      %121 = arith.maximumf %119, %120 : vector<8x128xf32>
      %c256 = arith.constant 256 : index
      %c0_53 = arith.constant 0 : index
      %122 = vector.load %arg5[%c256, %c0_53] : memref<384x128xf32, #tpu.memory_space<vmem>>, vector<128x128xf32>
      %cst_54 = arith.constant dense<0.000000e+00> : vector<8x128xf32>
      %123 = tpu.matmul %121, %122, %cst_54 {dimension_numbers = #tpu.dot_dimension_numbers<[1], [0], [0], [1], [0, 0, 1, 1], [], []>} : vector<8x128xf32>, vector<128x128xf32>, vector<8x128xf32> -> vector<8x128xf32>
      %124 = vector.extract_strided_slice %22 {offsets = [6, 128], sizes = [1, 128], strides = [1, 1]} : vector<8x256xf32> to vector<1x128xf32>
      %125 = vector.broadcast %124 : vector<1x128xf32> to vector<8x128xf32>
      %126 = arith.addf %123, %125 : vector<8x128xf32>
      %127 = arith.negf %126 : vector<8x128xf32>
      %128 = math.exp %127 : vector<8x128xf32>
      %cst_55 = arith.constant 1.000000e+00 : f32
      %129 = vector.broadcast %cst_55 : f32 to vector<8x128xf32>
      %130 = arith.addf %129, %128 : vector<8x128xf32>
      %131 = arith.divf %129, %130 : vector<8x128xf32>
      %c0_56 = arith.constant 0 : index
      %c0_57 = arith.constant 0 : index
      %132 = vector.load %arg7[%c0_56, %c0_57] : memref<8x128xf32, #tpu.memory_space<vmem>>, vector<8x128xf32>
      tpu.vector_store %arg7[%c0_56, %c0_57], %131 {strides = array<i32>} : memref<8x128xf32, #tpu.memory_space<vmem>>, vector<8x128xf32>,
    } else {
    }
    return
  }
  func.func @transform_0(%arg0: i32) -> (i32, i32, i32) {
    %c0_i32 = arith.constant 0 : i32
    %c0_i32_0 = arith.constant 0 : i32
    %c0_i32_1 = arith.constant 0 : i32
    return %c0_i32, %arg0, %c0_i32_0 : i32, i32, i32
  }
  func.func @transform_1(%arg0: i32) -> (i32, i32) {
    %c0_i32 = arith.constant 0 : i32
    %c0_i32_0 = arith.constant 0 : i32
    return %c0_i32, %arg0 : i32, i32
  }
  func.func @transform_2(%arg0: i32) -> (i32, i32) {
    %c0_i32 = arith.constant 0 : i32
    %c0_i32_0 = arith.constant 0 : i32
    %c0_i32_1 = arith.constant 0 : i32
    return %c0_i32, %c0_i32_0 : i32, i32
  }
  func.func @transform_3(%arg0: i32) -> (i32, i32) {
    %c0_i32 = arith.constant 0 : i32
    %c0_i32_0 = arith.constant 0 : i32
    %c0_i32_1 = arith.constant 0 : i32
    return %c0_i32, %c0_i32_0 : i32, i32
  }
  func.func @transform_4(%arg0: i32) -> (i32, i32) {
    %c0_i32 = arith.constant 0 : i32
    %c0_i32_0 = arith.constant 0 : i32
    %c0_i32_1 = arith.constant 0 : i32
    return %c0_i32, %c0_i32_0 : i32, i32
  }
  func.func @transform_5(%arg0: i32) -> (i32, i32) {
    %c0_i32 = arith.constant 0 : i32
    %c0_i32_0 = arith.constant 0 : i32
    %c0_i32_1 = arith.constant 0 : i32
    return %c0_i32, %c0_i32_0 : i32, i32
  }
  func.func @transform_6(%arg0: i32) -> (i32, i32) {
    %c0_i32 = arith.constant 0 : i32
    %c0_i32_0 = arith.constant 0 : i32
    %c0_i32_1 = arith.constant 0 : i32
    return %c0_i32, %c0_i32_0 : i32, i32
  }
}

</mosaic_0001>

<llo_original>
// kernel: tpu_custom_call.1
$region0: #{tpu_custom_call.1}
  #allocation0 [shape = 'u32[]', space=smem, size = 0x4, offset = 0x4, fixed_abs, tag = 'smem constant byte address 0x4 - core index']
  #allocation1 [shape = 'u32[144,128]{1,0:T(1,128)}', space=vmem, size = 0x12000, scoped, tag = 'internal scratch']
  #allocation2 [shape = 'f32[8,768]{1,0:T(8,128)}', space=vmem, size = 0x6000, scoped, tag = 'scratch operand']
  #allocation3 [shape = 'f32[8,128]{1,0:T(8,128)}', space=vmem, size = 0x1000, scoped, tag = 'scratch operand']
  #allocation4 [shape = 'f32[8,256]{1,0:T(8,128)}', space=vmem, size = 0x2000, scoped, tag = 'scratch operand']
  #allocation17 [shape = 's32[]', space=sflag, size = 0x4, offset = 0, fixed_abs, tag = 'sflag constant byte address 0x0 - dummy sync flag']
  %s0 = inlined_call_operand.hbm [shape: bf16[8,256,768], index: 0, kind: input, shape index: {}]
  %s1 = inlined_call_operand.hbm [shape: f32[8,256], index: 1, kind: input, shape index: {}]
  %s2 = inlined_call_operand.hbm [shape: f32[8,384], index: 2, kind: input, shape index: {}]
  %s3 = inlined_call_operand.hbm [shape: f32[1152,128], index: 3, kind: input, shape index: {}]
  %s4 = inlined_call_operand.hbm [shape: f32[384,128], index: 4, kind: input, shape index: {}]
  %s5 = inlined_call_operand.hbm [shape: f32[8,256], index: 5, kind: input, shape index: {}]
  %s6 = inlined_call_operand.hbm [shape: f32[8,128], index: 6, kind: output, shape index: {}]
  %s7 = sld [smem:[#allocation0]]
  $region89: #{tpu_custom_call.1} parent=0
    _
  %s9 = ssub.s32 1, %s7
  %s10 = scalar_select 0, %s9, %s7
  $region1: #{tpu_custom_call.1} parent=0
    #allocation5 [shape = 'u8[3145728]{0}', space=vmem, size = 0x300000, scoped, tag = 'input window, operand 0']
    #allocation6 [shape = 's32[2]{0}', space=sflag, size = 0x8, scoped, tag = 'scoped memory for tpu_custom_call.1']
    #allocation7 [shape = 's32[2]{0}', space=sflag, size = 0x8, scoped, tag = 'scoped memory for tpu_custom_call.1']
    #allocation8 [shape = 'u8[8192]{0}', space=vmem, size = 0x2000, scoped, tag = 'input window, operand 1']
    #allocation9 [shape = 's32[2]{0}', space=sflag, size = 0x8, scoped, tag = 'scoped memory for tpu_custom_call.1']
    #allocation10 [shape = 'u8[12288]{0}', space=vmem, size = 0x3000, scoped, tag = 'input window, operand 2, single buffered']
    #allocation11 [shape = 'u8[589824]{0}', space=vmem, size = 0x90000, scoped, tag = 'input window, operand 3, single buffered']
    #allocation12 [shape = 's32[1]{0}', space=sflag, size = 0x4, scoped, tag = 'scoped memory for tpu_custom_call.1']
    #allocation13 [shape = 'u8[196608]{0}', space=vmem, size = 0x30000, scoped, tag = 'input window, operand 4, single buffered']
    #allocation14 [shape = 'u8[8192]{0}', space=vmem, size = 0x2000, scoped, tag = 'input window, operand 5, single buffered']
    #allocation15 [shape = 's32[1]{0}', space=sflag, size = 0x4, scoped, tag = 'scoped memory for tpu_custom_call.1']
    #allocation16 [shape = 'u8[4096]{0}', space=vmem, size = 0x1000, scoped, tag = 'output window, operand 0, single buffered']
    %11 = vsyncpa [#allocation6], 0
    %s12 = scalar_lea.sflag [#allocation6], 1
    %13 = vsyncpa %s12, 0
    %14 = vsyncpa [#allocation9], 0
    %s15 = scalar_lea.sflag [#allocation9], 1
    %16 = vsyncpa %s15, 0
    %17 = vsyncpa [#allocation12], 0
    %18 = vsyncpa [#allocation15], 0
    %19 = vsyncpa [#allocation7], 0
    loop: start=0, step=1, limit=4
    $region2: #{tpu_custom_call.1} parent=1 // loop_pre_header
      _
    $region3: #{tpu_custom_call.1} parent=1 // loop_header
      %s21 = sphi 0, %s25
      %p22 = scmp.ge.s32.totalorder %s21, 4
      %s31 = sphi 0, %s33
      %s34 = sphi 0, %s31
      %s35 = sphi 0, %s34
      %s51 = sphi 0, %s35
      %s57 = sphi 0, %s59
      %s60 = sphi 0, %s57
      %s61 = sphi 0, %s60
      %s77 = sphi 0, %s61
      %s81 = sphi 0, %s81
      %s83 = sphi 0, %s81
      %s84 = sphi 0, %s83
      %s98 = sphi 0, %s84
      %s102 = sphi 0, %s102
      %s104 = sphi 0, %s102
      %s105 = sphi 0, %s104
      %s119 = sphi 0, %s105
      %s123 = sphi 0, %s123
      %s125 = sphi 0, %s123
      %s126 = sphi 0, %s125
      %s140 = sphi 0, %s126
      %s144 = sphi 0, %s144
      %s146 = sphi 0, %s144
      %s147 = sphi 0, %s146
      %s161 = sphi 0, %s147
      %s165 = sphi 0, %s165
      %s167 = sphi 0, %s165
      %s168 = sphi 0, %s167
      %s182 = sphi 0, %s168
    $region4: #{tpu_custom_call.1} parent=1 // loop_header_branch
      %24 = sbr.rel (%p22) target = $region8
    $region5: #{tpu_custom_call.1} parent=1 // loop_body
      %s26 = ssub.s32 %s21, 1
      %s27 = ssub.s32 %s21, 2
      %s28 = sadd.s32 %s21, 1
      %s29 = ssub.s32 %s21, %s28
      %p30 = scmp.eq.s32.totalorder %s29, 0
      %s32 = sadd.s32 %s31, 1
      %s33 = scalar_select %p30, %s31, %s32
      %p36 = pneg %p30
      %p37 = scmp.eq.s32.totalorder %s21, 1
      %p38 = por %p36, %p37
      %p39 = scmp.ne.s32.totalorder %s31, %s34
      %p40 = scmp.eq.s32.totalorder %s21, 0
      %p41 = por %p39, %p40
      %p42 = scmp.ne.s32.totalorder %s31, %s34
      %p43 = scmp.eq.s32.totalorder %s26, 1
      %p44 = por %p42, %p43
      %p45 = scmp.ne.s32.totalorder %s34, %s35
      %p46 = scmp.eq.s32.totalorder %s26, 0
      %p47 = por %p45, %p46
      %p48 = scmp.ne.s32.totalorder %s34, %s35
      %p49 = scmp.eq.s32.totalorder %s27, 1
      %p50 = por %p48, %p49
      %p52 = scmp.ne.s32.totalorder %s35, %s51
      %p53 = scmp.eq.s32.totalorder %s27, 0
      %p54 = por %p52, %p53
      %s55 = ssub.s32 %s21, %s28
      %p56 = scmp.eq.s32.totalorder %s55, 0
      %s58 = sadd.s32 %s57, 1
      %s59 = scalar_select %p56, %s57, %s58
      %p62 = pneg %p56
      %p63 = scmp.eq.s32.totalorder %s21, 1
      %p64 = por %p62, %p63
      %p65 = scmp.ne.s32.totalorder %s57, %s60
      %p66 = scmp.eq.s32.totalorder %s21, 0
      %p67 = por %p65, %p66
      %p68 = scmp.ne.s32.totalorder %s57, %s60
      %p69 = scmp.eq.s32.totalorder %s26, 1
      %p70 = por %p68, %p69
      %p71 = scmp.ne.s32.totalorder %s60, %s61
      %p72 = scmp.eq.s32.totalorder %s26, 0
      %p73 = por %p71, %p72
      %p74 = scmp.ne.s32.totalorder %s60, %s61
      %p75 = scmp.eq.s32.totalorder %s27, 1
      %p76 = por %p74, %p75
      %p78 = scmp.ne.s32.totalorder %s61, %s77
      %p79 = scmp.eq.s32.totalorder %s27, 0
      %p80 = por %p78, %p79
      %s82 = sadd.s32 %s81, 1
      %p85 = scmp.eq.s32.totalorder %s21, 1
      %p86 = scmp.ne.s32.totalorder %s81, %s83
      %p87 = scmp.eq.s32.totalorder %s21, 0
      %p88 = por %p86, %p87
      %p89 = scmp.ne.s32.totalorder %s81, %s83
      %p90 = scmp.eq.s32.totalorder %s26, 1
      %p91 = por %p89, %p90
      %p92 = scmp.ne.s32.totalorder %s83, %s84
      %p93 = scmp.eq.s32.totalorder %s26, 0
      %p94 = por %p92, %p93
      %p95 = scmp.ne.s32.totalorder %s83, %s84
      %p96 = scmp.eq.s32.totalorder %s27, 1
      %p97 = por %p95, %p96
      %p99 = scmp.ne.s32.totalorder %s84, %s98
      %p100 = scmp.eq.s32.totalorder %s27, 0
      %p101 = por %p99, %p100
      %s103 = sadd.s32 %s102, 1
      %p106 = scmp.eq.s32.totalorder %s21, 1
      %p107 = scmp.ne.s32.totalorder %s102, %s104
      %p108 = scmp.eq.s32.totalorder %s21, 0
      %p109 = por %p107, %p108
      %p110 = scmp.ne.s32.totalorder %s102, %s104
      %p111 = scmp.eq.s32.totalorder %s26, 1
      %p112 = por %p110, %p111
      %p113 = scmp.ne.s32.totalorder %s104, %s105
      %p114 = scmp.eq.s32.totalorder %s26, 0
      %p115 = por %p113, %p114
      %p116 = scmp.ne.s32.totalorder %s104, %s105
      %p117 = scmp.eq.s32.totalorder %s27, 1
      %p118 = por %p116, %p117
      %p120 = scmp.ne.s32.totalorder %s105, %s119
      %p121 = scmp.eq.s32.totalorder %s27, 0
      %p122 = por %p120, %p121
      %s124 = sadd.s32 %s123, 1
      %p127 = scmp.eq.s32.totalorder %s21, 1
      %p128 = scmp.ne.s32.totalorder %s123, %s125
      %p129 = scmp.eq.s32.totalorder %s21, 0
      %p130 = por %p128, %p129
      %p131 = scmp.ne.s32.totalorder %s123, %s125
      %p132 = scmp.eq.s32.totalorder %s26, 1
      %p133 = por %p131, %p132
      %p134 = scmp.ne.s32.totalorder %s125, %s126
      %p135 = scmp.eq.s32.totalorder %s26, 0
      %p136 = por %p134, %p135
      %p137 = scmp.ne.s32.totalorder %s125, %s126
      %p138 = scmp.eq.s32.totalorder %s27, 1
      %p139 = por %p137, %p138
      %p141 = scmp.ne.s32.totalorder %s126, %s140
      %p142 = scmp.eq.s32.totalorder %s27, 0
      %p143 = por %p141, %p142
      %s145 = sadd.s32 %s144, 1
      %p148 = scmp.eq.s32.totalorder %s21, 1
      %p149 = scmp.ne.s32.totalorder %s144, %s146
      %p150 = scmp.eq.s32.totalorder %s21, 0
      %p151 = por %p149, %p150
      %p152 = scmp.ne.s32.totalorder %s144, %s146
      %p153 = scmp.eq.s32.totalorder %s26, 1
      %p154 = por %p152, %p153
      %p155 = scmp.ne.s32.totalorder %s146, %s147
      %p156 = scmp.eq.s32.totalorder %s26, 0
      %p157 = por %p155, %p156
      %p158 = scmp.ne.s32.totalorder %s146, %s147
      %p159 = scmp.eq.s32.totalorder %s27, 1
      %p160 = por %p158, %p159
      %p162 = scmp.ne.s32.totalorder %s147, %s161
      %p163 = scmp.eq.s32.totalorder %s27, 0
      %p164 = por %p162, %p163
      %s166 = sadd.s32 %s165, 1
      %p169 = scmp.eq.s32.totalorder %s21, 1
      %p170 = scmp.ne.s32.totalorder %s165, %s167
      %p171 = scmp.eq.s32.totalorder %s21, 0
      %p172 = por %p170, %p171
      %p173 = scmp.ne.s32.totalorder %s165, %s167
      %p174 = scmp.eq.s32.totalorder %s26, 1
      %p175 = por %p173, %p174
      %p176 = scmp.ne.s32.totalorder %s167, %s168
      %p177 = scmp.eq.s32.totalorder %s26, 0
      %p178 = por %p176, %p177
      %p179 = scmp.ne.s32.totalorder %s167, %s168
      %p180 = scmp.eq.s32.totalorder %s27, 1
      %p181 = por %p179, %p180
      %p183 = scmp.ne.s32.totalorder %s168, %s182
      %p184 = scmp.eq.s32.totalorder %s27, 0
      %p185 = por %p183, %p184
      %p186 = scmp.le.s32.totalorder 1, %s21
      %p187 = scmp.lt.s32.totalorder %s21, 3
      %p188 = pnand %p186, %p187
      %p189 = pneg %p188
      // Predicated region
      $region9: #{tpu_custom_call.1} parent=5 // pred_check
        _
      $region10: #{tpu_custom_call.1} parent=5 // pred_check_branch
        %191 = sbr.rel (%p188) target = $region12
      $region11: #{tpu_custom_call.1} parent=5 // pred_region
        %s192 = ssub.s32 %s21, 1
        // Predicated region
        $region13: #{tpu_custom_call.1} parent=11 // pred_check
          %p193 = pneg %p94
        $region14: #{tpu_custom_call.1} parent=11 // pred_check_branch
          %195 = sbr.rel (%p193) target = $region16
        $region15: #{tpu_custom_call.1} parent=11 // pred_region
          %s197 = ssub.s32 384, 384
          %198 = vsyncadd [#allocation9], %s197
          %s200 = sshll.u32 [#allocation10], 4
          %s201 = int_to_ptr.vmem [resolvable:$true] %s200
          %203 = dma.hbm_to_vmem [thread:$0]  %s2, 384, %s201, [#allocation9]
        $region16: #{tpu_custom_call.1} parent=11 // pred_fallthru
          _
        // Predicated region
        $region17: #{tpu_custom_call.1} parent=11 // pred_check
          %p204 = pneg %p115
        $region18: #{tpu_custom_call.1} parent=11 // pred_check_branch
          %206 = sbr.rel (%p204) target = $region20
        $region19: #{tpu_custom_call.1} parent=11 // pred_region
          %s208 = ssub.s32 18432, 18432
          %209 = vsyncadd [#allocation12], %s208
          %s210 = sshll.u32 [#allocation11], 4
          %s211 = int_to_ptr.vmem [resolvable:$true] %s210
          %216 = dma.hbm_to_vmem [thread:$0]  %s3, 18432, %s211, [#allocation12], 128, 128, 8
        $region20: #{tpu_custom_call.1} parent=11 // pred_fallthru
          _
        // Predicated region
        $region21: #{tpu_custom_call.1} parent=11 // pred_check
          %p217 = pneg %p136
        $region22: #{tpu_custom_call.1} parent=11 // pred_check_branch
          %219 = sbr.rel (%p217) target = $region24
        $region23: #{tpu_custom_call.1} parent=11 // pred_region
          %s221 = ssub.s32 6144, 6144
          %222 = vsyncadd [#allocation12], %s221
          %s223 = sshll.u32 [#allocation13], 4
          %s224 = int_to_ptr.vmem [resolvable:$true] %s223
          %229 = dma.hbm_to_vmem [thread:$0]  %s4, 6144, %s224, [#allocation12], 128, 128, 8
        $region24: #{tpu_custom_call.1} parent=11 // pred_fallthru
          _
        // Predicated region
        $region25: #{tpu_custom_call.1} parent=11 // pred_check
          %p230 = pneg %p157
        $region26: #{tpu_custom_call.1} parent=11 // pred_check_branch
          %232 = sbr.rel (%p230) target = $region28
        $region27: #{tpu_custom_call.1} parent=11 // pred_region
          %s234 = ssub.s32 256, 256
          %235 = vsyncadd [#allocation15], %s234
          %s237 = sshll.u32 [#allocation14], 4
          %s238 = int_to_ptr.vmem [resolvable:$true] %s237
          %240 = dma.hbm_to_vmem [thread:$0]  %s5, 256, %s238, [#allocation15]
        $region28: #{tpu_custom_call.1} parent=11 // pred_fallthru
          _
      $region12: #{tpu_custom_call.1} parent=5 // pred_fallthru
        _
      %p241 = scmp.lt.s32.totalorder %s21, 2
      // Predicated region
      $region29: #{tpu_custom_call.1} parent=5 // pred_check
        %p242 = pneg %p241
      $region30: #{tpu_custom_call.1} parent=5 // pred_check_branch
        %244 = sbr.rel (%p242) target = $region32
      $region31: #{tpu_custom_call.1} parent=5 // pred_region
        // Predicated region
        $region33: #{tpu_custom_call.1} parent=31 // pred_check
          %p245 = pneg %p41
        $region34: #{tpu_custom_call.1} parent=31 // pred_check_branch
          %247 = sbr.rel (%p245) target = $region36
        $region35: #{tpu_custom_call.1} parent=31 // pred_region
          #allocation18 [shape = 'u32[6]{0}', space=smem, size = 0x18, scoped, tag = 'DMA stride descriptor']
          %s248 = sand.u32 %s31, 1
          %s249 = scalar_lea.sflag [#allocation6], %s248
          %s250 = sand.u32 %s31, 1
          %s251 = smul.addr %s250, 3072
          %s252 = scalar_lea.vmem [#allocation5], %s251
          %s253 = smul.u32 16, %s21
          %s255 = ssub.s32 49152, 49152
          %256 = vsyncadd %s249, %s255
          %s257 = smul.addr %s253, 6
          %s258 = smul.addr %s257, 64
          %s259 = scalar_lea.hbm %s0, %s258
          %s261 = sshll.u32 1, 14
          %s262 = sxor.u32 4294967295, %s261
          %s264 = sld [smem:[#allocation0]]
          %s265 = sadd.s32 2, %s264
          %s267 = sshll.u32 7, 26
          %s268 = sxor.u32 4294967295, %s267
          %s269 = sand.u32 0, %s268
          %s270 = sshll.u32 %s265, 26
          %s271 = sor.u32 %s269, %s270
          %s272 = sshll.u32 %s252, 4
          %s273 = int_to_ptr.vmem [resolvable:$true] %s272
          %279 = sst [smem:[#allocation18]] 12288
          %s280 = scalar_lea.smem [#allocation18], 1
          %281 = sst [smem:[%s280]] 6144
          %s282 = scalar_lea.smem [#allocation18], 2
          %283 = sst [smem:[%s282]] 16
          %s284 = scalar_lea.smem [#allocation18], 3
          %285 = sst [smem:[%s284]] 384
          %s286 = scalar_lea.smem [#allocation18], 4
          %287 = sst [smem:[%s286]] 384
          %s288 = scalar_lea.smem [#allocation18], 5
          %289 = sst [smem:[%s288]] 24
          %291 = dma.general %s259, 49152, %s273, %s249, [#allocation17], [#allocation18], %s271, 0
        $region36: #{tpu_custom_call.1} parent=31 // pred_fallthru
          _
        // Predicated region
        $region37: #{tpu_custom_call.1} parent=31 // pred_check
          %p292 = pneg %p67
        $region38: #{tpu_custom_call.1} parent=31 // pred_check_branch
          %294 = sbr.rel (%p292) target = $region40
        $region39: #{tpu_custom_call.1} parent=31 // pred_region
          %s295 = sand.u32 %s21, 1
          %s296 = scalar_lea.sflag [#allocation9], %s295
          %s297 = sand.u32 %s57, 1
          %s298 = smul.addr %s297, 8
          %s299 = scalar_lea.vmem [#allocation8], %s298
          %s301 = ssub.s32 128, 128
          %302 = vsyncadd %s296, %s301
          %s303 = smul.addr %s21, 128
          %s304 = scalar_lea.hbm %s1, %s303
          %s306 = sshll.u32 %s299, 4
          %s307 = int_to_ptr.vmem [resolvable:$true] %s306
          %309 = dma.hbm_to_vmem [thread:$0]  %s304, 128, %s307, %s296
        $region40: #{tpu_custom_call.1} parent=31 // pred_fallthru
          _
      $region32: #{tpu_custom_call.1} parent=5 // pred_fallthru
        _
      %p310 = scmp.le.s32.totalorder 1, %s21
      %p311 = scmp.lt.s32.totalorder %s21, 3
      %p312 = pnand %p310, %p311
      %p313 = pneg %p312
      // Predicated region
      $region41: #{tpu_custom_call.1} parent=5 // pred_check
        _
      $region42: #{tpu_custom_call.1} parent=5 // pred_check_branch
        %315 = sbr.rel (%p312) target = $region44
      $region43: #{tpu_custom_call.1} parent=5 // pred_region
        %s316 = ssub.s32 %s21, 1
        %s317 = sand.u32 %s34, 1
        %s318 = scalar_lea.sflag [#allocation6], %s317
        %s319 = sand.u32 %s34, 1
        %s320 = smul.addr %s319, 3072
        %s321 = scalar_lea.vmem [#allocation5], %s320
        // Predicated region
        $region45: #{tpu_custom_call.1} parent=43 // pred_check
          %p322 = pneg %p47
        $region46: #{tpu_custom_call.1} parent=43 // pred_check_branch
          %324 = sbr.rel (%p322) target = $region48
        $region47: #{tpu_custom_call.1} parent=43 // pred_region
          %325 = dma.done %s318, 49152
        $region48: #{tpu_custom_call.1} parent=43 // pred_fallthru
          _
        %s326 = sand.u32 %s26, 1
        %s327 = scalar_lea.sflag [#allocation9], %s326
        %s328 = sand.u32 %s60, 1
        %s329 = smul.addr %s328, 8
        %s330 = scalar_lea.vmem [#allocation8], %s329
        // Predicated region
        $region49: #{tpu_custom_call.1} parent=43 // pred_check
          %p331 = pneg %p73
        $region50: #{tpu_custom_call.1} parent=43 // pred_check_branch
          %333 = sbr.rel (%p331) target = $region52
        $region51: #{tpu_custom_call.1} parent=43 // pred_region
          %334 = dma.done %s327, 128
        $region52: #{tpu_custom_call.1} parent=43 // pred_fallthru
          _
        // Predicated region
        $region53: #{tpu_custom_call.1} parent=43 // pred_check
          %p335 = pneg %p94
        $region54: #{tpu_custom_call.1} parent=43 // pred_check_branch
          %337 = sbr.rel (%p335) target = $region56
        $region55: #{tpu_custom_call.1} parent=43 // pred_region
          %338 = dma.done [#allocation9], 384
        $region56: #{tpu_custom_call.1} parent=43 // pred_fallthru
          _
        // Predicated region
        $region57: #{tpu_custom_call.1} parent=43 // pred_check
          %p339 = pneg %p115
        $region58: #{tpu_custom_call.1} parent=43 // pred_check_branch
          %341 = sbr.rel (%p339) target = $region60
        $region59: #{tpu_custom_call.1} parent=43 // pred_region
          %342 = dma.done [#allocation12], 18432
        $region60: #{tpu_custom_call.1} parent=43 // pred_fallthru
          _
        // Predicated region
        $region61: #{tpu_custom_call.1} parent=43 // pred_check
          %p343 = pneg %p136
        $region62: #{tpu_custom_call.1} parent=43 // pred_check_branch
          %345 = sbr.rel (%p343) target = $region64
        $region63: #{tpu_custom_call.1} parent=43 // pred_region
          %346 = dma.done [#allocation12], 6144
        $region64: #{tpu_custom_call.1} parent=43 // pred_fallthru
          _
        // Predicated region
        $region65: #{tpu_custom_call.1} parent=43 // pred_check
          %p347 = pneg %p157
        $region66: #{tpu_custom_call.1} parent=43 // pred_check_branch
          %349 = sbr.rel (%p347) target = $region68
        $region67: #{tpu_custom_call.1} parent=43 // pred_region
          %350 = dma.done [#allocation15], 256
        $region68: #{tpu_custom_call.1} parent=43 // pred_fallthru
          _
        %s351 = sand.u32 %s34, 1
        %s352 = scalar_lea.sflag [#allocation6], %s351
        %s353 = sand.u32 %s34, 1
        %s354 = smul.addr %s353, 3072
        %s355 = scalar_lea.vmem [#allocation5], %s354
        %p356 = pneg %p47
        %p357 = pneg %p44
        %s358 = sand.u32 %s26, 1
        %s359 = scalar_lea.sflag [#allocation9], %s358
        %s360 = sand.u32 %s60, 1
        %s361 = smul.addr %s360, 8
        %s362 = scalar_lea.vmem [#allocation8], %s361
        %p363 = pneg %p73
        %p364 = pneg %p70
        %p365 = pneg %p94
        %p366 = pneg %p91
        %p367 = pneg %p115
        %p368 = pneg %p112
        %p369 = pneg %p136
        %p370 = pneg %p133
        %p371 = pneg %p157
        %p372 = pneg %p154
        %p373 = pneg %p178
        %p374 = pneg %p175
        %s375 = smul.u32 16, %s26
        %p376 = scmp.eq.s32.totalorder %s26, 0
        // Predicated region
        $region69: #{tpu_custom_call.1} parent=43 // pred_check
          %p377 = pneg %p376
        $region70: #{tpu_custom_call.1} parent=43 // pred_check_branch
          %379 = sbr.rel (%p377) target = $region72
        $region71: #{tpu_custom_call.1} parent=43 // pred_region
          %380 = vst [vmem:[#allocation2] sm:$0xff] 0.0
          %381 = vst [vmem:[#allocation2 + $0x8] sm:$0xff] 0.0
          %382 = vst [vmem:[#allocation2 + $0x10] sm:$0xff] 0.0
          %383 = vst [vmem:[#allocation2 + $0x18] sm:$0xff] 0.0
          %384 = vst [vmem:[#allocation2 + $0x20] sm:$0xff] 0.0
          %385 = vst [vmem:[#allocation2 + $0x28] sm:$0xff] 0.0
          %386 = vst [vmem:[#allocation3] sm:$0xff] 0.0
        $region72: #{tpu_custom_call.1} parent=43 // pred_fallthru
          _
        %v387 = vld [vmem:[%s330] sm:$0xff]
        %v388 = vld [vmem:[%s321] sm:$0xff]
        %v389 = vld [vmem:[%s321 + $0x8] sm:$0xff]
        %v390 = vld [vmem:[%s321 + $0x10] sm:$0xff]
        %v391 = vld [vmem:[%s321 + $0x18] sm:$0xff]
        %v392 = vld [vmem:[%s321 + $0x20] sm:$0xff]
        %v393 = vld [vmem:[%s321 + $0x28] sm:$0xff]
        %v394 = vld [vmem:[%s321 + $0x30] sm:$0xff]
        %v395 = vld [vmem:[%s321 + $0x38] sm:$0xff]
        %v396 = vld [vmem:[%s321 + $0x40] sm:$0xff]
        %v397 = vld [vmem:[%s321 + $0x48] sm:$0xff]
        %v398 = vld [vmem:[%s321 + $0x50] sm:$0xff]
        %v399 = vld [vmem:[%s321 + $0x58] sm:$0xff]
        %v400 = vld [vmem:[%s321 + $0x60] sm:$0xff]
        %v401 = vld [vmem:[%s321 + $0x68] sm:$0xff]
        %v402 = vld [vmem:[%s321 + $0x70] sm:$0xff]
        %v403 = vld [vmem:[%s321 + $0x78] sm:$0xff]
        %v404 = vld [vmem:[%s321 + $0x80] sm:$0xff]
        %v405 = vld [vmem:[%s321 + $0x88] sm:$0xff]
        %v406 = vld [vmem:[%s321 + $0x90] sm:$0xff]
        %v407 = vld [vmem:[%s321 + $0x98] sm:$0xff]
        %v408 = vld [vmem:[%s321 + $0xa0] sm:$0xff]
        %v409 = vld [vmem:[%s321 + $0xa8] sm:$0xff]
        %v410 = vld [vmem:[%s321 + $0xb0] sm:$0xff]
        %v411 = vld [vmem:[%s321 + $0xb8] sm:$0xff]
        %v412 = vld [vmem:[%s321 + $0xc0] sm:$0xff]
        %v413 = vld [vmem:[%s321 + $0xc8] sm:$0xff]
        %v414 = vld [vmem:[%s321 + $0xd0] sm:$0xff]
        %v415 = vld [vmem:[%s321 + $0xd8] sm:$0xff]
        %v416 = vld [vmem:[%s321 + $0xe0] sm:$0xff]
        %v417 = vld [vmem:[%s321 + $0xe8] sm:$0xff]
        %v418 = vld [vmem:[%s321 + $0xf0] sm:$0xff]
        %v419 = vld [vmem:[%s321 + $0xf8] sm:$0xff]
        %v420 = vld [vmem:[%s321 + $0x100] sm:$0xff]
        %v421 = vld [vmem:[%s321 + $0x108] sm:$0xff]
        %v422 = vld [vmem:[%s321 + $0x110] sm:$0xff]
        %v423 = vld [vmem:[%s321 + $0x118] sm:$0xff]
        %v424 = vld [vmem:[%s321 + $0x120] sm:$0xff]
        %v425 = vld [vmem:[%s321 + $0x128] sm:$0xff]
        %v426 = vld [vmem:[%s321 + $0x130] sm:$0xff]
        %v427 = vld [vmem:[%s321 + $0x138] sm:$0xff]
        %v428 = vld [vmem:[%s321 + $0x140] sm:$0xff]
        %v429 = vld [vmem:[%s321 + $0x148] sm:$0xff]
        %v430 = vld [vmem:[%s321 + $0x150] sm:$0xff]
        %v431 = vld [vmem:[%s321 + $0x158] sm:$0xff]
        %v432 = vld [vmem:[%s321 + $0x160] sm:$0xff]
        %v433 = vld [vmem:[%s321 + $0x168] sm:$0xff]
        %v434 = vld [vmem:[%s321 + $0x170] sm:$0xff]
        %v435 = vld [vmem:[%s321 + $0x178] sm:$0xff]
        %v436 = vld [vmem:[%s321 + $0x180] sm:$0xff]
        %v437 = vld [vmem:[%s321 + $0x188] sm:$0xff]
        %v438 = vld [vmem:[%s321 + $0x190] sm:$0xff]
        %v439 = vld [vmem:[%s321 + $0x198] sm:$0xff]
        %v440 = vld [vmem:[%s321 + $0x1a0] sm:$0xff]
        %v441 = vld [vmem:[%s321 + $0x1a8] sm:$0xff]
        %v442 = vld [vmem:[%s321 + $0x1b0] sm:$0xff]
        %v443 = vld [vmem:[%s321 + $0x1b8] sm:$0xff]
        %v444 = vld [vmem:[%s321 + $0x1c0] sm:$0xff]
        %v445 = vld [vmem:[%s321 + $0x1c8] sm:$0xff]
        %v446 = vld [vmem:[%s321 + $0x1d0] sm:$0xff]
        %v447 = vld [vmem:[%s321 + $0x1d8] sm:$0xff]
        %v448 = vld [vmem:[%s321 + $0x1e0] sm:$0xff]
        %v449 = vld [vmem:[%s321 + $0x1e8] sm:$0xff]
        %v450 = vld [vmem:[%s321 + $0x1f0] sm:$0xff]
        %v451 = vld [vmem:[%s321 + $0x1f8] sm:$0xff]
        %v452 = vld [vmem:[%s321 + $0x200] sm:$0xff]
        %v453 = vld [vmem:[%s321 + $0x208] sm:$0xff]
        %v454 = vld [vmem:[%s321 + $0x210] sm:$0xff]
        %v455 = vld [vmem:[%s321 + $0x218] sm:$0xff]
        %v456 = vld [vmem:[%s321 + $0x220] sm:$0xff]
        %v457 = vld [vmem:[%s321 + $0x228] sm:$0xff]
        %v458 = vld [vmem:[%s321 + $0x230] sm:$0xff]
        %v459 = vld [vmem:[%s321 + $0x238] sm:$0xff]
        %v460 = vld [vmem:[%s321 + $0x240] sm:$0xff]
        %v461 = vld [vmem:[%s321 + $0x248] sm:$0xff]
        %v462 = vld [vmem:[%s321 + $0x250] sm:$0xff]
        %v463 = vld [vmem:[%s321 + $0x258] sm:$0xff]
        %v464 = vld [vmem:[%s321 + $0x260] sm:$0xff]
        %v465 = vld [vmem:[%s321 + $0x268] sm:$0xff]
        %v466 = vld [vmem:[%s321 + $0x270] sm:$0xff]
        %v467 = vld [vmem:[%s321 + $0x278] sm:$0xff]
        %v468 = vld [vmem:[%s321 + $0x280] sm:$0xff]
        %v469 = vld [vmem:[%s321 + $0x288] sm:$0xff]
        %v470 = vld [vmem:[%s321 + $0x290] sm:$0xff]
        %v471 = vld [vmem:[%s321 + $0x298] sm:$0xff]
        %v472 = vld [vmem:[%s321 + $0x2a0] sm:$0xff]
        %v473 = vld [vmem:[%s321 + $0x2a8] sm:$0xff]
        %v474 = vld [vmem:[%s321 + $0x2b0] sm:$0xff]
        %v475 = vld [vmem:[%s321 + $0x2b8] sm:$0xff]
        %v476 = vld [vmem:[%s321 + $0x2c0] sm:$0xff]
        %v477 = vld [vmem:[%s321 + $0x2c8] sm:$0xff]
        %v478 = vld [vmem:[%s321 + $0x2d0] sm:$0xff]
        %v479 = vld [vmem:[%s321 + $0x2d8] sm:$0xff]
        %v480 = vld [vmem:[%s321 + $0x2e0] sm:$0xff]
        %v481 = vld [vmem:[%s321 + $0x2e8] sm:$0xff]
        %v482 = vld [vmem:[%s321 + $0x2f0] sm:$0xff]
        %v483 = vld [vmem:[%s321 + $0x2f8] sm:$0xff]
        %v484 = vld [vmem:[%s321 + $0x300] sm:$0xff]
        %v485 = vld [vmem:[%s321 + $0x308] sm:$0xff]
        %v486 = vld [vmem:[%s321 + $0x310] sm:$0xff]
        %v487 = vld [vmem:[%s321 + $0x318] sm:$0xff]
        %v488 = vld [vmem:[%s321 + $0x320] sm:$0xff]
        %v489 = vld [vmem:[%s321 + $0x328] sm:$0xff]
        %v490 = vld [vmem:[%s321 + $0x330] sm:$0xff]
        %v491 = vld [vmem:[%s321 + $0x338] sm:$0xff]
        %v492 = vld [vmem:[%s321 + $0x340] sm:$0xff]
        %v493 = vld [vmem:[%s321 + $0x348] sm:$0xff]
        %v494 = vld [vmem:[%s321 + $0x350] sm:$0xff]
        %v495 = vld [vmem:[%s321 + $0x358] sm:$0xff]
        %v496 = vld [vmem:[%s321 + $0x360] sm:$0xff]
        %v497 = vld [vmem:[%s321 + $0x368] sm:$0xff]
        %v498 = vld [vmem:[%s321 + $0x370] sm:$0xff]
        %v499 = vld [vmem:[%s321 + $0x378] sm:$0xff]
        %v500 = vld [vmem:[%s321 + $0x380] sm:$0xff]
        %v501 = vld [vmem:[%s321 + $0x388] sm:$0xff]
        %v502 = vld [vmem:[%s321 + $0x390] sm:$0xff]
        %v503 = vld [vmem:[%s321 + $0x398] sm:$0xff]
        %v504 = vld [vmem:[%s321 + $0x3a0] sm:$0xff]
        %v505 = vld [vmem:[%s321 + $0x3a8] sm:$0xff]
        %v506 = vld [vmem:[%s321 + $0x3b0] sm:$0xff]
        %v507 = vld [vmem:[%s321 + $0x3b8] sm:$0xff]
        %v508 = vld [vmem:[%s321 + $0x3c0] sm:$0xff]
        %v509 = vld [vmem:[%s321 + $0x3c8] sm:$0xff]
        %v510 = vld [vmem:[%s321 + $0x3d0] sm:$0xff]
        %v511 = vld [vmem:[%s321 + $0x3d8] sm:$0xff]
        %v512 = vld [vmem:[%s321 + $0x3e0] sm:$0xff]
        %v513 = vld [vmem:[%s321 + $0x3e8] sm:$0xff]
        %v514 = vld [vmem:[%s321 + $0x3f0] sm:$0xff]
        %v515 = vld [vmem:[%s321 + $0x3f8] sm:$0xff]
        %v516 = vld [vmem:[%s321 + $0x400] sm:$0xff]
        %v517 = vld [vmem:[%s321 + $0x408] sm:$0xff]
        %v518 = vld [vmem:[%s321 + $0x410] sm:$0xff]
        %v519 = vld [vmem:[%s321 + $0x418] sm:$0xff]
        %v520 = vld [vmem:[%s321 + $0x420] sm:$0xff]
        %v521 = vld [vmem:[%s321 + $0x428] sm:$0xff]
        %v522 = vld [vmem:[%s321 + $0x430] sm:$0xff]
        %v523 = vld [vmem:[%s321 + $0x438] sm:$0xff]
        %v524 = vld [vmem:[%s321 + $0x440] sm:$0xff]
        %v525 = vld [vmem:[%s321 + $0x448] sm:$0xff]
        %v526 = vld [vmem:[%s321 + $0x450] sm:$0xff]
        %v527 = vld [vmem:[%s321 + $0x458] sm:$0xff]
        %v528 = vld [vmem:[%s321 + $0x460] sm:$0xff]
        %v529 = vld [vmem:[%s321 + $0x468] sm:$0xff]
        %v530 = vld [vmem:[%s321 + $0x470] sm:$0xff]
        %v531 = vld [vmem:[%s321 + $0x478] sm:$0xff]
        %v532 = vld [vmem:[%s321 + $0x480] sm:$0xff]
        %v533 = vld [vmem:[%s321 + $0x488] sm:$0xff]
        %v534 = vld [vmem:[%s321 + $0x490] sm:$0xff]
        %v535 = vld [vmem:[%s321 + $0x498] sm:$0xff]
        %v536 = vld [vmem:[%s321 + $0x4a0] sm:$0xff]
        %v537 = vld [vmem:[%s321 + $0x4a8] sm:$0xff]
        %v538 = vld [vmem:[%s321 + $0x4b0] sm:$0xff]
        %v539 = vld [vmem:[%s321 + $0x4b8] sm:$0xff]
        %v540 = vld [vmem:[%s321 + $0x4c0] sm:$0xff]
        %v541 = vld [vmem:[%s321 + $0x4c8] sm:$0xff]
        %v542 = vld [vmem:[%s321 + $0x4d0] sm:$0xff]
        %v543 = vld [vmem:[%s321 + $0x4d8] sm:$0xff]
        %v544 = vld [vmem:[%s321 + $0x4e0] sm:$0xff]
        %v545 = vld [vmem:[%s321 + $0x4e8] sm:$0xff]
        %v546 = vld [vmem:[%s321 + $0x4f0] sm:$0xff]
        %v547 = vld [vmem:[%s321 + $0x4f8] sm:$0xff]
        %v548 = vld [vmem:[%s321 + $0x500] sm:$0xff]
        %v549 = vld [vmem:[%s321 + $0x508] sm:$0xff]
        %v550 = vld [vmem:[%s321 + $0x510] sm:$0xff]
        %v551 = vld [vmem:[%s321 + $0x518] sm:$0xff]
        %v552 = vld [vmem:[%s321 + $0x520] sm:$0xff]
        %v553 = vld [vmem:[%s321 + $0x528] sm:$0xff]
        %v554 = vld [vmem:[%s321 + $0x530] sm:$0xff]
        %v555 = vld [vmem:[%s321 + $0x538] sm:$0xff]
        %v556 = vld [vmem:[%s321 + $0x540] sm:$0xff]
        %v557 = vld [vmem:[%s321 + $0x548] sm:$0xff]
        %v558 = vld [vmem:[%s321 + $0x550] sm:$0xff]
        %v559 = vld [vmem:[%s321 + $0x558] sm:$0xff]
        %v560 = vld [vmem:[%s321 + $0x560] sm:$0xff]
        %v561 = vld [vmem:[%s321 + $0x568] sm:$0xff]
        %v562 = vld [vmem:[%s321 + $0x570] sm:$0xff]
        %v563 = vld [vmem:[%s321 + $0x578] sm:$0xff]
        %v564 = vld [vmem:[%s321 + $0x580] sm:$0xff]
        %v565 = vld [vmem:[%s321 + $0x588] sm:$0xff]
        %v566 = vld [vmem:[%s321 + $0x590] sm:$0xff]
        %v567 = vld [vmem:[%s321 + $0x598] sm:$0xff]
        %v568 = vld [vmem:[%s321 + $0x5a0] sm:$0xff]
        %v569 = vld [vmem:[%s321 + $0x5a8] sm:$0xff]
        %v570 = vld [vmem:[%s321 + $0x5b0] sm:$0xff]
        %v571 = vld [vmem:[%s321 + $0x5b8] sm:$0xff]
        %v572 = vld [vmem:[%s321 + $0x5c0] sm:$0xff]
        %v573 = vld [vmem:[%s321 + $0x5c8] sm:$0xff]
        %v574 = vld [vmem:[%s321 + $0x5d0] sm:$0xff]
        %v575 = vld [vmem:[%s321 + $0x5d8] sm:$0xff]
        %v576 = vld [vmem:[%s321 + $0x5e0] sm:$0xff]
        %v577 = vld [vmem:[%s321 + $0x5e8] sm:$0xff]
        %v578 = vld [vmem:[%s321 + $0x5f0] sm:$0xff]
        %v579 = vld [vmem:[%s321 + $0x5f8] sm:$0xff]
        %v580 = vld [vmem:[%s321 + $0x600] sm:$0xff]
        %v581 = vld [vmem:[%s321 + $0x608] sm:$0xff]
        %v582 = vld [vmem:[%s321 + $0x610] sm:$0xff]
        %v583 = vld [vmem:[%s321 + $0x618] sm:$0xff]
        %v584 = vld [vmem:[%s321 + $0x620] sm:$0xff]
        %v585 = vld [vmem:[%s321 + $0x628] sm:$0xff]
        %v586 = vld [vmem:[%s321 + $0x630] sm:$0xff]
        %v587 = vld [vmem:[%s321 + $0x638] sm:$0xff]
        %v588 = vld [vmem:[%s321 + $0x640] sm:$0xff]
        %v589 = vld [vmem:[%s321 + $0x648] sm:$0xff]
        %v590 = vld [vmem:[%s321 + $0x650] sm:$0xff]
        %v591 = vld [vmem:[%s321 + $0x658] sm:$0xff]
        %v592 = vld [vmem:[%s321 + $0x660] sm:$0xff]
        %v593 = vld [vmem:[%s321 + $0x668] sm:$0xff]
        %v594 = vld [vmem:[%s321 + $0x670] sm:$0xff]
        %v595 = vld [vmem:[%s321 + $0x678] sm:$0xff]
        %v596 = vld [vmem:[%s321 + $0x680] sm:$0xff]
        %v597 = vld [vmem:[%s321 + $0x688] sm:$0xff]
        %v598 = vld [vmem:[%s321 + $0x690] sm:$0xff]
        %v599 = vld [vmem:[%s321 + $0x698] sm:$0xff]
        %v600 = vld [vmem:[%s321 + $0x6a0] sm:$0xff]
        %v601 = vld [vmem:[%s321 + $0x6a8] sm:$0xff]
        %v602 = vld [vmem:[%s321 + $0x6b0] sm:$0xff]
        %v603 = vld [vmem:[%s321 + $0x6b8] sm:$0xff]
        %v604 = vld [vmem:[%s321 + $0x6c0] sm:$0xff]
        %v605 = vld [vmem:[%s321 + $0x6c8] sm:$0xff]
        %v606 = vld [vmem:[%s321 + $0x6d0] sm:$0xff]
        %v607 = vld [vmem:[%s321 + $0x6d8] sm:$0xff]
        %v608 = vld [vmem:[%s321 + $0x6e0] sm:$0xff]
        %v609 = vld [vmem:[%s321 + $0x6e8] sm:$0xff]
        %v610 = vld [vmem:[%s321 + $0x6f0] sm:$0xff]
        %v611 = vld [vmem:[%s321 + $0x6f8] sm:$0xff]
        %v612 = vld [vmem:[%s321 + $0x700] sm:$0xff]
        %v613 = vld [vmem:[%s321 + $0x708] sm:$0xff]
        %v614 = vld [vmem:[%s321 + $0x710] sm:$0xff]
        %v615 = vld [vmem:[%s321 + $0x718] sm:$0xff]
        %v616 = vld [vmem:[%s321 + $0x720] sm:$0xff]
        %v617 = vld [vmem:[%s321 + $0x728] sm:$0xff]
        %v618 = vld [vmem:[%s321 + $0x730] sm:$0xff]
        %v619 = vld [vmem:[%s321 + $0x738] sm:$0xff]
        %v620 = vld [vmem:[%s321 + $0x740] sm:$0xff]
        %v621 = vld [vmem:[%s321 + $0x748] sm:$0xff]
        %v622 = vld [vmem:[%s321 + $0x750] sm:$0xff]
        %v623 = vld [vmem:[%s321 + $0x758] sm:$0xff]
        %v624 = vld [vmem:[%s321 + $0x760] sm:$0xff]
        %v625 = vld [vmem:[%s321 + $0x768] sm:$0xff]
        %v626 = vld [vmem:[%s321 + $0x770] sm:$0xff]
        %v627 = vld [vmem:[%s321 + $0x778] sm:$0xff]
        %v628 = vld [vmem:[%s321 + $0x780] sm:$0xff]
        %v629 = vld [vmem:[%s321 + $0x788] sm:$0xff]
        %v630 = vld [vmem:[%s321 + $0x790] sm:$0xff]
        %v631 = vld [vmem:[%s321 + $0x798] sm:$0xff]
        %v632 = vld [vmem:[%s321 + $0x7a0] sm:$0xff]
        %v633 = vld [vmem:[%s321 + $0x7a8] sm:$0xff]
        %v634 = vld [vmem:[%s321 + $0x7b0] sm:$0xff]
        %v635 = vld [vmem:[%s321 + $0x7b8] sm:$0xff]
        %v636 = vld [vmem:[%s321 + $0x7c0] sm:$0xff]
        %v637 = vld [vmem:[%s321 + $0x7c8] sm:$0xff]
        %v638 = vld [vmem:[%s321 + $0x7d0] sm:$0xff]
        %v639 = vld [vmem:[%s321 + $0x7d8] sm:$0xff]
        %v640 = vld [vmem:[%s321 + $0x7e0] sm:$0xff]
        %v641 = vld [vmem:[%s321 + $0x7e8] sm:$0xff]
        %v642 = vld [vmem:[%s321 + $0x7f0] sm:$0xff]
        %v643 = vld [vmem:[%s321 + $0x7f8] sm:$0xff]
        %v644 = vld [vmem:[%s321 + $0x800] sm:$0xff]
        %v645 = vld [vmem:[%s321 + $0x808] sm:$0xff]
        %v646 = vld [vmem:[%s321 + $0x810] sm:$0xff]
        %v647 = vld [vmem:[%s321 + $0x818] sm:$0xff]
        %v648 = vld [vmem:[%s321 + $0x820] sm:$0xff]
        %v649 = vld [vmem:[%s321 + $0x828] sm:$0xff]
        %v650 = vld [vmem:[%s321 + $0x830] sm:$0xff]
        %v651 = vld [vmem:[%s321 + $0x838] sm:$0xff]
        %v652 = vld [vmem:[%s321 + $0x840] sm:$0xff]
        %v653 = vld [vmem:[%s321 + $0x848] sm:$0xff]
        %v654 = vld [vmem:[%s321 + $0x850] sm:$0xff]
        %v655 = vld [vmem:[%s321 + $0x858] sm:$0xff]
        %v656 = vld [vmem:[%s321 + $0x860] sm:$0xff]
        %v657 = vld [vmem:[%s321 + $0x868] sm:$0xff]
        %v658 = vld [vmem:[%s321 + $0x870] sm:$0xff]
        %v659 = vld [vmem:[%s321 + $0x878] sm:$0xff]
        %v660 = vld [vmem:[%s321 + $0x880] sm:$0xff]
        %v661 = vld [vmem:[%s321 + $0x888] sm:$0xff]
        %v662 = vld [vmem:[%s321 + $0x890] sm:$0xff]
        %v663 = vld [vmem:[%s321 + $0x898] sm:$0xff]
        %v664 = vld [vmem:[%s321 + $0x8a0] sm:$0xff]
        %v665 = vld [vmem:[%s321 + $0x8a8] sm:$0xff]
        %v666 = vld [vmem:[%s321 + $0x8b0] sm:$0xff]
        %v667 = vld [vmem:[%s321 + $0x8b8] sm:$0xff]
        %v668 = vld [vmem:[%s321 + $0x8c0] sm:$0xff]
        %v669 = vld [vmem:[%s321 + $0x8c8] sm:$0xff]
        %v670 = vld [vmem:[%s321 + $0x8d0] sm:$0xff]
        %v671 = vld [vmem:[%s321 + $0x8d8] sm:$0xff]
        %v672 = vld [vmem:[%s321 + $0x8e0] sm:$0xff]
        %v673 = vld [vmem:[%s321 + $0x8e8] sm:$0xff]
        %v674 = vld [vmem:[%s321 + $0x8f0] sm:$0xff]
        %v675 = vld [vmem:[%s321 + $0x8f8] sm:$0xff]
        %v676 = vld [vmem:[%s321 + $0x900] sm:$0xff]
        %v677 = vld [vmem:[%s321 + $0x908] sm:$0xff]
        %v678 = vld [vmem:[%s321 + $0x910] sm:$0xff]
        %v679 = vld [vmem:[%s321 + $0x918] sm:$0xff]
        %v680 = vld [vmem:[%s321 + $0x920] sm:$0xff]
        %v681 = vld [vmem:[%s321 + $0x928] sm:$0xff]
        %v682 = vld [vmem:[%s321 + $0x930] sm:$0xff]
        %v683 = vld [vmem:[%s321 + $0x938] sm:$0xff]
        %v684 = vld [vmem:[%s321 + $0x940] sm:$0xff]
        %v685 = vld [vmem:[%s321 + $0x948] sm:$0xff]
        %v686 = vld [vmem:[%s321 + $0x950] sm:$0xff]
        %v687 = vld [vmem:[%s321 + $0x958] sm:$0xff]
        %v688 = vld [vmem:[%s321 + $0x960] sm:$0xff]
        %v689 = vld [vmem:[%s321 + $0x968] sm:$0xff]
        %v690 = vld [vmem:[%s321 + $0x970] sm:$0xff]
        %v691 = vld [vmem:[%s321 + $0x978] sm:$0xff]
        %v692 = vld [vmem:[%s321 + $0x980] sm:$0xff]
        %v693 = vld [vmem:[%s321 + $0x988] sm:$0xff]
        %v694 = vld [vmem:[%s321 + $0x990] sm:$0xff]
        %v695 = vld [vmem:[%s321 + $0x998] sm:$0xff]
        %v696 = vld [vmem:[%s321 + $0x9a0] sm:$0xff]
        %v697 = vld [vmem:[%s321 + $0x9a8] sm:$0xff]
        %v698 = vld [vmem:[%s321 + $0x9b0] sm:$0xff]
        %v699 = vld [vmem:[%s321 + $0x9b8] sm:$0xff]
        %v700 = vld [vmem:[%s321 + $0x9c0] sm:$0xff]
        %v701 = vld [vmem:[%s321 + $0x9c8] sm:$0xff]
        %v702 = vld [vmem:[%s321 + $0x9d0] sm:$0xff]
        %v703 = vld [vmem:[%s321 + $0x9d8] sm:$0xff]
        %v704 = vld [vmem:[%s321 + $0x9e0] sm:$0xff]
        %v705 = vld [vmem:[%s321 + $0x9e8] sm:$0xff]
        %v706 = vld [vmem:[%s321 + $0x9f0] sm:$0xff]
        %v707 = vld [vmem:[%s321 + $0x9f8] sm:$0xff]
        %v708 = vld [vmem:[%s321 + $0xa00] sm:$0xff]
        %v709 = vld [vmem:[%s321 + $0xa08] sm:$0xff]
        %v710 = vld [vmem:[%s321 + $0xa10] sm:$0xff]
        %v711 = vld [vmem:[%s321 + $0xa18] sm:$0xff]
        %v712 = vld [vmem:[%s321 + $0xa20] sm:$0xff]
        %v713 = vld [vmem:[%s321 + $0xa28] sm:$0xff]
        %v714 = vld [vmem:[%s321 + $0xa30] sm:$0xff]
        %v715 = vld [vmem:[%s321 + $0xa38] sm:$0xff]
        %v716 = vld [vmem:[%s321 + $0xa40] sm:$0xff]
        %v717 = vld [vmem:[%s321 + $0xa48] sm:$0xff]
        %v718 = vld [vmem:[%s321 + $0xa50] sm:$0xff]
        %v719 = vld [vmem:[%s321 + $0xa58] sm:$0xff]
        %v720 = vld [vmem:[%s321 + $0xa60] sm:$0xff]
        %v721 = vld [vmem:[%s321 + $0xa68] sm:$0xff]
        %v722 = vld [vmem:[%s321 + $0xa70] sm:$0xff]
        %v723 = vld [vmem:[%s321 + $0xa78] sm:$0xff]
        %v724 = vld [vmem:[%s321 + $0xa80] sm:$0xff]
        %v725 = vld [vmem:[%s321 + $0xa88] sm:$0xff]
        %v726 = vld [vmem:[%s321 + $0xa90] sm:$0xff]
        %v727 = vld [vmem:[%s321 + $0xa98] sm:$0xff]
        %v728 = vld [vmem:[%s321 + $0xaa0] sm:$0xff]
        %v729 = vld [vmem:[%s321 + $0xaa8] sm:$0xff]
        %v730 = vld [vmem:[%s321 + $0xab0] sm:$0xff]
        %v731 = vld [vmem:[%s321 + $0xab8] sm:$0xff]
        %v732 = vld [vmem:[%s321 + $0xac0] sm:$0xff]
        %v733 = vld [vmem:[%s321 + $0xac8] sm:$0xff]
        %v734 = vld [vmem:[%s321 + $0xad0] sm:$0xff]
        %v735 = vld [vmem:[%s321 + $0xad8] sm:$0xff]
        %v736 = vld [vmem:[%s321 + $0xae0] sm:$0xff]
        %v737 = vld [vmem:[%s321 + $0xae8] sm:$0xff]
        %v738 = vld [vmem:[%s321 + $0xaf0] sm:$0xff]
        %v739 = vld [vmem:[%s321 + $0xaf8] sm:$0xff]
        %v740 = vld [vmem:[%s321 + $0xb00] sm:$0xff]
        %v741 = vld [vmem:[%s321 + $0xb08] sm:$0xff]
        %v742 = vld [vmem:[%s321 + $0xb10] sm:$0xff]
        %v743 = vld [vmem:[%s321 + $0xb18] sm:$0xff]
        %v744 = vld [vmem:[%s321 + $0xb20] sm:$0xff]
        %v745 = vld [vmem:[%s321 + $0xb28] sm:$0xff]
        %v746 = vld [vmem:[%s321 + $0xb30] sm:$0xff]
        %v747 = vld [vmem:[%s321 + $0xb38] sm:$0xff]
        %v748 = vld [vmem:[%s321 + $0xb40] sm:$0xff]
        %v749 = vld [vmem:[%s321 + $0xb48] sm:$0xff]
        %v750 = vld [vmem:[%s321 + $0xb50] sm:$0xff]
        %v751 = vld [vmem:[%s321 + $0xb58] sm:$0xff]
        %v752 = vld [vmem:[%s321 + $0xb60] sm:$0xff]
        %v753 = vld [vmem:[%s321 + $0xb68] sm:$0xff]
        %v754 = vld [vmem:[%s321 + $0xb70] sm:$0xff]
        %v755 = vld [vmem:[%s321 + $0xb78] sm:$0xff]
        %v756 = vld [vmem:[%s321 + $0xb80] sm:$0xff]
        %v757 = vld [vmem:[%s321 + $0xb88] sm:$0xff]
        %v758 = vld [vmem:[%s321 + $0xb90] sm:$0xff]
        %v759 = vld [vmem:[%s321 + $0xb98] sm:$0xff]
        %v760 = vld [vmem:[%s321 + $0xba0] sm:$0xff]
        %v761 = vld [vmem:[%s321 + $0xba8] sm:$0xff]
        %v762 = vld [vmem:[%s321 + $0xbb0] sm:$0xff]
        %v763 = vld [vmem:[%s321 + $0xbb8] sm:$0xff]
        %v764 = vld [vmem:[%s321 + $0xbc0] sm:$0xff]
        %v765 = vld [vmem:[%s321 + $0xbc8] sm:$0xff]
        %v766 = vld [vmem:[%s321 + $0xbd0] sm:$0xff]
        %v767 = vld [vmem:[%s321 + $0xbd8] sm:$0xff]
        %v768 = vld [vmem:[%s321 + $0xbe0] sm:$0xff]
        %v769 = vld [vmem:[%s321 + $0xbe8] sm:$0xff]
        %v770 = vld [vmem:[%s321 + $0xbf0] sm:$0xff]
        %v771 = vld [vmem:[%s321 + $0xbf8] sm:$0xff]
        %v772 = vunpack.c.l.bf16 %v388
        %v773 = vunpack.c.h.bf16 %v388
        %v774 = vunpack.c.l.bf16 %v389
        %v775 = vunpack.c.h.bf16 %v389
        %v776 = vunpack.c.l.bf16 %v390
        %v777 = vunpack.c.h.bf16 %v390
        %v778 = vunpack.c.l.bf16 %v391
        %v779 = vunpack.c.h.bf16 %v391
        %v780 = vunpack.c.l.bf16 %v392
        %v781 = vunpack.c.h.bf16 %v392
        %v782 = vunpack.c.l.bf16 %v393
        %v783 = vunpack.c.h.bf16 %v393
        %v784 = vunpack.c.l.bf16 %v394
        %v785 = vunpack.c.h.bf16 %v394
        %v786 = vunpack.c.l.bf16 %v395
        %v787 = vunpack.c.h.bf16 %v395
        %v788 = vunpack.c.l.bf16 %v396
        %v789 = vunpack.c.h.bf16 %v396
        %v790 = vunpack.c.l.bf16 %v397
        %v791 = vunpack.c.h.bf16 %v397
        %v792 = vunpack.c.l.bf16 %v398
        %v793 = vunpack.c.h.bf16 %v398
        %v794 = vunpack.c.l.bf16 %v399
        %v795 = vunpack.c.h.bf16 %v399
        %v796 = vunpack.c.l.bf16 %v400
        %v797 = vunpack.c.h.bf16 %v400
        %v798 = vunpack.c.l.bf16 %v401
        %v799 = vunpack.c.h.bf16 %v401
        %v800 = vunpack.c.l.bf16 %v402
        %v801 = vunpack.c.h.bf16 %v402
        %v802 = vunpack.c.l.bf16 %v403
        %v803 = vunpack.c.h.bf16 %v403
        %v804 = vunpack.c.l.bf16 %v404
        %v805 = vunpack.c.h.bf16 %v404
        %v806 = vunpack.c.l.bf16 %v405
        %v807 = vunpack.c.h.bf16 %v405
        %v808 = vunpack.c.l.bf16 %v406
        %v809 = vunpack.c.h.bf16 %v406
        %v810 = vunpack.c.l.bf16 %v407
        %v811 = vunpack.c.h.bf16 %v407
        %v812 = vunpack.c.l.bf16 %v408
        %v813 = vunpack.c.h.bf16 %v408
        %v814 = vunpack.c.l.bf16 %v409
        %v815 = vunpack.c.h.bf16 %v409
        %v816 = vunpack.c.l.bf16 %v410
        %v817 = vunpack.c.h.bf16 %v410
        %v818 = vunpack.c.l.bf16 %v411
        %v819 = vunpack.c.h.bf16 %v411
        %v820 = vunpack.c.l.bf16 %v412
        %v821 = vunpack.c.h.bf16 %v412
        %v822 = vunpack.c.l.bf16 %v413
        %v823 = vunpack.c.h.bf16 %v413
        %v824 = vunpack.c.l.bf16 %v414
        %v825 = vunpack.c.h.bf16 %v414
        %v826 = vunpack.c.l.bf16 %v415
        %v827 = vunpack.c.h.bf16 %v415
        %v828 = vunpack.c.l.bf16 %v416
        %v829 = vunpack.c.h.bf16 %v416
        %v830 = vunpack.c.l.bf16 %v417
        %v831 = vunpack.c.h.bf16 %v417
        %v832 = vunpack.c.l.bf16 %v418
        %v833 = vunpack.c.h.bf16 %v418
        %v834 = vunpack.c.l.bf16 %v419
        %v835 = vunpack.c.h.bf16 %v419
        %v836 = vunpack.c.l.bf16 %v420
        %v837 = vunpack.c.h.bf16 %v420
        %v838 = vunpack.c.l.bf16 %v421
        %v839 = vunpack.c.h.bf16 %v421
        %v840 = vunpack.c.l.bf16 %v422
        %v841 = vunpack.c.h.bf16 %v422
        %v842 = vunpack.c.l.bf16 %v423
        %v843 = vunpack.c.h.bf16 %v423
        %v844 = vunpack.c.l.bf16 %v424
        %v845 = vunpack.c.h.bf16 %v424
        %v846 = vunpack.c.l.bf16 %v425
        %v847 = vunpack.c.h.bf16 %v425
        %v848 = vunpack.c.l.bf16 %v426
        %v849 = vunpack.c.h.bf16 %v426
        %v850 = vunpack.c.l.bf16 %v427
        %v851 = vunpack.c.h.bf16 %v427
        %v852 = vunpack.c.l.bf16 %v428
        %v853 = vunpack.c.h.bf16 %v428
        %v854 = vunpack.c.l.bf16 %v429
        %v855 = vunpack.c.h.bf16 %v429
        %v856 = vunpack.c.l.bf16 %v430
        %v857 = vunpack.c.h.bf16 %v430
        %v858 = vunpack.c.l.bf16 %v431
        %v859 = vunpack.c.h.bf16 %v431
        %v860 = vunpack.c.l.bf16 %v432
        %v861 = vunpack.c.h.bf16 %v432
        %v862 = vunpack.c.l.bf16 %v433
        %v863 = vunpack.c.h.bf16 %v433
        %v864 = vunpack.c.l.bf16 %v434
        %v865 = vunpack.c.h.bf16 %v434
        %v866 = vunpack.c.l.bf16 %v435
        %v867 = vunpack.c.h.bf16 %v435
        %v868 = vunpack.c.l.bf16 %v436
        %v869 = vunpack.c.h.bf16 %v436
        %v870 = vunpack.c.l.bf16 %v437
        %v871 = vunpack.c.h.bf16 %v437
        %v872 = vunpack.c.l.bf16 %v438
        %v873 = vunpack.c.h.bf16 %v438
        %v874 = vunpack.c.l.bf16 %v439
        %v875 = vunpack.c.h.bf16 %v439
        %v876 = vunpack.c.l.bf16 %v440
        %v877 = vunpack.c.h.bf16 %v440
        %v878 = vunpack.c.l.bf16 %v441
        %v879 = vunpack.c.h.bf16 %v441
        %v880 = vunpack.c.l.bf16 %v442
        %v881 = vunpack.c.h.bf16 %v442
        %v882 = vunpack.c.l.bf16 %v443
        %v883 = vunpack.c.h.bf16 %v443
        %v884 = vunpack.c.l.bf16 %v444
        %v885 = vunpack.c.h.bf16 %v444
        %v886 = vunpack.c.l.bf16 %v445
        %v887 = vunpack.c.h.bf16 %v445
        %v888 = vunpack.c.l.bf16 %v446
        %v889 = vunpack.c.h.bf16 %v446
        %v890 = vunpack.c.l.bf16 %v447
        %v891 = vunpack.c.h.bf16 %v447
        %v892 = vunpack.c.l.bf16 %v448
        %v893 = vunpack.c.h.bf16 %v448
        %v894 = vunpack.c.l.bf16 %v449
        %v895 = vunpack.c.h.bf16 %v449
        %v896 = vunpack.c.l.bf16 %v450
        %v897 = vunpack.c.h.bf16 %v450
        %v898 = vunpack.c.l.bf16 %v451
        %v899 = vunpack.c.h.bf16 %v451
        %v900 = vunpack.c.l.bf16 %v452
        %v901 = vunpack.c.h.bf16 %v452
        %v902 = vunpack.c.l.bf16 %v453
        %v903 = vunpack.c.h.bf16 %v453
        %v904 = vunpack.c.l.bf16 %v454
        %v905 = vunpack.c.h.bf16 %v454
        %v906 = vunpack.c.l.bf16 %v455
        %v907 = vunpack.c.h.bf16 %v455
        %v908 = vunpack.c.l.bf16 %v456
        %v909 = vunpack.c.h.bf16 %v456
        %v910 = vunpack.c.l.bf16 %v457
        %v911 = vunpack.c.h.bf16 %v457
        %v912 = vunpack.c.l.bf16 %v458
        %v913 = vunpack.c.h.bf16 %v458
        %v914 = vunpack.c.l.bf16 %v459
        %v915 = vunpack.c.h.bf16 %v459
        %v916 = vunpack.c.l.bf16 %v460
        %v917 = vunpack.c.h.bf16 %v460
        %v918 = vunpack.c.l.bf16 %v461
        %v919 = vunpack.c.h.bf16 %v461
        %v920 = vunpack.c.l.bf16 %v462
        %v921 = vunpack.c.h.bf16 %v462
        %v922 = vunpack.c.l.bf16 %v463
        %v923 = vunpack.c.h.bf16 %v463
        %v924 = vunpack.c.l.bf16 %v464
        %v925 = vunpack.c.h.bf16 %v464
        %v926 = vunpack.c.l.bf16 %v465
        %v927 = vunpack.c.h.bf16 %v465
        %v928 = vunpack.c.l.bf16 %v466
        %v929 = vunpack.c.h.bf16 %v466
        %v930 = vunpack.c.l.bf16 %v467
        %v931 = vunpack.c.h.bf16 %v467
        %v932 = vunpack.c.l.bf16 %v468
        %v933 = vunpack.c.h.bf16 %v468
        %v934 = vunpack.c.l.bf16 %v469
        %v935 = vunpack.c.h.bf16 %v469
        %v936 = vunpack.c.l.bf16 %v470
        %v937 = vunpack.c.h.bf16 %v470
        %v938 = vunpack.c.l.bf16 %v471
        %v939 = vunpack.c.h.bf16 %v471
        %v940 = vunpack.c.l.bf16 %v472
        %v941 = vunpack.c.h.bf16 %v472
        %v942 = vunpack.c.l.bf16 %v473
        %v943 = vunpack.c.h.bf16 %v473
        %v944 = vunpack.c.l.bf16 %v474
        %v945 = vunpack.c.h.bf16 %v474
        %v946 = vunpack.c.l.bf16 %v475
        %v947 = vunpack.c.h.bf16 %v475
        %v948 = vunpack.c.l.bf16 %v476
        %v949 = vunpack.c.h.bf16 %v476
        %v950 = vunpack.c.l.bf16 %v477
        %v951 = vunpack.c.h.bf16 %v477
        %v952 = vunpack.c.l.bf16 %v478
        %v953 = vunpack.c.h.bf16 %v478
        %v954 = vunpack.c.l.bf16 %v479
        %v955 = vunpack.c.h.bf16 %v479
        %v956 = vunpack.c.l.bf16 %v480
        %v957 = vunpack.c.h.bf16 %v480
        %v958 = vunpack.c.l.bf16 %v481
        %v959 = vunpack.c.h.bf16 %v481
        %v960 = vunpack.c.l.bf16 %v482
        %v961 = vunpack.c.h.bf16 %v482
        %v962 = vunpack.c.l.bf16 %v483
        %v963 = vunpack.c.h.bf16 %v483
        %v964 = vunpack.c.l.bf16 %v484
        %v965 = vunpack.c.h.bf16 %v484
        %v966 = vunpack.c.l.bf16 %v485
        %v967 = vunpack.c.h.bf16 %v485
        %v968 = vunpack.c.l.bf16 %v486
        %v969 = vunpack.c.h.bf16 %v486
        %v970 = vunpack.c.l.bf16 %v487
        %v971 = vunpack.c.h.bf16 %v487
        %v972 = vunpack.c.l.bf16 %v488
        %v973 = vunpack.c.h.bf16 %v488
        %v974 = vunpack.c.l.bf16 %v489
        %v975 = vunpack.c.h.bf16 %v489
        %v976 = vunpack.c.l.bf16 %v490
        %v977 = vunpack.c.h.bf16 %v490
        %v978 = vunpack.c.l.bf16 %v491
        %v979 = vunpack.c.h.bf16 %v491
        %v980 = vunpack.c.l.bf16 %v492
        %v981 = vunpack.c.h.bf16 %v492
        %v982 = vunpack.c.l.bf16 %v493
        %v983 = vunpack.c.h.bf16 %v493
        %v984 = vunpack.c.l.bf16 %v494
        %v985 = vunpack.c.h.bf16 %v494
        %v986 = vunpack.c.l.bf16 %v495
        %v987 = vunpack.c.h.bf16 %v495
        %v988 = vunpack.c.l.bf16 %v496
        %v989 = vunpack.c.h.bf16 %v496
        %v990 = vunpack.c.l.bf16 %v497
        %v991 = vunpack.c.h.bf16 %v497
        %v992 = vunpack.c.l.bf16 %v498
        %v993 = vunpack.c.h.bf16 %v498
        %v994 = vunpack.c.l.bf16 %v499
        %v995 = vunpack.c.h.bf16 %v499
        %v996 = vunpack.c.l.bf16 %v500
        %v997 = vunpack.c.h.bf16 %v500
        %v998 = vunpack.c.l.bf16 %v501
        %v999 = vunpack.c.h.bf16 %v501
        %v1000 = vunpack.c.l.bf16 %v502
        %v1001 = vunpack.c.h.bf16 %v502
        %v1002 = vunpack.c.l.bf16 %v503
        %v1003 = vunpack.c.h.bf16 %v503
        %v1004 = vunpack.c.l.bf16 %v504
        %v1005 = vunpack.c.h.bf16 %v504
        %v1006 = vunpack.c.l.bf16 %v505
        %v1007 = vunpack.c.h.bf16 %v505
        %v1008 = vunpack.c.l.bf16 %v506
        %v1009 = vunpack.c.h.bf16 %v506
        %v1010 = vunpack.c.l.bf16 %v507
        %v1011 = vunpack.c.h.bf16 %v507
        %v1012 = vunpack.c.l.bf16 %v508
        %v1013 = vunpack.c.h.bf16 %v508
        %v1014 = vunpack.c.l.bf16 %v509
        %v1015 = vunpack.c.h.bf16 %v509
        %v1016 = vunpack.c.l.bf16 %v510
        %v1017 = vunpack.c.h.bf16 %v510
        %v1018 = vunpack.c.l.bf16 %v511
        %v1019 = vunpack.c.h.bf16 %v511
        %v1020 = vunpack.c.l.bf16 %v512
        %v1021 = vunpack.c.h.bf16 %v512
        %v1022 = vunpack.c.l.bf16 %v513
        %v1023 = vunpack.c.h.bf16 %v513
        %v1024 = vunpack.c.l.bf16 %v514
        %v1025 = vunpack.c.h.bf16 %v514
        %v1026 = vunpack.c.l.bf16 %v515
        %v1027 = vunpack.c.h.bf16 %v515
        %v1028 = vunpack.c.l.bf16 %v516
        %v1029 = vunpack.c.h.bf16 %v516
        %v1030 = vunpack.c.l.bf16 %v517
        %v1031 = vunpack.c.h.bf16 %v517
        %v1032 = vunpack.c.l.bf16 %v518
        %v1033 = vunpack.c.h.bf16 %v518
        %v1034 = vunpack.c.l.bf16 %v519
        %v1035 = vunpack.c.h.bf16 %v519
        %v1036 = vunpack.c.l.bf16 %v520
        %v1037 = vunpack.c.h.bf16 %v520
        %v1038 = vunpack.c.l.bf16 %v521
        %v1039 = vunpack.c.h.bf16 %v521
        %v1040 = vunpack.c.l.bf16 %v522
        %v1041 = vunpack.c.h.bf16 %v522
        %v1042 = vunpack.c.l.bf16 %v523
        %v1043 = vunpack.c.h.bf16 %v523
        %v1044 = vunpack.c.l.bf16 %v524
        %v1045 = vunpack.c.h.bf16 %v524
        %v1046 = vunpack.c.l.bf16 %v525
        %v1047 = vunpack.c.h.bf16 %v525
        %v1048 = vunpack.c.l.bf16 %v526
        %v1049 = vunpack.c.h.bf16 %v526
        %v1050 = vunpack.c.l.bf16 %v527
        %v1051 = vunpack.c.h.bf16 %v527
        %v1052 = vunpack.c.l.bf16 %v528
        %v1053 = vunpack.c.h.bf16 %v528
        %v1054 = vunpack.c.l.bf16 %v529
        %v1055 = vunpack.c.h.bf16 %v529
        %v1056 = vunpack.c.l.bf16 %v530
        %v1057 = vunpack.c.h.bf16 %v530
        %v1058 = vunpack.c.l.bf16 %v531
        %v1059 = vunpack.c.h.bf16 %v531
        %v1060 = vunpack.c.l.bf16 %v532
        %v1061 = vunpack.c.h.bf16 %v532
        %v1062 = vunpack.c.l.bf16 %v533
        %v1063 = vunpack.c.h.bf16 %v533
        %v1064 = vunpack.c.l.bf16 %v534
        %v1065 = vunpack.c.h.bf16 %v534
        %v1066 = vunpack.c.l.bf16 %v535
        %v1067 = vunpack.c.h.bf16 %v535
        %v1068 = vunpack.c.l.bf16 %v536
        %v1069 = vunpack.c.h.bf16 %v536
        %v1070 = vunpack.c.l.bf16 %v537
        %v1071 = vunpack.c.h.bf16 %v537
        %v1072 = vunpack.c.l.bf16 %v538
        %v1073 = vunpack.c.h.bf16 %v538
        %v1074 = vunpack.c.l.bf16 %v539
        %v1075 = vunpack.c.h.bf16 %v539
        %v1076 = vunpack.c.l.bf16 %v540
        %v1077 = vunpack.c.h.bf16 %v540
        %v1078 = vunpack.c.l.bf16 %v541
        %v1079 = vunpack.c.h.bf16 %v541
        %v1080 = vunpack.c.l.bf16 %v542
        %v1081 = vunpack.c.h.bf16 %v542
        %v1082 = vunpack.c.l.bf16 %v543
        %v1083 = vunpack.c.h.bf16 %v543
        %v1084 = vunpack.c.l.bf16 %v544
        %v1085 = vunpack.c.h.bf16 %v544
        %v1086 = vunpack.c.l.bf16 %v545
        %v1087 = vunpack.c.h.bf16 %v545
        %v1088 = vunpack.c.l.bf16 %v546
        %v1089 = vunpack.c.h.bf16 %v546
        %v1090 = vunpack.c.l.bf16 %v547
        %v1091 = vunpack.c.h.bf16 %v547
        %v1092 = vunpack.c.l.bf16 %v548
        %v1093 = vunpack.c.h.bf16 %v548
        %v1094 = vunpack.c.l.bf16 %v549
        %v1095 = vunpack.c.h.bf16 %v549
        %v1096 = vunpack.c.l.bf16 %v550
        %v1097 = vunpack.c.h.bf16 %v550
        %v1098 = vunpack.c.l.bf16 %v551
        %v1099 = vunpack.c.h.bf16 %v551
        %v1100 = vunpack.c.l.bf16 %v552
        %v1101 = vunpack.c.h.bf16 %v552
        %v1102 = vunpack.c.l.bf16 %v553
        %v1103 = vunpack.c.h.bf16 %v553
        %v1104 = vunpack.c.l.bf16 %v554
        %v1105 = vunpack.c.h.bf16 %v554
        %v1106 = vunpack.c.l.bf16 %v555
        %v1107 = vunpack.c.h.bf16 %v555
        %v1108 = vunpack.c.l.bf16 %v556
        %v1109 = vunpack.c.h.bf16 %v556
        %v1110 = vunpack.c.l.bf16 %v557
        %v1111 = vunpack.c.h.bf16 %v557
        %v1112 = vunpack.c.l.bf16 %v558
        %v1113 = vunpack.c.h.bf16 %v558
        %v1114 = vunpack.c.l.bf16 %v559
        %v1115 = vunpack.c.h.bf16 %v559
        %v1116 = vunpack.c.l.bf16 %v560
        %v1117 = vunpack.c.h.bf16 %v560
        %v1118 = vunpack.c.l.bf16 %v561
        %v1119 = vunpack.c.h.bf16 %v561
        %v1120 = vunpack.c.l.bf16 %v562
        %v1121 = vunpack.c.h.bf16 %v562
        %v1122 = vunpack.c.l.bf16 %v563
        %v1123 = vunpack.c.h.bf16 %v563
        %v1124 = vunpack.c.l.bf16 %v564
        %v1125 = vunpack.c.h.bf16 %v564
        %v1126 = vunpack.c.l.bf16 %v565
        %v1127 = vunpack.c.h.bf16 %v565
        %v1128 = vunpack.c.l.bf16 %v566
        %v1129 = vunpack.c.h.bf16 %v566
        %v1130 = vunpack.c.l.bf16 %v567
        %v1131 = vunpack.c.h.bf16 %v567
        %v1132 = vunpack.c.l.bf16 %v568
        %v1133 = vunpack.c.h.bf16 %v568
        %v1134 = vunpack.c.l.bf16 %v569
        %v1135 = vunpack.c.h.bf16 %v569
        %v1136 = vunpack.c.l.bf16 %v570
        %v1137 = vunpack.c.h.bf16 %v570
        %v1138 = vunpack.c.l.bf16 %v571
        %v1139 = vunpack.c.h.bf16 %v571
        %v1140 = vunpack.c.l.bf16 %v572
        %v1141 = vunpack.c.h.bf16 %v572
        %v1142 = vunpack.c.l.bf16 %v573
        %v1143 = vunpack.c.h.bf16 %v573
        %v1144 = vunpack.c.l.bf16 %v574
        %v1145 = vunpack.c.h.bf16 %v574
        %v1146 = vunpack.c.l.bf16 %v575
        %v1147 = vunpack.c.h.bf16 %v575
        %v1148 = vunpack.c.l.bf16 %v576
        %v1149 = vunpack.c.h.bf16 %v576
        %v1150 = vunpack.c.l.bf16 %v577
        %v1151 = vunpack.c.h.bf16 %v577
        %v1152 = vunpack.c.l.bf16 %v578
        %v1153 = vunpack.c.h.bf16 %v578
        %v1154 = vunpack.c.l.bf16 %v579
        %v1155 = vunpack.c.h.bf16 %v579
        %v1156 = vunpack.c.l.bf16 %v580
        %v1157 = vunpack.c.h.bf16 %v580
        %v1158 = vunpack.c.l.bf16 %v581
        %v1159 = vunpack.c.h.bf16 %v581
        %v1160 = vunpack.c.l.bf16 %v582
        %v1161 = vunpack.c.h.bf16 %v582
        %v1162 = vunpack.c.l.bf16 %v583
        %v1163 = vunpack.c.h.bf16 %v583
        %v1164 = vunpack.c.l.bf16 %v584
        %v1165 = vunpack.c.h.bf16 %v584
        %v1166 = vunpack.c.l.bf16 %v585
        %v1167 = vunpack.c.h.bf16 %v585
        %v1168 = vunpack.c.l.bf16 %v586
        %v1169 = vunpack.c.h.bf16 %v586
        %v1170 = vunpack.c.l.bf16 %v587
        %v1171 = vunpack.c.h.bf16 %v587
        %v1172 = vunpack.c.l.bf16 %v588
        %v1173 = vunpack.c.h.bf16 %v588
        %v1174 = vunpack.c.l.bf16 %v589
        %v1175 = vunpack.c.h.bf16 %v589
        %v1176 = vunpack.c.l.bf16 %v590
        %v1177 = vunpack.c.h.bf16 %v590
        %v1178 = vunpack.c.l.bf16 %v591
        %v1179 = vunpack.c.h.bf16 %v591
        %v1180 = vunpack.c.l.bf16 %v592
        %v1181 = vunpack.c.h.bf16 %v592
        %v1182 = vunpack.c.l.bf16 %v593
        %v1183 = vunpack.c.h.bf16 %v593
        %v1184 = vunpack.c.l.bf16 %v594
        %v1185 = vunpack.c.h.bf16 %v594
        %v1186 = vunpack.c.l.bf16 %v595
        %v1187 = vunpack.c.h.bf16 %v595
        %v1188 = vunpack.c.l.bf16 %v596
        %v1189 = vunpack.c.h.bf16 %v596
        %v1190 = vunpack.c.l.bf16 %v597
        %v1191 = vunpack.c.h.bf16 %v597
        %v1192 = vunpack.c.l.bf16 %v598
        %v1193 = vunpack.c.h.bf16 %v598
        %v1194 = vunpack.c.l.bf16 %v599
        %v1195 = vunpack.c.h.bf16 %v599
        %v1196 = vunpack.c.l.bf16 %v600
        %v1197 = vunpack.c.h.bf16 %v600
        %v1198 = vunpack.c.l.bf16 %v601
        %v1199 = vunpack.c.h.bf16 %v601
        %v1200 = vunpack.c.l.bf16 %v602
        %v1201 = vunpack.c.h.bf16 %v602
        %v1202 = vunpack.c.l.bf16 %v603
        %v1203 = vunpack.c.h.bf16 %v603
        %v1204 = vunpack.c.l.bf16 %v604
        %v1205 = vunpack.c.h.bf16 %v604
        %v1206 = vunpack.c.l.bf16 %v605
        %v1207 = vunpack.c.h.bf16 %v605
        %v1208 = vunpack.c.l.bf16 %v606
        %v1209 = vunpack.c.h.bf16 %v606
        %v1210 = vunpack.c.l.bf16 %v607
        %v1211 = vunpack.c.h.bf16 %v607
        %v1212 = vunpack.c.l.bf16 %v608
        %v1213 = vunpack.c.h.bf16 %v608
        %v1214 = vunpack.c.l.bf16 %v609
        %v1215 = vunpack.c.h.bf16 %v609
        %v1216 = vunpack.c.l.bf16 %v610
        %v1217 = vunpack.c.h.bf16 %v610
        %v1218 = vunpack.c.l.bf16 %v611
        %v1219 = vunpack.c.h.bf16 %v611
        %v1220 = vunpack.c.l.bf16 %v612
        %v1221 = vunpack.c.h.bf16 %v612
        %v1222 = vunpack.c.l.bf16 %v613
        %v1223 = vunpack.c.h.bf16 %v613
        %v1224 = vunpack.c.l.bf16 %v614
        %v1225 = vunpack.c.h.bf16 %v614
        %v1226 = vunpack.c.l.bf16 %v615
        %v1227 = vunpack.c.h.bf16 %v615
        %v1228 = vunpack.c.l.bf16 %v616
        %v1229 = vunpack.c.h.bf16 %v616
        %v1230 = vunpack.c.l.bf16 %v617
        %v1231 = vunpack.c.h.bf16 %v617
        %v1232 = vunpack.c.l.bf16 %v618
        %v1233 = vunpack.c.h.bf16 %v618
        %v1234 = vunpack.c.l.bf16 %v619
        %v1235 = vunpack.c.h.bf16 %v619
        %v1236 = vunpack.c.l.bf16 %v620
        %v1237 = vunpack.c.h.bf16 %v620
        %v1238 = vunpack.c.l.bf16 %v621
        %v1239 = vunpack.c.h.bf16 %v621
        %v1240 = vunpack.c.l.bf16 %v622
        %v1241 = vunpack.c.h.bf16 %v622
        %v1242 = vunpack.c.l.bf16 %v623
        %v1243 = vunpack.c.h.bf16 %v623
        %v1244 = vunpack.c.l.bf16 %v624
        %v1245 = vunpack.c.h.bf16 %v624
        %v1246 = vunpack.c.l.bf16 %v625
        %v1247 = vunpack.c.h.bf16 %v625
        %v1248 = vunpack.c.l.bf16 %v626
        %v1249 = vunpack.c.h.bf16 %v626
        %v1250 = vunpack.c.l.bf16 %v627
        %v1251 = vunpack.c.h.bf16 %v627
        %v1252 = vunpack.c.l.bf16 %v628
        %v1253 = vunpack.c.h.bf16 %v628
        %v1254 = vunpack.c.l.bf16 %v629
        %v1255 = vunpack.c.h.bf16 %v629
        %v1256 = vunpack.c.l.bf16 %v630
        %v1257 = vunpack.c.h.bf16 %v630
        %v1258 = vunpack.c.l.bf16 %v631
        %v1259 = vunpack.c.h.bf16 %v631
        %v1260 = vunpack.c.l.bf16 %v632
        %v1261 = vunpack.c.h.bf16 %v632
        %v1262 = vunpack.c.l.bf16 %v633
        %v1263 = vunpack.c.h.bf16 %v633
        %v1264 = vunpack.c.l.bf16 %v634
        %v1265 = vunpack.c.h.bf16 %v634
        %v1266 = vunpack.c.l.bf16 %v635
        %v1267 = vunpack.c.h.bf16 %v635
        %v1268 = vunpack.c.l.bf16 %v636
        %v1269 = vunpack.c.h.bf16 %v636
        %v1270 = vunpack.c.l.bf16 %v637
        %v1271 = vunpack.c.h.bf16 %v637
        %v1272 = vunpack.c.l.bf16 %v638
        %v1273 = vunpack.c.h.bf16 %v638
        %v1274 = vunpack.c.l.bf16 %v639
        %v1275 = vunpack.c.h.bf16 %v639
        %v1276 = vunpack.c.l.bf16 %v640
        %v1277 = vunpack.c.h.bf16 %v640
        %v1278 = vunpack.c.l.bf16 %v641
        %v1279 = vunpack.c.h.bf16 %v641
        %v1280 = vunpack.c.l.bf16 %v642
        %v1281 = vunpack.c.h.bf16 %v642
        %v1282 = vunpack.c.l.bf16 %v643
        %v1283 = vunpack.c.h.bf16 %v643
        %v1284 = vunpack.c.l.bf16 %v644
        %v1285 = vunpack.c.h.bf16 %v644
        %v1286 = vunpack.c.l.bf16 %v645
        %v1287 = vunpack.c.h.bf16 %v645
        %v1288 = vunpack.c.l.bf16 %v646
        %v1289 = vunpack.c.h.bf16 %v646
        %v1290 = vunpack.c.l.bf16 %v647
        %v1291 = vunpack.c.h.bf16 %v647
        %v1292 = vunpack.c.l.bf16 %v648
        %v1293 = vunpack.c.h.bf16 %v648
        %v1294 = vunpack.c.l.bf16 %v649
        %v1295 = vunpack.c.h.bf16 %v649
        %v1296 = vunpack.c.l.bf16 %v650
        %v1297 = vunpack.c.h.bf16 %v650
        %v1298 = vunpack.c.l.bf16 %v651
        %v1299 = vunpack.c.h.bf16 %v651
        %v1300 = vunpack.c.l.bf16 %v652
        %v1301 = vunpack.c.h.bf16 %v652
        %v1302 = vunpack.c.l.bf16 %v653
        %v1303 = vunpack.c.h.bf16 %v653
        %v1304 = vunpack.c.l.bf16 %v654
        %v1305 = vunpack.c.h.bf16 %v654
        %v1306 = vunpack.c.l.bf16 %v655
        %v1307 = vunpack.c.h.bf16 %v655
        %v1308 = vunpack.c.l.bf16 %v656
        %v1309 = vunpack.c.h.bf16 %v656
        %v1310 = vunpack.c.l.bf16 %v657
        %v1311 = vunpack.c.h.bf16 %v657
        %v1312 = vunpack.c.l.bf16 %v658
        %v1313 = vunpack.c.h.bf16 %v658
        %v1314 = vunpack.c.l.bf16 %v659
        %v1315 = vunpack.c.h.bf16 %v659
        %v1316 = vunpack.c.l.bf16 %v660
        %v1317 = vunpack.c.h.bf16 %v660
        %v1318 = vunpack.c.l.bf16 %v661
        %v1319 = vunpack.c.h.bf16 %v661
        %v1320 = vunpack.c.l.bf16 %v662
        %v1321 = vunpack.c.h.bf16 %v662
        %v1322 = vunpack.c.l.bf16 %v663
        %v1323 = vunpack.c.h.bf16 %v663
        %v1324 = vunpack.c.l.bf16 %v664
        %v1325 = vunpack.c.h.bf16 %v664
        %v1326 = vunpack.c.l.bf16 %v665
        %v1327 = vunpack.c.h.bf16 %v665
        %v1328 = vunpack.c.l.bf16 %v666
        %v1329 = vunpack.c.h.bf16 %v666
        %v1330 = vunpack.c.l.bf16 %v667
        %v1331 = vunpack.c.h.bf16 %v667
        %v1332 = vunpack.c.l.bf16 %v668
        %v1333 = vunpack.c.h.bf16 %v668
        %v1334 = vunpack.c.l.bf16 %v669
        %v1335 = vunpack.c.h.bf16 %v669
        %v1336 = vunpack.c.l.bf16 %v670
        %v1337 = vunpack.c.h.bf16 %v670
        %v1338 = vunpack.c.l.bf16 %v671
        %v1339 = vunpack.c.h.bf16 %v671
        %v1340 = vunpack.c.l.bf16 %v672
        %v1341 = vunpack.c.h.bf16 %v672
        %v1342 = vunpack.c.l.bf16 %v673
        %v1343 = vunpack.c.h.bf16 %v673
        %v1344 = vunpack.c.l.bf16 %v674
        %v1345 = vunpack.c.h.bf16 %v674
        %v1346 = vunpack.c.l.bf16 %v675
        %v1347 = vunpack.c.h.bf16 %v675
        %v1348 = vunpack.c.l.bf16 %v676
        %v1349 = vunpack.c.h.bf16 %v676
        %v1350 = vunpack.c.l.bf16 %v677
        %v1351 = vunpack.c.h.bf16 %v677
        %v1352 = vunpack.c.l.bf16 %v678
        %v1353 = vunpack.c.h.bf16 %v678
        %v1354 = vunpack.c.l.bf16 %v679
        %v1355 = vunpack.c.h.bf16 %v679
        %v1356 = vunpack.c.l.bf16 %v680
        %v1357 = vunpack.c.h.bf16 %v680
        %v1358 = vunpack.c.l.bf16 %v681
        %v1359 = vunpack.c.h.bf16 %v681
        %v1360 = vunpack.c.l.bf16 %v682
        %v1361 = vunpack.c.h.bf16 %v682
        %v1362 = vunpack.c.l.bf16 %v683
        %v1363 = vunpack.c.h.bf16 %v683
        %v1364 = vunpack.c.l.bf16 %v684
        %v1365 = vunpack.c.h.bf16 %v684
        %v1366 = vunpack.c.l.bf16 %v685
        %v1367 = vunpack.c.h.bf16 %v685
        %v1368 = vunpack.c.l.bf16 %v686
        %v1369 = vunpack.c.h.bf16 %v686
        %v1370 = vunpack.c.l.bf16 %v687
        %v1371 = vunpack.c.h.bf16 %v687
        %v1372 = vunpack.c.l.bf16 %v688
        %v1373 = vunpack.c.h.bf16 %v688
        %v1374 = vunpack.c.l.bf16 %v689
        %v1375 = vunpack.c.h.bf16 %v689
        %v1376 = vunpack.c.l.bf16 %v690
        %v1377 = vunpack.c.h.bf16 %v690
        %v1378 = vunpack.c.l.bf16 %v691
        %v1379 = vunpack.c.h.bf16 %v691
        %v1380 = vunpack.c.l.bf16 %v692
        %v1381 = vunpack.c.h.bf16 %v692
        %v1382 = vunpack.c.l.bf16 %v693
        %v1383 = vunpack.c.h.bf16 %v693
        %v1384 = vunpack.c.l.bf16 %v694
        %v1385 = vunpack.c.h.bf16 %v694
        %v1386 = vunpack.c.l.bf16 %v695
        %v1387 = vunpack.c.h.bf16 %v695
        %v1388 = vunpack.c.l.bf16 %v696
        %v1389 = vunpack.c.h.bf16 %v696
        %v1390 = vunpack.c.l.bf16 %v697
        %v1391 = vunpack.c.h.bf16 %v697
        %v1392 = vunpack.c.l.bf16 %v698
        %v1393 = vunpack.c.h.bf16 %v698
        %v1394 = vunpack.c.l.bf16 %v699
        %v1395 = vunpack.c.h.bf16 %v699
        %v1396 = vunpack.c.l.bf16 %v700
        %v1397 = vunpack.c.h.bf16 %v700
        %v1398 = vunpack.c.l.bf16 %v701
        %v1399 = vunpack.c.h.bf16 %v701
        %v1400 = vunpack.c.l.bf16 %v702
        %v1401 = vunpack.c.h.bf16 %v702
        %v1402 = vunpack.c.l.bf16 %v703
        %v1403 = vunpack.c.h.bf16 %v703
        %v1404 = vunpack.c.l.bf16 %v704
        %v1405 = vunpack.c.h.bf16 %v704
        %v1406 = vunpack.c.l.bf16 %v705
        %v1407 = vunpack.c.h.bf16 %v705
        %v1408 = vunpack.c.l.bf16 %v706
        %v1409 = vunpack.c.h.bf16 %v706
        %v1410 = vunpack.c.l.bf16 %v707
        %v1411 = vunpack.c.h.bf16 %v707
        %v1412 = vunpack.c.l.bf16 %v708
        %v1413 = vunpack.c.h.bf16 %v708
        %v1414 = vunpack.c.l.bf16 %v709
        %v1415 = vunpack.c.h.bf16 %v709
        %v1416 = vunpack.c.l.bf16 %v710
        %v1417 = vunpack.c.h.bf16 %v710
        %v1418 = vunpack.c.l.bf16 %v711
        %v1419 = vunpack.c.h.bf16 %v711
        %v1420 = vunpack.c.l.bf16 %v712
        %v1421 = vunpack.c.h.bf16 %v712
        %v1422 = vunpack.c.l.bf16 %v713
        %v1423 = vunpack.c.h.bf16 %v713
        %v1424 = vunpack.c.l.bf16 %v714
        %v1425 = vunpack.c.h.bf16 %v714
        %v1426 = vunpack.c.l.bf16 %v715
        %v1427 = vunpack.c.h.bf16 %v715
        %v1428 = vunpack.c.l.bf16 %v716
        %v1429 = vunpack.c.h.bf16 %v716
        %v1430 = vunpack.c.l.bf16 %v717
        %v1431 = vunpack.c.h.bf16 %v717
        %v1432 = vunpack.c.l.bf16 %v718
        %v1433 = vunpack.c.h.bf16 %v718
        %v1434 = vunpack.c.l.bf16 %v719
        %v1435 = vunpack.c.h.bf16 %v719
        %v1436 = vunpack.c.l.bf16 %v720
        %v1437 = vunpack.c.h.bf16 %v720
        %v1438 = vunpack.c.l.bf16 %v721
        %v1439 = vunpack.c.h.bf16 %v721
        %v1440 = vunpack.c.l.bf16 %v722
        %v1441 = vunpack.c.h.bf16 %v722
        %v1442 = vunpack.c.l.bf16 %v723
        %v1443 = vunpack.c.h.bf16 %v723
        %v1444 = vunpack.c.l.bf16 %v724
        %v1445 = vunpack.c.h.bf16 %v724
        %v1446 = vunpack.c.l.bf16 %v725
        %v1447 = vunpack.c.h.bf16 %v725
        %v1448 = vunpack.c.l.bf16 %v726
        %v1449 = vunpack.c.h.bf16 %v726
        %v1450 = vunpack.c.l.bf16 %v727
        %v1451 = vunpack.c.h.bf16 %v727
        %v1452 = vunpack.c.l.bf16 %v728
        %v1453 = vunpack.c.h.bf16 %v728
        %v1454 = vunpack.c.l.bf16 %v729
        %v1455 = vunpack.c.h.bf16 %v729
        %v1456 = vunpack.c.l.bf16 %v730
        %v1457 = vunpack.c.h.bf16 %v730
        %v1458 = vunpack.c.l.bf16 %v731
        %v1459 = vunpack.c.h.bf16 %v731
        %v1460 = vunpack.c.l.bf16 %v732
        %v1461 = vunpack.c.h.bf16 %v732
        %v1462 = vunpack.c.l.bf16 %v733
        %v1463 = vunpack.c.h.bf16 %v733
        %v1464 = vunpack.c.l.bf16 %v734
        %v1465 = vunpack.c.h.bf16 %v734
        %v1466 = vunpack.c.l.bf16 %v735
        %v1467 = vunpack.c.h.bf16 %v735
        %v1468 = vunpack.c.l.bf16 %v736
        %v1469 = vunpack.c.h.bf16 %v736
        %v1470 = vunpack.c.l.bf16 %v737
        %v1471 = vunpack.c.h.bf16 %v737
        %v1472 = vunpack.c.l.bf16 %v738
        %v1473 = vunpack.c.h.bf16 %v738
        %v1474 = vunpack.c.l.bf16 %v739
        %v1475 = vunpack.c.h.bf16 %v739
        %v1476 = vunpack.c.l.bf16 %v740
        %v1477 = vunpack.c.h.bf16 %v740
        %v1478 = vunpack.c.l.bf16 %v741
        %v1479 = vunpack.c.h.bf16 %v741
        %v1480 = vunpack.c.l.bf16 %v742
        %v1481 = vunpack.c.h.bf16 %v742
        %v1482 = vunpack.c.l.bf16 %v743
        %v1483 = vunpack.c.h.bf16 %v743
        %v1484 = vunpack.c.l.bf16 %v744
        %v1485 = vunpack.c.h.bf16 %v744
        %v1486 = vunpack.c.l.bf16 %v745
        %v1487 = vunpack.c.h.bf16 %v745
        %v1488 = vunpack.c.l.bf16 %v746
        %v1489 = vunpack.c.h.bf16 %v746
        %v1490 = vunpack.c.l.bf16 %v747
        %v1491 = vunpack.c.h.bf16 %v747
        %v1492 = vunpack.c.l.bf16 %v748
        %v1493 = vunpack.c.h.bf16 %v748
        %v1494 = vunpack.c.l.bf16 %v749
        %v1495 = vunpack.c.h.bf16 %v749
        %v1496 = vunpack.c.l.bf16 %v750
        %v1497 = vunpack.c.h.bf16 %v750
        %v1498 = vunpack.c.l.bf16 %v751
        %v1499 = vunpack.c.h.bf16 %v751
        %v1500 = vunpack.c.l.bf16 %v752
        %v1501 = vunpack.c.h.bf16 %v752
        %v1502 = vunpack.c.l.bf16 %v753
        %v1503 = vunpack.c.h.bf16 %v753
        %v1504 = vunpack.c.l.bf16 %v754
        %v1505 = vunpack.c.h.bf16 %v754
        %v1506 = vunpack.c.l.bf16 %v755
        %v1507 = vunpack.c.h.bf16 %v755
        %v1508 = vunpack.c.l.bf16 %v756
        %v1509 = vunpack.c.h.bf16 %v756
        %v1510 = vunpack.c.l.bf16 %v757
        %v1511 = vunpack.c.h.bf16 %v757
        %v1512 = vunpack.c.l.bf16 %v758
        %v1513 = vunpack.c.h.bf16 %v758
        %v1514 = vunpack.c.l.bf16 %v759
        %v1515 = vunpack.c.h.bf16 %v759
        %v1516 = vunpack.c.l.bf16 %v760
        %v1517 = vunpack.c.h.bf16 %v760
        %v1518 = vunpack.c.l.bf16 %v761
        %v1519 = vunpack.c.h.bf16 %v761
        %v1520 = vunpack.c.l.bf16 %v762
        %v1521 = vunpack.c.h.bf16 %v762
        %v1522 = vunpack.c.l.bf16 %v763
        %v1523 = vunpack.c.h.bf16 %v763
        %v1524 = vunpack.c.l.bf16 %v764
        %v1525 = vunpack.c.h.bf16 %v764
        %v1526 = vunpack.c.l.bf16 %v765
        %v1527 = vunpack.c.h.bf16 %v765
        %v1528 = vunpack.c.l.bf16 %v766
        %v1529 = vunpack.c.h.bf16 %v766
        %v1530 = vunpack.c.l.bf16 %v767
        %v1531 = vunpack.c.h.bf16 %v767
        %v1532 = vunpack.c.l.bf16 %v768
        %v1533 = vunpack.c.h.bf16 %v768
        %v1534 = vunpack.c.l.bf16 %v769
        %v1535 = vunpack.c.h.bf16 %v769
        %v1536 = vunpack.c.l.bf16 %v770
        %v1537 = vunpack.c.h.bf16 %v770
        %v1538 = vunpack.c.l.bf16 %v771
        %v1539 = vunpack.c.h.bf16 %v771
        %v1540 = vld [vmem:[#allocation2] sm:$0xff]
        %v1541 = vld [vmem:[#allocation2 + $0x8] sm:$0xff]
        %v1542 = vld [vmem:[#allocation2 + $0x10] sm:$0xff]
        %v1543 = vld [vmem:[#allocation2 + $0x18] sm:$0xff]
        %v1544 = vld [vmem:[#allocation2 + $0x20] sm:$0xff]
        %v1545 = vld [vmem:[#allocation2 + $0x28] sm:$0xff]
        %v1546 = vlaneseq
        %v1547 = vshrl.u32 %v1546, 7
        %v1548 = vsub.s32 0, %v1547
        %v1549 = vrot.slane %v387, %v1548
        %1551 = vbcast.lane.b32.xlu0 %v1549, 256
        %v1552 = vpop.permute.xlu0 %1551
        %s1554 = sor.u32 256, 8
        %1555 = vbcast.lane.b32.xlu0 %v1549, %s1554
        %v1556 = vpop.permute.xlu0 %1555
        %s1558 = sor.u32 256, 16
        %1559 = vbcast.lane.b32.xlu0 %v1549, %s1558
        %v1560 = vpop.permute.xlu0 %1559
        %s1562 = sor.u32 256, 24
        %1563 = vbcast.lane.b32.xlu0 %v1549, %s1562
        %v1564 = vpop.permute.xlu0 %1563
        %s1566 = sor.u32 256, 32
        %1567 = vbcast.lane.b32.xlu0 %v1549, %s1566
        %v1568 = vpop.permute.xlu0 %1567
        %s1570 = sor.u32 256, 40
        %1571 = vbcast.lane.b32.xlu0 %v1549, %s1570
        %v1572 = vpop.permute.xlu0 %1571
        %s1574 = sor.u32 256, 48
        %1575 = vbcast.lane.b32.xlu0 %v1549, %s1574
        %v1576 = vpop.permute.xlu0 %1575
        %s1578 = sor.u32 256, 56
        %1579 = vbcast.lane.b32.xlu0 %v1549, %s1578
        %v1580 = vpop.permute.xlu0 %1579
        %s1582 = sor.u32 256, 64
        %1583 = vbcast.lane.b32.xlu0 %v1549, %s1582
        %v1584 = vpop.permute.xlu0 %1583
        %s1586 = sor.u32 256, 72
        %1587 = vbcast.lane.b32.xlu0 %v1549, %s1586
        %v1588 = vpop.permute.xlu0 %1587
        %s1590 = sor.u32 256, 80
        %1591 = vbcast.lane.b32.xlu0 %v1549, %s1590
        %v1592 = vpop.permute.xlu0 %1591
        %s1594 = sor.u32 256, 88
        %1595 = vbcast.lane.b32.xlu0 %v1549, %s1594
        %v1596 = vpop.permute.xlu0 %1595
        %s1598 = sor.u32 256, 96
        %1599 = vbcast.lane.b32.xlu0 %v1549, %s1598
        %v1600 = vpop.permute.xlu0 %1599
        %s1602 = sor.u32 256, 104
        %1603 = vbcast.lane.b32.xlu0 %v1549, %s1602
        %v1604 = vpop.permute.xlu0 %1603
        %s1606 = sor.u32 256, 112
        %1607 = vbcast.lane.b32.xlu0 %v1549, %s1606
        %v1608 = vpop.permute.xlu0 %1607
        %s1610 = sor.u32 256, 120
        %1611 = vbcast.lane.b32.xlu0 %v1549, %s1610
        %v1612 = vpop.permute.xlu0 %1611
        %v1613 = vlaneseq
        %v1614 = vshrl.u32 %v1613, 7
        %v1615 = vsub.s32 1, %v1614
        %v1616 = vrot.slane %v387, %v1615
        %1618 = vbcast.lane.b32.xlu0 %v1616, 256
        %v1619 = vpop.permute.xlu0 %1618
        %s1621 = sor.u32 256, 8
        %1622 = vbcast.lane.b32.xlu0 %v1616, %s1621
        %v1623 = vpop.permute.xlu0 %1622
        %s1625 = sor.u32 256, 16
        %1626 = vbcast.lane.b32.xlu0 %v1616, %s1625
        %v1627 = vpop.permute.xlu0 %1626
        %s1629 = sor.u32 256, 24
        %1630 = vbcast.lane.b32.xlu0 %v1616, %s1629
        %v1631 = vpop.permute.xlu0 %1630
        %s1633 = sor.u32 256, 32
        %1634 = vbcast.lane.b32.xlu0 %v1616, %s1633
        %v1635 = vpop.permute.xlu0 %1634
        %s1637 = sor.u32 256, 40
        %1638 = vbcast.lane.b32.xlu0 %v1616, %s1637
        %v1639 = vpop.permute.xlu0 %1638
        %s1641 = sor.u32 256, 48
        %1642 = vbcast.lane.b32.xlu0 %v1616, %s1641
        %v1643 = vpop.permute.xlu0 %1642
        %s1645 = sor.u32 256, 56
        %1646 = vbcast.lane.b32.xlu0 %v1616, %s1645
        %v1647 = vpop.permute.xlu0 %1646
        %s1649 = sor.u32 256, 64
        %1650 = vbcast.lane.b32.xlu0 %v1616, %s1649
        %v1651 = vpop.permute.xlu0 %1650
        %s1653 = sor.u32 256, 72
        %1654 = vbcast.lane.b32.xlu0 %v1616, %s1653
        %v1655 = vpop.permute.xlu0 %1654
        %s1657 = sor.u32 256, 80
        %1658 = vbcast.lane.b32.xlu0 %v1616, %s1657
        %v1659 = vpop.permute.xlu0 %1658
        %s1661 = sor.u32 256, 88
        %1662 = vbcast.lane.b32.xlu0 %v1616, %s1661
        %v1663 = vpop.permute.xlu0 %1662
        %s1665 = sor.u32 256, 96
        %1666 = vbcast.lane.b32.xlu0 %v1616, %s1665
        %v1667 = vpop.permute.xlu0 %1666
        %s1669 = sor.u32 256, 104
        %1670 = vbcast.lane.b32.xlu0 %v1616, %s1669
        %v1671 = vpop.permute.xlu0 %1670
        %s1673 = sor.u32 256, 112
        %1674 = vbcast.lane.b32.xlu0 %v1616, %s1673
        %v1675 = vpop.permute.xlu0 %1674
        %s1677 = sor.u32 256, 120
        %1678 = vbcast.lane.b32.xlu0 %v1616, %s1677
        %v1679 = vpop.permute.xlu0 %1678
        %v1680 = vlaneseq
        %v1681 = vshrl.u32 %v1680, 7
        %v1682 = vsub.s32 2, %v1681
        %v1683 = vrot.slane %v387, %v1682
        %1685 = vbcast.lane.b32.xlu0 %v1683, 256
        %v1686 = vpop.permute.xlu0 %1685
        %s1688 = sor.u32 256, 8
        %1689 = vbcast.lane.b32.xlu0 %v1683, %s1688
        %v1690 = vpop.permute.xlu0 %1689
        %s1692 = sor.u32 256, 16
        %1693 = vbcast.lane.b32.xlu0 %v1683, %s1692
        %v1694 = vpop.permute.xlu0 %1693
        %s1696 = sor.u32 256, 24
        %1697 = vbcast.lane.b32.xlu0 %v1683, %s1696
        %v1698 = vpop.permute.xlu0 %1697
        %s1700 = sor.u32 256, 32
        %1701 = vbcast.lane.b32.xlu0 %v1683, %s1700
        %v1702 = vpop.permute.xlu0 %1701
        %s1704 = sor.u32 256, 40
        %1705 = vbcast.lane.b32.xlu0 %v1683, %s1704
        %v1706 = vpop.permute.xlu0 %1705
        %s1708 = sor.u32 256, 48
        %1709 = vbcast.lane.b32.xlu0 %v1683, %s1708
        %v1710 = vpop.permute.xlu0 %1709
        %s1712 = sor.u32 256, 56
        %1713 = vbcast.lane.b32.xlu0 %v1683, %s1712
        %v1714 = vpop.permute.xlu0 %1713
        %s1716 = sor.u32 256, 64
        %1717 = vbcast.lane.b32.xlu0 %v1683, %s1716
        %v1718 = vpop.permute.xlu0 %1717
        %s1720 = sor.u32 256, 72
        %1721 = vbcast.lane.b32.xlu0 %v1683, %s1720
        %v1722 = vpop.permute.xlu0 %1721
        %s1724 = sor.u32 256, 80
        %1725 = vbcast.lane.b32.xlu0 %v1683, %s1724
        %v1726 = vpop.permute.xlu0 %1725
        %s1728 = sor.u32 256, 88
        %1729 = vbcast.lane.b32.xlu0 %v1683, %s1728
        %v1730 = vpop.permute.xlu0 %1729
        %s1732 = sor.u32 256, 96
        %1733 = vbcast.lane.b32.xlu0 %v1683, %s1732
        %v1734 = vpop.permute.xlu0 %1733
        %s1736 = sor.u32 256, 104
        %1737 = vbcast.lane.b32.xlu0 %v1683, %s1736
        %v1738 = vpop.permute.xlu0 %1737
        %s1740 = sor.u32 256, 112
        %1741 = vbcast.lane.b32.xlu0 %v1683, %s1740
        %v1742 = vpop.permute.xlu0 %1741
        %s1744 = sor.u32 256, 120
        %1745 = vbcast.lane.b32.xlu0 %v1683, %s1744
        %v1746 = vpop.permute.xlu0 %1745
        %v1747 = vlaneseq
        %v1748 = vshrl.u32 %v1747, 7
        %v1749 = vsub.s32 3, %v1748
        %v1750 = vrot.slane %v387, %v1749
        %1752 = vbcast.lane.b32.xlu0 %v1750, 256
        %v1753 = vpop.permute.xlu0 %1752
        %s1755 = sor.u32 256, 8
        %1756 = vbcast.lane.b32.xlu0 %v1750, %s1755
        %v1757 = vpop.permute.xlu0 %1756
        %s1759 = sor.u32 256, 16
        %1760 = vbcast.lane.b32.xlu0 %v1750, %s1759
        %v1761 = vpop.permute.xlu0 %1760
        %s1763 = sor.u32 256, 24
        %1764 = vbcast.lane.b32.xlu0 %v1750, %s1763
        %v1765 = vpop.permute.xlu0 %1764
        %s1767 = sor.u32 256, 32
        %1768 = vbcast.lane.b32.xlu0 %v1750, %s1767
        %v1769 = vpop.permute.xlu0 %1768
        %s1771 = sor.u32 256, 40
        %1772 = vbcast.lane.b32.xlu0 %v1750, %s1771
        %v1773 = vpop.permute.xlu0 %1772
        %s1775 = sor.u32 256, 48
        %1776 = vbcast.lane.b32.xlu0 %v1750, %s1775
        %v1777 = vpop.permute.xlu0 %1776
        %s1779 = sor.u32 256, 56
        %1780 = vbcast.lane.b32.xlu0 %v1750, %s1779
        %v1781 = vpop.permute.xlu0 %1780
        %s1783 = sor.u32 256, 64
        %1784 = vbcast.lane.b32.xlu0 %v1750, %s1783
        %v1785 = vpop.permute.xlu0 %1784
        %s1787 = sor.u32 256, 72
        %1788 = vbcast.lane.b32.xlu0 %v1750, %s1787
        %v1789 = vpop.permute.xlu0 %1788
        %s1791 = sor.u32 256, 80
        %1792 = vbcast.lane.b32.xlu0 %v1750, %s1791
        %v1793 = vpop.permute.xlu0 %1792
        %s1795 = sor.u32 256, 88
        %1796 = vbcast.lane.b32.xlu0 %v1750, %s1795
        %v1797 = vpop.permute.xlu0 %1796
        %s1799 = sor.u32 256, 96
        %1800 = vbcast.lane.b32.xlu0 %v1750, %s1799
        %v1801 = vpop.permute.xlu0 %1800
        %s1803 = sor.u32 256, 104
        %1804 = vbcast.lane.b32.xlu0 %v1750, %s1803
        %v1805 = vpop.permute.xlu0 %1804
        %s1807 = sor.u32 256, 112
        %1808 = vbcast.lane.b32.xlu0 %v1750, %s1807
        %v1809 = vpop.permute.xlu0 %1808
        %s1811 = sor.u32 256, 120
        %1812 = vbcast.lane.b32.xlu0 %v1750, %s1811
        %v1813 = vpop.permute.xlu0 %1812
        %v1814 = vlaneseq
        %v1815 = vshrl.u32 %v1814, 7
        %v1816 = vsub.s32 4, %v1815
        %v1817 = vrot.slane %v387, %v1816
        %1819 = vbcast.lane.b32.xlu0 %v1817, 256
        %v1820 = vpop.permute.xlu0 %1819
        %s1822 = sor.u32 256, 8
        %1823 = vbcast.lane.b32.xlu0 %v1817, %s1822
        %v1824 = vpop.permute.xlu0 %1823
        %s1826 = sor.u32 256, 16
        %1827 = vbcast.lane.b32.xlu0 %v1817, %s1826
        %v1828 = vpop.permute.xlu0 %1827
        %s1830 = sor.u32 256, 24
        %1831 = vbcast.lane.b32.xlu0 %v1817, %s1830
        %v1832 = vpop.permute.xlu0 %1831
        %s1834 = sor.u32 256, 32
        %1835 = vbcast.lane.b32.xlu0 %v1817, %s1834
        %v1836 = vpop.permute.xlu0 %1835
        %s1838 = sor.u32 256, 40
        %1839 = vbcast.lane.b32.xlu0 %v1817, %s1838
        %v1840 = vpop.permute.xlu0 %1839
        %s1842 = sor.u32 256, 48
        %1843 = vbcast.lane.b32.xlu0 %v1817, %s1842
        %v1844 = vpop.permute.xlu0 %1843
        %s1846 = sor.u32 256, 56
        %1847 = vbcast.lane.b32.xlu0 %v1817, %s1846
        %v1848 = vpop.permute.xlu0 %1847
        %s1850 = sor.u32 256, 64
        %1851 = vbcast.lane.b32.xlu0 %v1817, %s1850
        %v1852 = vpop.permute.xlu0 %1851
        %s1854 = sor.u32 256, 72
        %1855 = vbcast.lane.b32.xlu0 %v1817, %s1854
        %v1856 = vpop.permute.xlu0 %1855
        %s1858 = sor.u32 256, 80
        %1859 = vbcast.lane.b32.xlu0 %v1817, %s1858
        %v1860 = vpop.permute.xlu0 %1859
        %s1862 = sor.u32 256, 88
        %1863 = vbcast.lane.b32.xlu0 %v1817, %s1862
        %v1864 = vpop.permute.xlu0 %1863
        %s1866 = sor.u32 256, 96
        %1867 = vbcast.lane.b32.xlu0 %v1817, %s1866
        %v1868 = vpop.permute.xlu0 %1867
        %s1870 = sor.u32 256, 104
        %1871 = vbcast.lane.b32.xlu0 %v1817, %s1870
        %v1872 = vpop.permute.xlu0 %1871
        %s1874 = sor.u32 256, 112
        %1875 = vbcast.lane.b32.xlu0 %v1817, %s1874
        %v1876 = vpop.permute.xlu0 %1875
        %s1878 = sor.u32 256, 120
        %1879 = vbcast.lane.b32.xlu0 %v1817, %s1878
        %v1880 = vpop.permute.xlu0 %1879
        %v1881 = vlaneseq
        %v1882 = vshrl.u32 %v1881, 7
        %v1883 = vsub.s32 5, %v1882
        %v1884 = vrot.slane %v387, %v1883
        %1886 = vbcast.lane.b32.xlu0 %v1884, 256
        %v1887 = vpop.permute.xlu0 %1886
        %s1889 = sor.u32 256, 8
        %1890 = vbcast.lane.b32.xlu0 %v1884, %s1889
        %v1891 = vpop.permute.xlu0 %1890
        %s1893 = sor.u32 256, 16
        %1894 = vbcast.lane.b32.xlu0 %v1884, %s1893
        %v1895 = vpop.permute.xlu0 %1894
        %s1897 = sor.u32 256, 24
        %1898 = vbcast.lane.b32.xlu0 %v1884, %s1897
        %v1899 = vpop.permute.xlu0 %1898
        %s1901 = sor.u32 256, 32
        %1902 = vbcast.lane.b32.xlu0 %v1884, %s1901
        %v1903 = vpop.permute.xlu0 %1902
        %s1905 = sor.u32 256, 40
        %1906 = vbcast.lane.b32.xlu0 %v1884, %s1905
        %v1907 = vpop.permute.xlu0 %1906
        %s1909 = sor.u32 256, 48
        %1910 = vbcast.lane.b32.xlu0 %v1884, %s1909
        %v1911 = vpop.permute.xlu0 %1910
        %s1913 = sor.u32 256, 56
        %1914 = vbcast.lane.b32.xlu0 %v1884, %s1913
        %v1915 = vpop.permute.xlu0 %1914
        %s1917 = sor.u32 256, 64
        %1918 = vbcast.lane.b32.xlu0 %v1884, %s1917
        %v1919 = vpop.permute.xlu0 %1918
        %s1921 = sor.u32 256, 72
        %1922 = vbcast.lane.b32.xlu0 %v1884, %s1921
        %v1923 = vpop.permute.xlu0 %1922
        %s1925 = sor.u32 256, 80
        %1926 = vbcast.lane.b32.xlu0 %v1884, %s1925
        %v1927 = vpop.permute.xlu0 %1926
        %s1929 = sor.u32 256, 88
        %1930 = vbcast.lane.b32.xlu0 %v1884, %s1929
        %v1931 = vpop.permute.xlu0 %1930
        %s1933 = sor.u32 256, 96
        %1934 = vbcast.lane.b32.xlu0 %v1884, %s1933
        %v1935 = vpop.permute.xlu0 %1934
        %s1937 = sor.u32 256, 104
        %1938 = vbcast.lane.b32.xlu0 %v1884, %s1937
        %v1939 = vpop.permute.xlu0 %1938
        %s1941 = sor.u32 256, 112
        %1942 = vbcast.lane.b32.xlu0 %v1884, %s1941
        %v1943 = vpop.permute.xlu0 %1942
        %s1945 = sor.u32 256, 120
        %1946 = vbcast.lane.b32.xlu0 %v1884, %s1945
        %v1947 = vpop.permute.xlu0 %1946
        %v1948 = vlaneseq
        %v1949 = vshrl.u32 %v1948, 7
        %v1950 = vsub.s32 6, %v1949
        %v1951 = vrot.slane %v387, %v1950
        %1953 = vbcast.lane.b32.xlu0 %v1951, 256
        %v1954 = vpop.permute.xlu0 %1953
        %s1956 = sor.u32 256, 8
        %1957 = vbcast.lane.b32.xlu0 %v1951, %s1956
        %v1958 = vpop.permute.xlu0 %1957
        %s1960 = sor.u32 256, 16
        %1961 = vbcast.lane.b32.xlu0 %v1951, %s1960
        %v1962 = vpop.permute.xlu0 %1961
        %s1964 = sor.u32 256, 24
        %1965 = vbcast.lane.b32.xlu0 %v1951, %s1964
        %v1966 = vpop.permute.xlu0 %1965
        %s1968 = sor.u32 256, 32
        %1969 = vbcast.lane.b32.xlu0 %v1951, %s1968
        %v1970 = vpop.permute.xlu0 %1969
        %s1972 = sor.u32 256, 40
        %1973 = vbcast.lane.b32.xlu0 %v1951, %s1972
        %v1974 = vpop.permute.xlu0 %1973
        %s1976 = sor.u32 256, 48
        %1977 = vbcast.lane.b32.xlu0 %v1951, %s1976
        %v1978 = vpop.permute.xlu0 %1977
        %s1980 = sor.u32 256, 56
        %1981 = vbcast.lane.b32.xlu0 %v1951, %s1980
        %v1982 = vpop.permute.xlu0 %1981
        %s1984 = sor.u32 256, 64
        %1985 = vbcast.lane.b32.xlu0 %v1951, %s1984
        %v1986 = vpop.permute.xlu0 %1985
        %s1988 = sor.u32 256, 72
        %1989 = vbcast.lane.b32.xlu0 %v1951, %s1988
        %v1990 = vpop.permute.xlu0 %1989
        %s1992 = sor.u32 256, 80
        %1993 = vbcast.lane.b32.xlu0 %v1951, %s1992
        %v1994 = vpop.permute.xlu0 %1993
        %s1996 = sor.u32 256, 88
        %1997 = vbcast.lane.b32.xlu0 %v1951, %s1996
        %v1998 = vpop.permute.xlu0 %1997
        %s2000 = sor.u32 256, 96
        %2001 = vbcast.lane.b32.xlu0 %v1951, %s2000
        %v2002 = vpop.permute.xlu0 %2001
        %s2004 = sor.u32 256, 104
        %2005 = vbcast.lane.b32.xlu0 %v1951, %s2004
        %v2006 = vpop.permute.xlu0 %2005
        %s2008 = sor.u32 256, 112
        %2009 = vbcast.lane.b32.xlu0 %v1951, %s2008
        %v2010 = vpop.permute.xlu0 %2009
        %s2012 = sor.u32 256, 120
        %2013 = vbcast.lane.b32.xlu0 %v1951, %s2012
        %v2014 = vpop.permute.xlu0 %2013
        %v2015 = vlaneseq
        %v2016 = vshrl.u32 %v2015, 7
        %v2017 = vsub.s32 7, %v2016
        %v2018 = vrot.slane %v387, %v2017
        %2020 = vbcast.lane.b32.xlu0 %v2018, 256
        %v2021 = vpop.permute.xlu0 %2020
        %s2023 = sor.u32 256, 8
        %2024 = vbcast.lane.b32.xlu0 %v2018, %s2023
        %v2025 = vpop.permute.xlu0 %2024
        %s2027 = sor.u32 256, 16
        %2028 = vbcast.lane.b32.xlu0 %v2018, %s2027
        %v2029 = vpop.permute.xlu0 %2028
        %s2031 = sor.u32 256, 24
        %2032 = vbcast.lane.b32.xlu0 %v2018, %s2031
        %v2033 = vpop.permute.xlu0 %2032
        %s2035 = sor.u32 256, 32
        %2036 = vbcast.lane.b32.xlu0 %v2018, %s2035
        %v2037 = vpop.permute.xlu0 %2036
        %s2039 = sor.u32 256, 40
        %2040 = vbcast.lane.b32.xlu0 %v2018, %s2039
        %v2041 = vpop.permute.xlu0 %2040
        %s2043 = sor.u32 256, 48
        %2044 = vbcast.lane.b32.xlu0 %v2018, %s2043
        %v2045 = vpop.permute.xlu0 %2044
        %s2047 = sor.u32 256, 56
        %2048 = vbcast.lane.b32.xlu0 %v2018, %s2047
        %v2049 = vpop.permute.xlu0 %2048
        %s2051 = sor.u32 256, 64
        %2052 = vbcast.lane.b32.xlu0 %v2018, %s2051
        %v2053 = vpop.permute.xlu0 %2052
        %s2055 = sor.u32 256, 72
        %2056 = vbcast.lane.b32.xlu0 %v2018, %s2055
        %v2057 = vpop.permute.xlu0 %2056
        %s2059 = sor.u32 256, 80
        %2060 = vbcast.lane.b32.xlu0 %v2018, %s2059
        %v2061 = vpop.permute.xlu0 %2060
        %s2063 = sor.u32 256, 88
        %2064 = vbcast.lane.b32.xlu0 %v2018, %s2063
        %v2065 = vpop.permute.xlu0 %2064
        %s2067 = sor.u32 256, 96
        %2068 = vbcast.lane.b32.xlu0 %v2018, %s2067
        %v2069 = vpop.permute.xlu0 %2068
        %s2071 = sor.u32 256, 104
        %2072 = vbcast.lane.b32.xlu0 %v2018, %s2071
        %v2073 = vpop.permute.xlu0 %2072
        %s2075 = sor.u32 256, 112
        %2076 = vbcast.lane.b32.xlu0 %v2018, %s2075
        %v2077 = vpop.permute.xlu0 %2076
        %s2079 = sor.u32 256, 120
        %2080 = vbcast.lane.b32.xlu0 %v2018, %s2079
        %v2081 = vpop.permute.xlu0 %2080
        %v2082 = vmul.f32 %v772, %v1552
        %v2083 = vmul.f32 %v773, %v1552
        %v2084 = vmul.f32 %v774, %v1552
        %v2085 = vmul.f32 %v775, %v1552
        %v2086 = vmul.f32 %v776, %v1552
        %v2087 = vmul.f32 %v777, %v1552
        %v2088 = vmul.f32 %v778, %v1556
        %v2089 = vmul.f32 %v779, %v1556
        %v2090 = vmul.f32 %v780, %v1556
        %v2091 = vmul.f32 %v781, %v1556
        %v2092 = vmul.f32 %v782, %v1556
        %v2093 = vmul.f32 %v783, %v1556
        %v2094 = vmul.f32 %v784, %v1560
        %v2095 = vmul.f32 %v785, %v1560
        %v2096 = vmul.f32 %v786, %v1560
        %v2097 = vmul.f32 %v787, %v1560
        %v2098 = vmul.f32 %v788, %v1560
        %v2099 = vmul.f32 %v789, %v1560
        %v2100 = vmul.f32 %v790, %v1564
        %v2101 = vmul.f32 %v791, %v1564
        %v2102 = vmul.f32 %v792, %v1564
        %v2103 = vmul.f32 %v793, %v1564
        %v2104 = vmul.f32 %v794, %v1564
        %v2105 = vmul.f32 %v795, %v1564
        %v2106 = vmul.f32 %v796, %v1568
        %v2107 = vmul.f32 %v797, %v1568
        %v2108 = vmul.f32 %v798, %v1568
        %v2109 = vmul.f32 %v799, %v1568
        %v2110 = vmul.f32 %v800, %v1568
        %v2111 = vmul.f32 %v801, %v1568
        %v2112 = vmul.f32 %v802, %v1572
        %v2113 = vmul.f32 %v803, %v1572
        %v2114 = vmul.f32 %v804, %v1572
        %v2115 = vmul.f32 %v805, %v1572
        %v2116 = vmul.f32 %v806, %v1572
        %v2117 = vmul.f32 %v807, %v1572
        %v2118 = vmul.f32 %v808, %v1576
        %v2119 = vmul.f32 %v809, %v1576
        %v2120 = vmul.f32 %v810, %v1576
        %v2121 = vmul.f32 %v811, %v1576
        %v2122 = vmul.f32 %v812, %v1576
        %v2123 = vmul.f32 %v813, %v1576
        %v2124 = vmul.f32 %v814, %v1580
        %v2125 = vmul.f32 %v815, %v1580
        %v2126 = vmul.f32 %v816, %v1580
        %v2127 = vmul.f32 %v817, %v1580
        %v2128 = vmul.f32 %v818, %v1580
        %v2129 = vmul.f32 %v819, %v1580
        %v2130 = vmul.f32 %v820, %v1584
        %v2131 = vmul.f32 %v821, %v1584
        %v2132 = vmul.f32 %v822, %v1584
        %v2133 = vmul.f32 %v823, %v1584
        %v2134 = vmul.f32 %v824, %v1584
        %v2135 = vmul.f32 %v825, %v1584
        %v2136 = vmul.f32 %v826, %v1588
        %v2137 = vmul.f32 %v827, %v1588
        %v2138 = vmul.f32 %v828, %v1588
        %v2139 = vmul.f32 %v829, %v1588
        %v2140 = vmul.f32 %v830, %v1588
        %v2141 = vmul.f32 %v831, %v1588
        %v2142 = vmul.f32 %v832, %v1592
        %v2143 = vmul.f32 %v833, %v1592
        %v2144 = vmul.f32 %v834, %v1592
        %v2145 = vmul.f32 %v835, %v1592
        %v2146 = vmul.f32 %v836, %v1592
        %v2147 = vmul.f32 %v837, %v1592
        %v2148 = vmul.f32 %v838, %v1596
        %v2149 = vmul.f32 %v839, %v1596
        %v2150 = vmul.f32 %v840, %v1596
        %v2151 = vmul.f32 %v841, %v1596
        %v2152 = vmul.f32 %v842, %v1596
        %v2153 = vmul.f32 %v843, %v1596
        %v2154 = vmul.f32 %v844, %v1600
        %v2155 = vmul.f32 %v845, %v1600
        %v2156 = vmul.f32 %v846, %v1600
        %v2157 = vmul.f32 %v847, %v1600
        %v2158 = vmul.f32 %v848, %v1600
        %v2159 = vmul.f32 %v849, %v1600
        %v2160 = vmul.f32 %v850, %v1604
        %v2161 = vmul.f32 %v851, %v1604
        %v2162 = vmul.f32 %v852, %v1604
        %v2163 = vmul.f32 %v853, %v1604
        %v2164 = vmul.f32 %v854, %v1604
        %v2165 = vmul.f32 %v855, %v1604
        %v2166 = vmul.f32 %v856, %v1608
        %v2167 = vmul.f32 %v857, %v1608
        %v2168 = vmul.f32 %v858, %v1608
        %v2169 = vmul.f32 %v859, %v1608
        %v2170 = vmul.f32 %v860, %v1608
        %v2171 = vmul.f32 %v861, %v1608
        %v2172 = vmul.f32 %v862, %v1612
        %v2173 = vmul.f32 %v863, %v1612
        %v2174 = vmul.f32 %v864, %v1612
        %v2175 = vmul.f32 %v865, %v1612
        %v2176 = vmul.f32 %v866, %v1612
        %v2177 = vmul.f32 %v867, %v1612
        %v2178 = vmul.f32 %v868, %v1619
        %v2179 = vmul.f32 %v869, %v1619
        %v2180 = vmul.f32 %v870, %v1619
        %v2181 = vmul.f32 %v871, %v1619
        %v2182 = vmul.f32 %v872, %v1619
        %v2183 = vmul.f32 %v873, %v1619
        %v2184 = vmul.f32 %v874, %v1623
        %v2185 = vmul.f32 %v875, %v1623
        %v2186 = vmul.f32 %v876, %v1623
        %v2187 = vmul.f32 %v877, %v1623
        %v2188 = vmul.f32 %v878, %v1623
        %v2189 = vmul.f32 %v879, %v1623
        %v2190 = vmul.f32 %v880, %v1627
        %v2191 = vmul.f32 %v881, %v1627
        %v2192 = vmul.f32 %v882, %v1627
        %v2193 = vmul.f32 %v883, %v1627
        %v2194 = vmul.f32 %v884, %v1627
        %v2195 = vmul.f32 %v885, %v1627
        %v2196 = vmul.f32 %v886, %v1631
        %v2197 = vmul.f32 %v887, %v1631
        %v2198 = vmul.f32 %v888, %v1631
        %v2199 = vmul.f32 %v889, %v1631
        %v2200 = vmul.f32 %v890, %v1631
        %v2201 = vmul.f32 %v891, %v1631
        %v2202 = vmul.f32 %v892, %v1635
        %v2203 = vmul.f32 %v893, %v1635
        %v2204 = vmul.f32 %v894, %v1635
        %v2205 = vmul.f32 %v895, %v1635
        %v2206 = vmul.f32 %v896, %v1635
        %v2207 = vmul.f32 %v897, %v1635
        %v2208 = vmul.f32 %v898, %v1639
        %v2209 = vmul.f32 %v899, %v1639
        %v2210 = vmul.f32 %v900, %v1639
        %v2211 = vmul.f32 %v901, %v1639
        %v2212 = vmul.f32 %v902, %v1639
        %v2213 = vmul.f32 %v903, %v1639
        %v2214 = vmul.f32 %v904, %v1643
        %v2215 = vmul.f32 %v905, %v1643
        %v2216 = vmul.f32 %v906, %v1643
        %v2217 = vmul.f32 %v907, %v1643
        %v2218 = vmul.f32 %v908, %v1643
        %v2219 = vmul.f32 %v909, %v1643
        %v2220 = vmul.f32 %v910, %v1647
        %v2221 = vmul.f32 %v911, %v1647
        %v2222 = vmul.f32 %v912, %v1647
        %v2223 = vmul.f32 %v913, %v1647
        %v2224 = vmul.f32 %v914, %v1647
        %v2225 = vmul.f32 %v915, %v1647
        %v2226 = vmul.f32 %v916, %v1651
        %v2227 = vmul.f32 %v917, %v1651
        %v2228 = vmul.f32 %v918, %v1651
        %v2229 = vmul.f32 %v919, %v1651
        %v2230 = vmul.f32 %v920, %v1651
        %v2231 = vmul.f32 %v921, %v1651
        %v2232 = vmul.f32 %v922, %v1655
        %v2233 = vmul.f32 %v923, %v1655
        %v2234 = vmul.f32 %v924, %v1655
        %v2235 = vmul.f32 %v925, %v1655
        %v2236 = vmul.f32 %v926, %v1655
        %v2237 = vmul.f32 %v927, %v1655
        %v2238 = vmul.f32 %v928, %v1659
        %v2239 = vmul.f32 %v929, %v1659
        %v2240 = vmul.f32 %v930, %v1659
        %v2241 = vmul.f32 %v931, %v1659
        %v2242 = vmul.f32 %v932, %v1659
        %v2243 = vmul.f32 %v933, %v1659
        %v2244 = vmul.f32 %v934, %v1663
        %v2245 = vmul.f32 %v935, %v1663
        %v2246 = vmul.f32 %v936, %v1663
        %v2247 = vmul.f32 %v937, %v1663
        %v2248 = vmul.f32 %v938, %v1663
        %v2249 = vmul.f32 %v939, %v1663
        %v2250 = vmul.f32 %v940, %v1667
        %v2251 = vmul.f32 %v941, %v1667
        %v2252 = vmul.f32 %v942, %v1667
        %v2253 = vmul.f32 %v943, %v1667
        %v2254 = vmul.f32 %v944, %v1667
        %v2255 = vmul.f32 %v945, %v1667
        %v2256 = vmul.f32 %v946, %v1671
        %v2257 = vmul.f32 %v947, %v1671
        %v2258 = vmul.f32 %v948, %v1671
        %v2259 = vmul.f32 %v949, %v1671
        %v2260 = vmul.f32 %v950, %v1671
        %v2261 = vmul.f32 %v951, %v1671
        %v2262 = vmul.f32 %v952, %v1675
        %v2263 = vmul.f32 %v953, %v1675
        %v2264 = vmul.f32 %v954, %v1675
        %v2265 = vmul.f32 %v955, %v1675
        %v2266 = vmul.f32 %v956, %v1675
        %v2267 = vmul.f32 %v957, %v1675
        %v2268 = vmul.f32 %v958, %v1679
        %v2269 = vmul.f32 %v959, %v1679
        %v2270 = vmul.f32 %v960, %v1679
        %v2271 = vmul.f32 %v961, %v1679
        %v2272 = vmul.f32 %v962, %v1679
        %v2273 = vmul.f32 %v963, %v1679
        %v2274 = vmul.f32 %v964, %v1686
        %v2275 = vmul.f32 %v965, %v1686
        %v2276 = vmul.f32 %v966, %v1686
        %v2277 = vmul.f32 %v967, %v1686
        %v2278 = vmul.f32 %v968, %v1686
        %v2279 = vmul.f32 %v969, %v1686
        %v2280 = vmul.f32 %v970, %v1690
        %v2281 = vmul.f32 %v971, %v1690
        %v2282 = vmul.f32 %v972, %v1690
        %v2283 = vmul.f32 %v973, %v1690
        %v2284 = vmul.f32 %v974, %v1690
        %v2285 = vmul.f32 %v975, %v1690
        %v2286 = vmul.f32 %v976, %v1694
        %v2287 = vmul.f32 %v977, %v1694
        %v2288 = vmul.f32 %v978, %v1694
        %v2289 = vmul.f32 %v979, %v1694
        %v2290 = vmul.f32 %v980, %v1694
        %v2291 = vmul.f32 %v981, %v1694
        %v2292 = vmul.f32 %v982, %v1698
        %v2293 = vmul.f32 %v983, %v1698
        %v2294 = vmul.f32 %v984, %v1698
        %v2295 = vmul.f32 %v985, %v1698
        %v2296 = vmul.f32 %v986, %v1698
        %v2297 = vmul.f32 %v987, %v1698
        %v2298 = vmul.f32 %v988, %v1702
        %v2299 = vmul.f32 %v989, %v1702
        %v2300 = vmul.f32 %v990, %v1702
        %v2301 = vmul.f32 %v991, %v1702
        %v2302 = vmul.f32 %v992, %v1702
        %v2303 = vmul.f32 %v993, %v1702
        %v2304 = vmul.f32 %v994, %v1706
        %v2305 = vmul.f32 %v995, %v1706
        %v2306 = vmul.f32 %v996, %v1706
        %v2307 = vmul.f32 %v997, %v1706
        %v2308 = vmul.f32 %v998, %v1706
        %v2309 = vmul.f32 %v999, %v1706
        %v2310 = vmul.f32 %v1000, %v1710
        %v2311 = vmul.f32 %v1001, %v1710
        %v2312 = vmul.f32 %v1002, %v1710
        %v2313 = vmul.f32 %v1003, %v1710
        %v2314 = vmul.f32 %v1004, %v1710
        %v2315 = vmul.f32 %v1005, %v1710
        %v2316 = vmul.f32 %v1006, %v1714
        %v2317 = vmul.f32 %v1007, %v1714
        %v2318 = vmul.f32 %v1008, %v1714
        %v2319 = vmul.f32 %v1009, %v1714
        %v2320 = vmul.f32 %v1010, %v1714
        %v2321 = vmul.f32 %v1011, %v1714
        %v2322 = vmul.f32 %v1012, %v1718
        %v2323 = vmul.f32 %v1013, %v1718
        %v2324 = vmul.f32 %v1014, %v1718
        %v2325 = vmul.f32 %v1015, %v1718
        %v2326 = vmul.f32 %v1016, %v1718
        %v2327 = vmul.f32 %v1017, %v1718
        %v2328 = vmul.f32 %v1018, %v1722
        %v2329 = vmul.f32 %v1019, %v1722
        %v2330 = vmul.f32 %v1020, %v1722
        %v2331 = vmul.f32 %v1021, %v1722
        %v2332 = vmul.f32 %v1022, %v1722
        %v2333 = vmul.f32 %v1023, %v1722
        %v2334 = vmul.f32 %v1024, %v1726
        %v2335 = vmul.f32 %v1025, %v1726
        %v2336 = vmul.f32 %v1026, %v1726
        %v2337 = vmul.f32 %v1027, %v1726
        %v2338 = vmul.f32 %v1028, %v1726
        %v2339 = vmul.f32 %v1029, %v1726
        %v2340 = vmul.f32 %v1030, %v1730
        %v2341 = vmul.f32 %v1031, %v1730
        %v2342 = vmul.f32 %v1032, %v1730
        %v2343 = vmul.f32 %v1033, %v1730
        %v2344 = vmul.f32 %v1034, %v1730
        %v2345 = vmul.f32 %v1035, %v1730
        %v2346 = vmul.f32 %v1036, %v1734
        %v2347 = vmul.f32 %v1037, %v1734
        %v2348 = vmul.f32 %v1038, %v1734
        %v2349 = vmul.f32 %v1039, %v1734
        %v2350 = vmul.f32 %v1040, %v1734
        %v2351 = vmul.f32 %v1041, %v1734
        %v2352 = vmul.f32 %v1042, %v1738
        %v2353 = vmul.f32 %v1043, %v1738
        %v2354 = vmul.f32 %v1044, %v1738
        %v2355 = vmul.f32 %v1045, %v1738
        %v2356 = vmul.f32 %v1046, %v1738
        %v2357 = vmul.f32 %v1047, %v1738
        %v2358 = vmul.f32 %v1048, %v1742
        %v2359 = vmul.f32 %v1049, %v1742
        %v2360 = vmul.f32 %v1050, %v1742
        %v2361 = vmul.f32 %v1051, %v1742
        %v2362 = vmul.f32 %v1052, %v1742
        %v2363 = vmul.f32 %v1053, %v1742
        %v2364 = vmul.f32 %v1054, %v1746
        %v2365 = vmul.f32 %v1055, %v1746
        %v2366 = vmul.f32 %v1056, %v1746
        %v2367 = vmul.f32 %v1057, %v1746
        %v2368 = vmul.f32 %v1058, %v1746
        %v2369 = vmul.f32 %v1059, %v1746
        %v2370 = vmul.f32 %v1060, %v1753
        %v2371 = vmul.f32 %v1061, %v1753
        %v2372 = vmul.f32 %v1062, %v1753
        %v2373 = vmul.f32 %v1063, %v1753
        %v2374 = vmul.f32 %v1064, %v1753
        %v2375 = vmul.f32 %v1065, %v1753
        %v2376 = vmul.f32 %v1066, %v1757
        %v2377 = vmul.f32 %v1067, %v1757
        %v2378 = vmul.f32 %v1068, %v1757
        %v2379 = vmul.f32 %v1069, %v1757
        %v2380 = vmul.f32 %v1070, %v1757
        %v2381 = vmul.f32 %v1071, %v1757
        %v2382 = vmul.f32 %v1072, %v1761
        %v2383 = vmul.f32 %v1073, %v1761
        %v2384 = vmul.f32 %v1074, %v1761
        %v2385 = vmul.f32 %v1075, %v1761
        %v2386 = vmul.f32 %v1076, %v1761
        %v2387 = vmul.f32 %v1077, %v1761
        %v2388 = vmul.f32 %v1078, %v1765
        %v2389 = vmul.f32 %v1079, %v1765
        %v2390 = vmul.f32 %v1080, %v1765
        %v2391 = vmul.f32 %v1081, %v1765
        %v2392 = vmul.f32 %v1082, %v1765
        %v2393 = vmul.f32 %v1083, %v1765
        %v2394 = vmul.f32 %v1084, %v1769
        %v2395 = vmul.f32 %v1085, %v1769
        %v2396 = vmul.f32 %v1086, %v1769
        %v2397 = vmul.f32 %v1087, %v1769
        %v2398 = vmul.f32 %v1088, %v1769
        %v2399 = vmul.f32 %v1089, %v1769
        %v2400 = vmul.f32 %v1090, %v1773
        %v2401 = vmul.f32 %v1091, %v1773
        %v2402 = vmul.f32 %v1092, %v1773
        %v2403 = vmul.f32 %v1093, %v1773
        %v2404 = vmul.f32 %v1094, %v1773
        %v2405 = vmul.f32 %v1095, %v1773
        %v2406 = vmul.f32 %v1096, %v1777
        %v2407 = vmul.f32 %v1097, %v1777
        %v2408 = vmul.f32 %v1098, %v1777
        %v2409 = vmul.f32 %v1099, %v1777
        %v2410 = vmul.f32 %v1100, %v1777
        %v2411 = vmul.f32 %v1101, %v1777
        %v2412 = vmul.f32 %v1102, %v1781
        %v2413 = vmul.f32 %v1103, %v1781
        %v2414 = vmul.f32 %v1104, %v1781
        %v2415 = vmul.f32 %v1105, %v1781
        %v2416 = vmul.f32 %v1106, %v1781
        %v2417 = vmul.f32 %v1107, %v1781
        %v2418 = vmul.f32 %v1108, %v1785
        %v2419 = vmul.f32 %v1109, %v1785
        %v2420 = vmul.f32 %v1110, %v1785
        %v2421 = vmul.f32 %v1111, %v1785
        %v2422 = vmul.f32 %v1112, %v1785
        %v2423 = vmul.f32 %v1113, %v1785
        %v2424 = vmul.f32 %v1114, %v1789
        %v2425 = vmul.f32 %v1115, %v1789
        %v2426 = vmul.f32 %v1116, %v1789
        %v2427 = vmul.f32 %v1117, %v1789
        %v2428 = vmul.f32 %v1118, %v1789
        %v2429 = vmul.f32 %v1119, %v1789
        %v2430 = vmul.f32 %v1120, %v1793
        %v2431 = vmul.f32 %v1121, %v1793
        %v2432 = vmul.f32 %v1122, %v1793
        %v2433 = vmul.f32 %v1123, %v1793
        %v2434 = vmul.f32 %v1124, %v1793
        %v2435 = vmul.f32 %v1125, %v1793
        %v2436 = vmul.f32 %v1126, %v1797
        %v2437 = vmul.f32 %v1127, %v1797
        %v2438 = vmul.f32 %v1128, %v1797
        %v2439 = vmul.f32 %v1129, %v1797
        %v2440 = vmul.f32 %v1130, %v1797
        %v2441 = vmul.f32 %v1131, %v1797
        %v2442 = vmul.f32 %v1132, %v1801
        %v2443 = vmul.f32 %v1133, %v1801
        %v2444 = vmul.f32 %v1134, %v1801
        %v2445 = vmul.f32 %v1135, %v1801
        %v2446 = vmul.f32 %v1136, %v1801
        %v2447 = vmul.f32 %v1137, %v1801
        %v2448 = vmul.f32 %v1138, %v1805
        %v2449 = vmul.f32 %v1139, %v1805
        %v2450 = vmul.f32 %v1140, %v1805
        %v2451 = vmul.f32 %v1141, %v1805
        %v2452 = vmul.f32 %v1142, %v1805
        %v2453 = vmul.f32 %v1143, %v1805
        %v2454 = vmul.f32 %v1144, %v1809
        %v2455 = vmul.f32 %v1145, %v1809
        %v2456 = vmul.f32 %v1146, %v1809
        %v2457 = vmul.f32 %v1147, %v1809
        %v2458 = vmul.f32 %v1148, %v1809
        %v2459 = vmul.f32 %v1149, %v1809
        %v2460 = vmul.f32 %v1150, %v1813
        %v2461 = vmul.f32 %v1151, %v1813
        %v2462 = vmul.f32 %v1152, %v1813
        %v2463 = vmul.f32 %v1153, %v1813
        %v2464 = vmul.f32 %v1154, %v1813
        %v2465 = vmul.f32 %v1155, %v1813
        %v2466 = vmul.f32 %v1156, %v1820
        %v2467 = vmul.f32 %v1157, %v1820
        %v2468 = vmul.f32 %v1158, %v1820
        %v2469 = vmul.f32 %v1159, %v1820
        %v2470 = vmul.f32 %v1160, %v1820
        %v2471 = vmul.f32 %v1161, %v1820
        %v2472 = vmul.f32 %v1162, %v1824
        %v2473 = vmul.f32 %v1163, %v1824
        %v2474 = vmul.f32 %v1164, %v1824
        %v2475 = vmul.f32 %v1165, %v1824
        %v2476 = vmul.f32 %v1166, %v1824
        %v2477 = vmul.f32 %v1167, %v1824
        %v2478 = vmul.f32 %v1168, %v1828
        %v2479 = vmul.f32 %v1169, %v1828
        %v2480 = vmul.f32 %v1170, %v1828
        %v2481 = vmul.f32 %v1171, %v1828
        %v2482 = vmul.f32 %v1172, %v1828
        %v2483 = vmul.f32 %v1173, %v1828
        %v2484 = vmul.f32 %v1174, %v1832
        %v2485 = vmul.f32 %v1175, %v1832
        %v2486 = vmul.f32 %v1176, %v1832
        %v2487 = vmul.f32 %v1177, %v1832
        %v2488 = vmul.f32 %v1178, %v1832
        %v2489 = vmul.f32 %v1179, %v1832
        %v2490 = vmul.f32 %v1180, %v1836
        %v2491 = vmul.f32 %v1181, %v1836
        %v2492 = vmul.f32 %v1182, %v1836
        %v2493 = vmul.f32 %v1183, %v1836
        %v2494 = vmul.f32 %v1184, %v1836
        %v2495 = vmul.f32 %v1185, %v1836
        %v2496 = vmul.f32 %v1186, %v1840
        %v2497 = vmul.f32 %v1187, %v1840
        %v2498 = vmul.f32 %v1188, %v1840
        %v2499 = vmul.f32 %v1189, %v1840
        %v2500 = vmul.f32 %v1190, %v1840
        %v2501 = vmul.f32 %v1191, %v1840
        %v2502 = vmul.f32 %v1192, %v1844
        %v2503 = vmul.f32 %v1193, %v1844
        %v2504 = vmul.f32 %v1194, %v1844
        %v2505 = vmul.f32 %v1195, %v1844
        %v2506 = vmul.f32 %v1196, %v1844
        %v2507 = vmul.f32 %v1197, %v1844
        %v2508 = vmul.f32 %v1198, %v1848
        %v2509 = vmul.f32 %v1199, %v1848
        %v2510 = vmul.f32 %v1200, %v1848
        %v2511 = vmul.f32 %v1201, %v1848
        %v2512 = vmul.f32 %v1202, %v1848
        %v2513 = vmul.f32 %v1203, %v1848
        %v2514 = vmul.f32 %v1204, %v1852
        %v2515 = vmul.f32 %v1205, %v1852
        %v2516 = vmul.f32 %v1206, %v1852
        %v2517 = vmul.f32 %v1207, %v1852
        %v2518 = vmul.f32 %v1208, %v1852
        %v2519 = vmul.f32 %v1209, %v1852
        %v2520 = vmul.f32 %v1210, %v1856
        %v2521 = vmul.f32 %v1211, %v1856
        %v2522 = vmul.f32 %v1212, %v1856
        %v2523 = vmul.f32 %v1213, %v1856
        %v2524 = vmul.f32 %v1214, %v1856
        %v2525 = vmul.f32 %v1215, %v1856
        %v2526 = vmul.f32 %v1216, %v1860
        %v2527 = vmul.f32 %v1217, %v1860
        %v2528 = vmul.f32 %v1218, %v1860
        %v2529 = vmul.f32 %v1219, %v1860
        %v2530 = vmul.f32 %v1220, %v1860
        %v2531 = vmul.f32 %v1221, %v1860
        %v2532 = vmul.f32 %v1222, %v1864
        %v2533 = vmul.f32 %v1223, %v1864
        %v2534 = vmul.f32 %v1224, %v1864
        %v2535 = vmul.f32 %v1225, %v1864
        %v2536 = vmul.f32 %v1226, %v1864
        %v2537 = vmul.f32 %v1227, %v1864
        %v2538 = vmul.f32 %v1228, %v1868
        %v2539 = vmul.f32 %v1229, %v1868
        %v2540 = vmul.f32 %v1230, %v1868
        %v2541 = vmul.f32 %v1231, %v1868
        %v2542 = vmul.f32 %v1232, %v1868
        %v2543 = vmul.f32 %v1233, %v1868
        %v2544 = vmul.f32 %v1234, %v1872
        %v2545 = vmul.f32 %v1235, %v1872
        %v2546 = vmul.f32 %v1236, %v1872
        %v2547 = vmul.f32 %v1237, %v1872
        %v2548 = vmul.f32 %v1238, %v1872
        %v2549 = vmul.f32 %v1239, %v1872
        %v2550 = vmul.f32 %v1240, %v1876
        %v2551 = vmul.f32 %v1241, %v1876
        %v2552 = vmul.f32 %v1242, %v1876
        %v2553 = vmul.f32 %v1243, %v1876
        %v2554 = vmul.f32 %v1244, %v1876
        %v2555 = vmul.f32 %v1245, %v1876
        %v2556 = vmul.f32 %v1246, %v1880
        %v2557 = vmul.f32 %v1247, %v1880
        %v2558 = vmul.f32 %v1248, %v1880
        %v2559 = vmul.f32 %v1249, %v1880
        %v2560 = vmul.f32 %v1250, %v1880
        %v2561 = vmul.f32 %v1251, %v1880
        %v2562 = vmul.f32 %v1252, %v1887
        %v2563 = vmul.f32 %v1253, %v1887
        %v2564 = vmul.f32 %v1254, %v1887
        %v2565 = vmul.f32 %v1255, %v1887
        %v2566 = vmul.f32 %v1256, %v1887
        %v2567 = vmul.f32 %v1257, %v1887
        %v2568 = vmul.f32 %v1258, %v1891
        %v2569 = vmul.f32 %v1259, %v1891
        %v2570 = vmul.f32 %v1260, %v1891
        %v2571 = vmul.f32 %v1261, %v1891
        %v2572 = vmul.f32 %v1262, %v1891
        %v2573 = vmul.f32 %v1263, %v1891
        %v2574 = vmul.f32 %v1264, %v1895
        %v2575 = vmul.f32 %v1265, %v1895
        %v2576 = vmul.f32 %v1266, %v1895
        %v2577 = vmul.f32 %v1267, %v1895
        %v2578 = vmul.f32 %v1268, %v1895
        %v2579 = vmul.f32 %v1269, %v1895
        %v2580 = vmul.f32 %v1270, %v1899
        %v2581 = vmul.f32 %v1271, %v1899
        %v2582 = vmul.f32 %v1272, %v1899
        %v2583 = vmul.f32 %v1273, %v1899
        %v2584 = vmul.f32 %v1274, %v1899
        %v2585 = vmul.f32 %v1275, %v1899
        %v2586 = vmul.f32 %v1276, %v1903
        %v2587 = vmul.f32 %v1277, %v1903
        %v2588 = vmul.f32 %v1278, %v1903
        %v2589 = vmul.f32 %v1279, %v1903
        %v2590 = vmul.f32 %v1280, %v1903
        %v2591 = vmul.f32 %v1281, %v1903
        %v2592 = vmul.f32 %v1282, %v1907
        %v2593 = vmul.f32 %v1283, %v1907
        %v2594 = vmul.f32 %v1284, %v1907
        %v2595 = vmul.f32 %v1285, %v1907
        %v2596 = vmul.f32 %v1286, %v1907
        %v2597 = vmul.f32 %v1287, %v1907
        %v2598 = vmul.f32 %v1288, %v1911
        %v2599 = vmul.f32 %v1289, %v1911
        %v2600 = vmul.f32 %v1290, %v1911
        %v2601 = vmul.f32 %v1291, %v1911
        %v2602 = vmul.f32 %v1292, %v1911
        %v2603 = vmul.f32 %v1293, %v1911
        %v2604 = vmul.f32 %v1294, %v1915
        %v2605 = vmul.f32 %v1295, %v1915
        %v2606 = vmul.f32 %v1296, %v1915
        %v2607 = vmul.f32 %v1297, %v1915
        %v2608 = vmul.f32 %v1298, %v1915
        %v2609 = vmul.f32 %v1299, %v1915
        %v2610 = vmul.f32 %v1300, %v1919
        %v2611 = vmul.f32 %v1301, %v1919
        %v2612 = vmul.f32 %v1302, %v1919
        %v2613 = vmul.f32 %v1303, %v1919
        %v2614 = vmul.f32 %v1304, %v1919
        %v2615 = vmul.f32 %v1305, %v1919
        %v2616 = vmul.f32 %v1306, %v1923
        %v2617 = vmul.f32 %v1307, %v1923
        %v2618 = vmul.f32 %v1308, %v1923
        %v2619 = vmul.f32 %v1309, %v1923
        %v2620 = vmul.f32 %v1310, %v1923
        %v2621 = vmul.f32 %v1311, %v1923
        %v2622 = vmul.f32 %v1312, %v1927
        %v2623 = vmul.f32 %v1313, %v1927
        %v2624 = vmul.f32 %v1314, %v1927
        %v2625 = vmul.f32 %v1315, %v1927
        %v2626 = vmul.f32 %v1316, %v1927
        %v2627 = vmul.f32 %v1317, %v1927
        %v2628 = vmul.f32 %v1318, %v1931
        %v2629 = vmul.f32 %v1319, %v1931
        %v2630 = vmul.f32 %v1320, %v1931
        %v2631 = vmul.f32 %v1321, %v1931
        %v2632 = vmul.f32 %v1322, %v1931
        %v2633 = vmul.f32 %v1323, %v1931
        %v2634 = vmul.f32 %v1324, %v1935
        %v2635 = vmul.f32 %v1325, %v1935
        %v2636 = vmul.f32 %v1326, %v1935
        %v2637 = vmul.f32 %v1327, %v1935
        %v2638 = vmul.f32 %v1328, %v1935
        %v2639 = vmul.f32 %v1329, %v1935
        %v2640 = vmul.f32 %v1330, %v1939
        %v2641 = vmul.f32 %v1331, %v1939
        %v2642 = vmul.f32 %v1332, %v1939
        %v2643 = vmul.f32 %v1333, %v1939
        %v2644 = vmul.f32 %v1334, %v1939
        %v2645 = vmul.f32 %v1335, %v1939
        %v2646 = vmul.f32 %v1336, %v1943
        %v2647 = vmul.f32 %v1337, %v1943
        %v2648 = vmul.f32 %v1338, %v1943
        %v2649 = vmul.f32 %v1339, %v1943
        %v2650 = vmul.f32 %v1340, %v1943
        %v2651 = vmul.f32 %v1341, %v1943
        %v2652 = vmul.f32 %v1342, %v1947
        %v2653 = vmul.f32 %v1343, %v1947
        %v2654 = vmul.f32 %v1344, %v1947
        %v2655 = vmul.f32 %v1345, %v1947
        %v2656 = vmul.f32 %v1346, %v1947
        %v2657 = vmul.f32 %v1347, %v1947
        %v2658 = vmul.f32 %v1348, %v1954
        %v2659 = vmul.f32 %v1349, %v1954
        %v2660 = vmul.f32 %v1350, %v1954
        %v2661 = vmul.f32 %v1351, %v1954
        %v2662 = vmul.f32 %v1352, %v1954
        %v2663 = vmul.f32 %v1353, %v1954
        %v2664 = vmul.f32 %v1354, %v1958
        %v2665 = vmul.f32 %v1355, %v1958
        %v2666 = vmul.f32 %v1356, %v1958
        %v2667 = vmul.f32 %v1357, %v1958
        %v2668 = vmul.f32 %v1358, %v1958
        %v2669 = vmul.f32 %v1359, %v1958
        %v2670 = vmul.f32 %v1360, %v1962
        %v2671 = vmul.f32 %v1361, %v1962
        %v2672 = vmul.f32 %v1362, %v1962
        %v2673 = vmul.f32 %v1363, %v1962
        %v2674 = vmul.f32 %v1364, %v1962
        %v2675 = vmul.f32 %v1365, %v1962
        %v2676 = vmul.f32 %v1366, %v1966
        %v2677 = vmul.f32 %v1367, %v1966
        %v2678 = vmul.f32 %v1368, %v1966
        %v2679 = vmul.f32 %v1369, %v1966
        %v2680 = vmul.f32 %v1370, %v1966
        %v2681 = vmul.f32 %v1371, %v1966
        %v2682 = vmul.f32 %v1372, %v1970
        %v2683 = vmul.f32 %v1373, %v1970
        %v2684 = vmul.f32 %v1374, %v1970
        %v2685 = vmul.f32 %v1375, %v1970
        %v2686 = vmul.f32 %v1376, %v1970
        %v2687 = vmul.f32 %v1377, %v1970
        %v2688 = vmul.f32 %v1378, %v1974
        %v2689 = vmul.f32 %v1379, %v1974
        %v2690 = vmul.f32 %v1380, %v1974
        %v2691 = vmul.f32 %v1381, %v1974
        %v2692 = vmul.f32 %v1382, %v1974
        %v2693 = vmul.f32 %v1383, %v1974
        %v2694 = vmul.f32 %v1384, %v1978
        %v2695 = vmul.f32 %v1385, %v1978
        %v2696 = vmul.f32 %v1386, %v1978
        %v2697 = vmul.f32 %v1387, %v1978
        %v2698 = vmul.f32 %v1388, %v1978
        %v2699 = vmul.f32 %v1389, %v1978
        %v2700 = vmul.f32 %v1390, %v1982
        %v2701 = vmul.f32 %v1391, %v1982
        %v2702 = vmul.f32 %v1392, %v1982
        %v2703 = vmul.f32 %v1393, %v1982
        %v2704 = vmul.f32 %v1394, %v1982
        %v2705 = vmul.f32 %v1395, %v1982
        %v2706 = vmul.f32 %v1396, %v1986
        %v2707 = vmul.f32 %v1397, %v1986
        %v2708 = vmul.f32 %v1398, %v1986
        %v2709 = vmul.f32 %v1399, %v1986
        %v2710 = vmul.f32 %v1400, %v1986
        %v2711 = vmul.f32 %v1401, %v1986
        %v2712 = vmul.f32 %v1402, %v1990
        %v2713 = vmul.f32 %v1403, %v1990
        %v2714 = vmul.f32 %v1404, %v1990
        %v2715 = vmul.f32 %v1405, %v1990
        %v2716 = vmul.f32 %v1406, %v1990
        %v2717 = vmul.f32 %v1407, %v1990
        %v2718 = vmul.f32 %v1408, %v1994
        %v2719 = vmul.f32 %v1409, %v1994
        %v2720 = vmul.f32 %v1410, %v1994
        %v2721 = vmul.f32 %v1411, %v1994
        %v2722 = vmul.f32 %v1412, %v1994
        %v2723 = vmul.f32 %v1413, %v1994
        %v2724 = vmul.f32 %v1414, %v1998
        %v2725 = vmul.f32 %v1415, %v1998
        %v2726 = vmul.f32 %v1416, %v1998
        %v2727 = vmul.f32 %v1417, %v1998
        %v2728 = vmul.f32 %v1418, %v1998
        %v2729 = vmul.f32 %v1419, %v1998
        %v2730 = vmul.f32 %v1420, %v2002
        %v2731 = vmul.f32 %v1421, %v2002
        %v2732 = vmul.f32 %v1422, %v2002
        %v2733 = vmul.f32 %v1423, %v2002
        %v2734 = vmul.f32 %v1424, %v2002
        %v2735 = vmul.f32 %v1425, %v2002
        %v2736 = vmul.f32 %v1426, %v2006
        %v2737 = vmul.f32 %v1427, %v2006
        %v2738 = vmul.f32 %v1428, %v2006
        %v2739 = vmul.f32 %v1429, %v2006
        %v2740 = vmul.f32 %v1430, %v2006
        %v2741 = vmul.f32 %v1431, %v2006
        %v2742 = vmul.f32 %v1432, %v2010
        %v2743 = vmul.f32 %v1433, %v2010
        %v2744 = vmul.f32 %v1434, %v2010
        %v2745 = vmul.f32 %v1435, %v2010
        %v2746 = vmul.f32 %v1436, %v2010
        %v2747 = vmul.f32 %v1437, %v2010
        %v2748 = vmul.f32 %v1438, %v2014
        %v2749 = vmul.f32 %v1439, %v2014
        %v2750 = vmul.f32 %v1440, %v2014
        %v2751 = vmul.f32 %v1441, %v2014
        %v2752 = vmul.f32 %v1442, %v2014
        %v2753 = vmul.f32 %v1443, %v2014
        %v2754 = vmul.f32 %v1444, %v2021
        %v2755 = vmul.f32 %v1445, %v2021
        %v2756 = vmul.f32 %v1446, %v2021
        %v2757 = vmul.f32 %v1447, %v2021
        %v2758 = vmul.f32 %v1448, %v2021
        %v2759 = vmul.f32 %v1449, %v2021
        %v2760 = vmul.f32 %v1450, %v2025
        %v2761 = vmul.f32 %v1451, %v2025
        %v2762 = vmul.f32 %v1452, %v2025
        %v2763 = vmul.f32 %v1453, %v2025
        %v2764 = vmul.f32 %v1454, %v2025
        %v2765 = vmul.f32 %v1455, %v2025
        %v2766 = vmul.f32 %v1456, %v2029
        %v2767 = vmul.f32 %v1457, %v2029
        %v2768 = vmul.f32 %v1458, %v2029
        %v2769 = vmul.f32 %v1459, %v2029
        %v2770 = vmul.f32 %v1460, %v2029
        %v2771 = vmul.f32 %v1461, %v2029
        %v2772 = vmul.f32 %v1462, %v2033
        %v2773 = vmul.f32 %v1463, %v2033
        %v2774 = vmul.f32 %v1464, %v2033
        %v2775 = vmul.f32 %v1465, %v2033
        %v2776 = vmul.f32 %v1466, %v2033
        %v2777 = vmul.f32 %v1467, %v2033
        %v2778 = vmul.f32 %v1468, %v2037
        %v2779 = vmul.f32 %v1469, %v2037
        %v2780 = vmul.f32 %v1470, %v2037
        %v2781 = vmul.f32 %v1471, %v2037
        %v2782 = vmul.f32 %v1472, %v2037
        %v2783 = vmul.f32 %v1473, %v2037
        %v2784 = vmul.f32 %v1474, %v2041
        %v2785 = vmul.f32 %v1475, %v2041
        %v2786 = vmul.f32 %v1476, %v2041
        %v2787 = vmul.f32 %v1477, %v2041
        %v2788 = vmul.f32 %v1478, %v2041
        %v2789 = vmul.f32 %v1479, %v2041
        %v2790 = vmul.f32 %v1480, %v2045
        %v2791 = vmul.f32 %v1481, %v2045
        %v2792 = vmul.f32 %v1482, %v2045
        %v2793 = vmul.f32 %v1483, %v2045
        %v2794 = vmul.f32 %v1484, %v2045
        %v2795 = vmul.f32 %v1485, %v2045
        %v2796 = vmul.f32 %v1486, %v2049
        %v2797 = vmul.f32 %v1487, %v2049
        %v2798 = vmul.f32 %v1488, %v2049
        %v2799 = vmul.f32 %v1489, %v2049
        %v2800 = vmul.f32 %v1490, %v2049
        %v2801 = vmul.f32 %v1491, %v2049
        %v2802 = vmul.f32 %v1492, %v2053
        %v2803 = vmul.f32 %v1493, %v2053
        %v2804 = vmul.f32 %v1494, %v2053
        %v2805 = vmul.f32 %v1495, %v2053
        %v2806 = vmul.f32 %v1496, %v2053
        %v2807 = vmul.f32 %v1497, %v2053
        %v2808 = vmul.f32 %v1498, %v2057
        %v2809 = vmul.f32 %v1499, %v2057
        %v2810 = vmul.f32 %v1500, %v2057
        %v2811 = vmul.f32 %v1501, %v2057
        %v2812 = vmul.f32 %v1502, %v2057
        %v2813 = vmul.f32 %v1503, %v2057
        %v2814 = vmul.f32 %v1504, %v2061
        %v2815 = vmul.f32 %v1505, %v2061
        %v2816 = vmul.f32 %v1506, %v2061
        %v2817 = vmul.f32 %v1507, %v2061
        %v2818 = vmul.f32 %v1508, %v2061
        %v2819 = vmul.f32 %v1509, %v2061
        %v2820 = vmul.f32 %v1510, %v2065
        %v2821 = vmul.f32 %v1511, %v2065
        %v2822 = vmul.f32 %v1512, %v2065
        %v2823 = vmul.f32 %v1513, %v2065
        %v2824 = vmul.f32 %v1514, %v2065
        %v2825 = vmul.f32 %v1515, %v2065
        %v2826 = vmul.f32 %v1516, %v2069
        %v2827 = vmul.f32 %v1517, %v2069
        %v2828 = vmul.f32 %v1518, %v2069
        %v2829 = vmul.f32 %v1519, %v2069
        %v2830 = vmul.f32 %v1520, %v2069
        %v2831 = vmul.f32 %v1521, %v2069
        %v2832 = vmul.f32 %v1522, %v2073
        %v2833 = vmul.f32 %v1523, %v2073
        %v2834 = vmul.f32 %v1524, %v2073
        %v2835 = vmul.f32 %v1525, %v2073
        %v2836 = vmul.f32 %v1526, %v2073
        %v2837 = vmul.f32 %v1527, %v2073
        %v2838 = vmul.f32 %v1528, %v2077
        %v2839 = vmul.f32 %v1529, %v2077
        %v2840 = vmul.f32 %v1530, %v2077
        %v2841 = vmul.f32 %v1531, %v2077
        %v2842 = vmul.f32 %v1532, %v2077
        %v2843 = vmul.f32 %v1533, %v2077
        %v2844 = vmul.f32 %v1534, %v2081
        %v2845 = vmul.f32 %v1535, %v2081
        %v2846 = vmul.f32 %v1536, %v2081
        %v2847 = vmul.f32 %v1537, %v2081
        %v2848 = vmul.f32 %v1538, %v2081
        %v2849 = vmul.f32 %v1539, %v2081
        %v2850 = vadd.f32 %v2082, %v2088
        %v2851 = vadd.f32 %v2850, %v2094
        %v2852 = vadd.f32 %v2851, %v2100
        %v2853 = vadd.f32 %v2852, %v2106
        %v2854 = vadd.f32 %v2853, %v2112
        %v2855 = vadd.f32 %v2854, %v2118
        %v2856 = vadd.f32 %v2855, %v2124
        %v2857 = vadd.f32 %v2856, %v2130
        %v2858 = vadd.f32 %v2857, %v2136
        %v2859 = vadd.f32 %v2858, %v2142
        %v2860 = vadd.f32 %v2859, %v2148
        %v2861 = vadd.f32 %v2860, %v2154
        %v2862 = vadd.f32 %v2861, %v2160
        %v2863 = vadd.f32 %v2862, %v2166
        %v2864 = vadd.f32 %v2863, %v2172
        %v2865 = vrot.slane %v2864, 4
        %v2866 = vadd.f32 %v2864, %v2865
        %v2867 = vrot.slane %v2866, 2
        %v2868 = vadd.f32 %v2866, %v2867
        %v2869 = vrot.slane %v2868, 1
        %v2870 = vadd.f32 %v2868, %v2869
        %v2871 = vadd.f32 %v2083, %v2089
        %v2872 = vadd.f32 %v2871, %v2095
        %v2873 = vadd.f32 %v2872, %v2101
        %v2874 = vadd.f32 %v2873, %v2107
        %v2875 = vadd.f32 %v2874, %v2113
        %v2876 = vadd.f32 %v2875, %v2119
        %v2877 = vadd.f32 %v2876, %v2125
        %v2878 = vadd.f32 %v2877, %v2131
        %v2879 = vadd.f32 %v2878, %v2137
        %v2880 = vadd.f32 %v2879, %v2143
        %v2881 = vadd.f32 %v2880, %v2149
        %v2882 = vadd.f32 %v2881, %v2155
        %v2883 = vadd.f32 %v2882, %v2161
        %v2884 = vadd.f32 %v2883, %v2167
        %v2885 = vadd.f32 %v2884, %v2173
        %v2886 = vrot.slane %v2885, 4
        %v2887 = vadd.f32 %v2885, %v2886
        %v2888 = vrot.slane %v2887, 2
        %v2889 = vadd.f32 %v2887, %v2888
        %v2890 = vrot.slane %v2889, 1
        %v2891 = vadd.f32 %v2889, %v2890
        %v2892 = vadd.f32 %v2084, %v2090
        %v2893 = vadd.f32 %v2892, %v2096
        %v2894 = vadd.f32 %v2893, %v2102
        %v2895 = vadd.f32 %v2894, %v2108
        %v2896 = vadd.f32 %v2895, %v2114
        %v2897 = vadd.f32 %v2896, %v2120
        %v2898 = vadd.f32 %v2897, %v2126
        %v2899 = vadd.f32 %v2898, %v2132
        %v2900 = vadd.f32 %v2899, %v2138
        %v2901 = vadd.f32 %v2900, %v2144
        %v2902 = vadd.f32 %v2901, %v2150
        %v2903 = vadd.f32 %v2902, %v2156
        %v2904 = vadd.f32 %v2903, %v2162
        %v2905 = vadd.f32 %v2904, %v2168
        %v2906 = vadd.f32 %v2905, %v2174
        %v2907 = vrot.slane %v2906, 4
        %v2908 = vadd.f32 %v2906, %v2907
        %v2909 = vrot.slane %v2908, 2
        %v2910 = vadd.f32 %v2908, %v2909
        %v2911 = vrot.slane %v2910, 1
        %v2912 = vadd.f32 %v2910, %v2911
        %v2913 = vadd.f32 %v2085, %v2091
        %v2914 = vadd.f32 %v2913, %v2097
        %v2915 = vadd.f32 %v2914, %v2103
        %v2916 = vadd.f32 %v2915, %v2109
        %v2917 = vadd.f32 %v2916, %v2115
        %v2918 = vadd.f32 %v2917, %v2121
        %v2919 = vadd.f32 %v2918, %v2127
        %v2920 = vadd.f32 %v2919, %v2133
        %v2921 = vadd.f32 %v2920, %v2139
        %v2922 = vadd.f32 %v2921, %v2145
        %v2923 = vadd.f32 %v2922, %v2151
        %v2924 = vadd.f32 %v2923, %v2157
        %v2925 = vadd.f32 %v2924, %v2163
        %v2926 = vadd.f32 %v2925, %v2169
        %v2927 = vadd.f32 %v2926, %v2175
        %v2928 = vrot.slane %v2927, 4
        %v2929 = vadd.f32 %v2927, %v2928
        %v2930 = vrot.slane %v2929, 2
        %v2931 = vadd.f32 %v2929, %v2930
        %v2932 = vrot.slane %v2931, 1
        %v2933 = vadd.f32 %v2931, %v2932
        %v2934 = vadd.f32 %v2086, %v2092
        %v2935 = vadd.f32 %v2934, %v2098
        %v2936 = vadd.f32 %v2935, %v2104
        %v2937 = vadd.f32 %v2936, %v2110
        %v2938 = vadd.f32 %v2937, %v2116
        %v2939 = vadd.f32 %v2938, %v2122
        %v2940 = vadd.f32 %v2939, %v2128
        %v2941 = vadd.f32 %v2940, %v2134
        %v2942 = vadd.f32 %v2941, %v2140
        %v2943 = vadd.f32 %v2942, %v2146
        %v2944 = vadd.f32 %v2943, %v2152
        %v2945 = vadd.f32 %v2944, %v2158
        %v2946 = vadd.f32 %v2945, %v2164
        %v2947 = vadd.f32 %v2946, %v2170
        %v2948 = vadd.f32 %v2947, %v2176
        %v2949 = vrot.slane %v2948, 4
        %v2950 = vadd.f32 %v2948, %v2949
        %v2951 = vrot.slane %v2950, 2
        %v2952 = vadd.f32 %v2950, %v2951
        %v2953 = vrot.slane %v2952, 1
        %v2954 = vadd.f32 %v2952, %v2953
        %v2955 = vadd.f32 %v2087, %v2093
        %v2956 = vadd.f32 %v2955, %v2099
        %v2957 = vadd.f32 %v2956, %v2105
        %v2958 = vadd.f32 %v2957, %v2111
        %v2959 = vadd.f32 %v2958, %v2117
        %v2960 = vadd.f32 %v2959, %v2123
        %v2961 = vadd.f32 %v2960, %v2129
        %v2962 = vadd.f32 %v2961, %v2135
        %v2963 = vadd.f32 %v2962, %v2141
        %v2964 = vadd.f32 %v2963, %v2147
        %v2965 = vadd.f32 %v2964, %v2153
        %v2966 = vadd.f32 %v2965, %v2159
        %v2967 = vadd.f32 %v2966, %v2165
        %v2968 = vadd.f32 %v2967, %v2171
        %v2969 = vadd.f32 %v2968, %v2177
        %v2970 = vrot.slane %v2969, 4
        %v2971 = vadd.f32 %v2969, %v2970
        %v2972 = vrot.slane %v2971, 2
        %v2973 = vadd.f32 %v2971, %v2972
        %v2974 = vrot.slane %v2973, 1
        %v2975 = vadd.f32 %v2973, %v2974
        %v2976 = vadd.f32 %v2178, %v2184
        %v2977 = vadd.f32 %v2976, %v2190
        %v2978 = vadd.f32 %v2977, %v2196
        %v2979 = vadd.f32 %v2978, %v2202
        %v2980 = vadd.f32 %v2979, %v2208
        %v2981 = vadd.f32 %v2980, %v2214
        %v2982 = vadd.f32 %v2981, %v2220
        %v2983 = vadd.f32 %v2982, %v2226
        %v2984 = vadd.f32 %v2983, %v2232
        %v2985 = vadd.f32 %v2984, %v2238
        %v2986 = vadd.f32 %v2985, %v2244
        %v2987 = vadd.f32 %v2986, %v2250
        %v2988 = vadd.f32 %v2987, %v2256
        %v2989 = vadd.f32 %v2988, %v2262
        %v2990 = vadd.f32 %v2989, %v2268
        %v2991 = vrot.slane %v2990, 4
        %v2992 = vadd.f32 %v2990, %v2991
        %v2993 = vrot.slane %v2992, 2
        %v2994 = vadd.f32 %v2992, %v2993
        %v2995 = vrot.slane %v2994, 1
        %v2996 = vadd.f32 %v2994, %v2995
        %v2997 = vadd.f32 %v2179, %v2185
        %v2998 = vadd.f32 %v2997, %v2191
        %v2999 = vadd.f32 %v2998, %v2197
        %v3000 = vadd.f32 %v2999, %v2203
        %v3001 = vadd.f32 %v3000, %v2209
        %v3002 = vadd.f32 %v3001, %v2215
        %v3003 = vadd.f32 %v3002, %v2221
        %v3004 = vadd.f32 %v3003, %v2227
        %v3005 = vadd.f32 %v3004, %v2233
        %v3006 = vadd.f32 %v3005, %v2239
        %v3007 = vadd.f32 %v3006, %v2245
        %v3008 = vadd.f32 %v3007, %v2251
        %v3009 = vadd.f32 %v3008, %v2257
        %v3010 = vadd.f32 %v3009, %v2263
        %v3011 = vadd.f32 %v3010, %v2269
        %v3012 = vrot.slane %v3011, 4
        %v3013 = vadd.f32 %v3011, %v3012
        %v3014 = vrot.slane %v3013, 2
        %v3015 = vadd.f32 %v3013, %v3014
        %v3016 = vrot.slane %v3015, 1
        %v3017 = vadd.f32 %v3015, %v3016
        %v3018 = vadd.f32 %v2180, %v2186
        %v3019 = vadd.f32 %v3018, %v2192
        %v3020 = vadd.f32 %v3019, %v2198
        %v3021 = vadd.f32 %v3020, %v2204
        %v3022 = vadd.f32 %v3021, %v2210
        %v3023 = vadd.f32 %v3022, %v2216
        %v3024 = vadd.f32 %v3023, %v2222
        %v3025 = vadd.f32 %v3024, %v2228
        %v3026 = vadd.f32 %v3025, %v2234
        %v3027 = vadd.f32 %v3026, %v2240
        %v3028 = vadd.f32 %v3027, %v2246
        %v3029 = vadd.f32 %v3028, %v2252
        %v3030 = vadd.f32 %v3029, %v2258
        %v3031 = vadd.f32 %v3030, %v2264
        %v3032 = vadd.f32 %v3031, %v2270
        %v3033 = vrot.slane %v3032, 4
        %v3034 = vadd.f32 %v3032, %v3033
        %v3035 = vrot.slane %v3034, 2
        %v3036 = vadd.f32 %v3034, %v3035
        %v3037 = vrot.slane %v3036, 1
        %v3038 = vadd.f32 %v3036, %v3037
        %v3039 = vadd.f32 %v2181, %v2187
        %v3040 = vadd.f32 %v3039, %v2193
        %v3041 = vadd.f32 %v3040, %v2199
        %v3042 = vadd.f32 %v3041, %v2205
        %v3043 = vadd.f32 %v3042, %v2211
        %v3044 = vadd.f32 %v3043, %v2217
        %v3045 = vadd.f32 %v3044, %v2223
        %v3046 = vadd.f32 %v3045, %v2229
        %v3047 = vadd.f32 %v3046, %v2235
        %v3048 = vadd.f32 %v3047, %v2241
        %v3049 = vadd.f32 %v3048, %v2247
        %v3050 = vadd.f32 %v3049, %v2253
        %v3051 = vadd.f32 %v3050, %v2259
        %v3052 = vadd.f32 %v3051, %v2265
        %v3053 = vadd.f32 %v3052, %v2271
        %v3054 = vrot.slane %v3053, 4
        %v3055 = vadd.f32 %v3053, %v3054
        %v3056 = vrot.slane %v3055, 2
        %v3057 = vadd.f32 %v3055, %v3056
        %v3058 = vrot.slane %v3057, 1
        %v3059 = vadd.f32 %v3057, %v3058
        %v3060 = vadd.f32 %v2182, %v2188
        %v3061 = vadd.f32 %v3060, %v2194
        %v3062 = vadd.f32 %v3061, %v2200
        %v3063 = vadd.f32 %v3062, %v2206
        %v3064 = vadd.f32 %v3063, %v2212
        %v3065 = vadd.f32 %v3064, %v2218
        %v3066 = vadd.f32 %v3065, %v2224
        %v3067 = vadd.f32 %v3066, %v2230
        %v3068 = vadd.f32 %v3067, %v2236
        %v3069 = vadd.f32 %v3068, %v2242
        %v3070 = vadd.f32 %v3069, %v2248
        %v3071 = vadd.f32 %v3070, %v2254
        %v3072 = vadd.f32 %v3071, %v2260
        %v3073 = vadd.f32 %v3072, %v2266
        %v3074 = vadd.f32 %v3073, %v2272
        %v3075 = vrot.slane %v3074, 4
        %v3076 = vadd.f32 %v3074, %v3075
        %v3077 = vrot.slane %v3076, 2
        %v3078 = vadd.f32 %v3076, %v3077
        %v3079 = vrot.slane %v3078, 1
        %v3080 = vadd.f32 %v3078, %v3079
        %v3081 = vadd.f32 %v2183, %v2189
        %v3082 = vadd.f32 %v3081, %v2195
        %v3083 = vadd.f32 %v3082, %v2201
        %v3084 = vadd.f32 %v3083, %v2207
        %v3085 = vadd.f32 %v3084, %v2213
        %v3086 = vadd.f32 %v3085, %v2219
        %v3087 = vadd.f32 %v3086, %v2225
        %v3088 = vadd.f32 %v3087, %v2231
        %v3089 = vadd.f32 %v3088, %v2237
        %v3090 = vadd.f32 %v3089, %v2243
        %v3091 = vadd.f32 %v3090, %v2249
        %v3092 = vadd.f32 %v3091, %v2255
        %v3093 = vadd.f32 %v3092, %v2261
        %v3094 = vadd.f32 %v3093, %v2267
        %v3095 = vadd.f32 %v3094, %v2273
        %v3096 = vrot.slane %v3095, 4
        %v3097 = vadd.f32 %v3095, %v3096
        %v3098 = vrot.slane %v3097, 2
        %v3099 = vadd.f32 %v3097, %v3098
        %v3100 = vrot.slane %v3099, 1
        %v3101 = vadd.f32 %v3099, %v3100
        %v3102 = vadd.f32 %v2274, %v2280
        %v3103 = vadd.f32 %v3102, %v2286
        %v3104 = vadd.f32 %v3103, %v2292
        %v3105 = vadd.f32 %v3104, %v2298
        %v3106 = vadd.f32 %v3105, %v2304
        %v3107 = vadd.f32 %v3106, %v2310
        %v3108 = vadd.f32 %v3107, %v2316
        %v3109 = vadd.f32 %v3108, %v2322
        %v3110 = vadd.f32 %v3109, %v2328
        %v3111 = vadd.f32 %v3110, %v2334
        %v3112 = vadd.f32 %v3111, %v2340
        %v3113 = vadd.f32 %v3112, %v2346
        %v3114 = vadd.f32 %v3113, %v2352
        %v3115 = vadd.f32 %v3114, %v2358
        %v3116 = vadd.f32 %v3115, %v2364
        %v3117 = vrot.slane %v3116, 4
        %v3118 = vadd.f32 %v3116, %v3117
        %v3119 = vrot.slane %v3118, 2
        %v3120 = vadd.f32 %v3118, %v3119
        %v3121 = vrot.slane %v3120, 1
        %v3122 = vadd.f32 %v3120, %v3121
        %v3123 = vadd.f32 %v2275, %v2281
        %v3124 = vadd.f32 %v3123, %v2287
        %v3125 = vadd.f32 %v3124, %v2293
        %v3126 = vadd.f32 %v3125, %v2299
        %v3127 = vadd.f32 %v3126, %v2305
        %v3128 = vadd.f32 %v3127, %v2311
        %v3129 = vadd.f32 %v3128, %v2317
        %v3130 = vadd.f32 %v3129, %v2323
        %v3131 = vadd.f32 %v3130, %v2329
        %v3132 = vadd.f32 %v3131, %v2335
        %v3133 = vadd.f32 %v3132, %v2341
        %v3134 = vadd.f32 %v3133, %v2347
        %v3135 = vadd.f32 %v3134, %v2353
        %v3136 = vadd.f32 %v3135, %v2359
        %v3137 = vadd.f32 %v3136, %v2365
        %v3138 = vrot.slane %v3137, 4
        %v3139 = vadd.f32 %v3137, %v3138
        %v3140 = vrot.slane %v3139, 2
        %v3141 = vadd.f32 %v3139, %v3140
        %v3142 = vrot.slane %v3141, 1
        %v3143 = vadd.f32 %v3141, %v3142
        %v3144 = vadd.f32 %v2276, %v2282
        %v3145 = vadd.f32 %v3144, %v2288
        %v3146 = vadd.f32 %v3145, %v2294
        %v3147 = vadd.f32 %v3146, %v2300
        %v3148 = vadd.f32 %v3147, %v2306
        %v3149 = vadd.f32 %v3148, %v2312
        %v3150 = vadd.f32 %v3149, %v2318
        %v3151 = vadd.f32 %v3150, %v2324
        %v3152 = vadd.f32 %v3151, %v2330
        %v3153 = vadd.f32 %v3152, %v2336
        %v3154 = vadd.f32 %v3153, %v2342
        %v3155 = vadd.f32 %v3154, %v2348
        %v3156 = vadd.f32 %v3155, %v2354
        %v3157 = vadd.f32 %v3156, %v2360
        %v3158 = vadd.f32 %v3157, %v2366
        %v3159 = vrot.slane %v3158, 4
        %v3160 = vadd.f32 %v3158, %v3159
        %v3161 = vrot.slane %v3160, 2
        %v3162 = vadd.f32 %v3160, %v3161
        %v3163 = vrot.slane %v3162, 1
        %v3164 = vadd.f32 %v3162, %v3163
        %v3165 = vadd.f32 %v2277, %v2283
        %v3166 = vadd.f32 %v3165, %v2289
        %v3167 = vadd.f32 %v3166, %v2295
        %v3168 = vadd.f32 %v3167, %v2301
        %v3169 = vadd.f32 %v3168, %v2307
        %v3170 = vadd.f32 %v3169, %v2313
        %v3171 = vadd.f32 %v3170, %v2319
        %v3172 = vadd.f32 %v3171, %v2325
        %v3173 = vadd.f32 %v3172, %v2331
        %v3174 = vadd.f32 %v3173, %v2337
        %v3175 = vadd.f32 %v3174, %v2343
        %v3176 = vadd.f32 %v3175, %v2349
        %v3177 = vadd.f32 %v3176, %v2355
        %v3178 = vadd.f32 %v3177, %v2361
        %v3179 = vadd.f32 %v3178, %v2367
        %v3180 = vrot.slane %v3179, 4
        %v3181 = vadd.f32 %v3179, %v3180
        %v3182 = vrot.slane %v3181, 2
        %v3183 = vadd.f32 %v3181, %v3182
        %v3184 = vrot.slane %v3183, 1
        %v3185 = vadd.f32 %v3183, %v3184
        %v3186 = vadd.f32 %v2278, %v2284
        %v3187 = vadd.f32 %v3186, %v2290
        %v3188 = vadd.f32 %v3187, %v2296
        %v3189 = vadd.f32 %v3188, %v2302
        %v3190 = vadd.f32 %v3189, %v2308
        %v3191 = vadd.f32 %v3190, %v2314
        %v3192 = vadd.f32 %v3191, %v2320
        %v3193 = vadd.f32 %v3192, %v2326
        %v3194 = vadd.f32 %v3193, %v2332
        %v3195 = vadd.f32 %v3194, %v2338
        %v3196 = vadd.f32 %v3195, %v2344
        %v3197 = vadd.f32 %v3196, %v2350
        %v3198 = vadd.f32 %v3197, %v2356
        %v3199 = vadd.f32 %v3198, %v2362
        %v3200 = vadd.f32 %v3199, %v2368
        %v3201 = vrot.slane %v3200, 4
        %v3202 = vadd.f32 %v3200, %v3201
        %v3203 = vrot.slane %v3202, 2
        %v3204 = vadd.f32 %v3202, %v3203
        %v3205 = vrot.slane %v3204, 1
        %v3206 = vadd.f32 %v3204, %v3205
        %v3207 = vadd.f32 %v2279, %v2285
        %v3208 = vadd.f32 %v3207, %v2291
        %v3209 = vadd.f32 %v3208, %v2297
        %v3210 = vadd.f32 %v3209, %v2303
        %v3211 = vadd.f32 %v3210, %v2309
        %v3212 = vadd.f32 %v3211, %v2315
        %v3213 = vadd.f32 %v3212, %v2321
        %v3214 = vadd.f32 %v3213, %v2327
        %v3215 = vadd.f32 %v3214, %v2333
        %v3216 = vadd.f32 %v3215, %v2339
        %v3217 = vadd.f32 %v3216, %v2345
        %v3218 = vadd.f32 %v3217, %v2351
        %v3219 = vadd.f32 %v3218, %v2357
        %v3220 = vadd.f32 %v3219, %v2363
        %v3221 = vadd.f32 %v3220, %v2369
        %v3222 = vrot.slane %v3221, 4
        %v3223 = vadd.f32 %v3221, %v3222
        %v3224 = vrot.slane %v3223, 2
        %v3225 = vadd.f32 %v3223, %v3224
        %v3226 = vrot.slane %v3225, 1
        %v3227 = vadd.f32 %v3225, %v3226
        %v3228 = vadd.f32 %v2370, %v2376
        %v3229 = vadd.f32 %v3228, %v2382
        %v3230 = vadd.f32 %v3229, %v2388
        %v3231 = vadd.f32 %v3230, %v2394
        %v3232 = vadd.f32 %v3231, %v2400
        %v3233 = vadd.f32 %v3232, %v2406
        %v3234 = vadd.f32 %v3233, %v2412
        %v3235 = vadd.f32 %v3234, %v2418
        %v3236 = vadd.f32 %v3235, %v2424
        %v3237 = vadd.f32 %v3236, %v2430
        %v3238 = vadd.f32 %v3237, %v2436
        %v3239 = vadd.f32 %v3238, %v2442
        %v3240 = vadd.f32 %v3239, %v2448
        %v3241 = vadd.f32 %v3240, %v2454
        %v3242 = vadd.f32 %v3241, %v2460
        %v3243 = vrot.slane %v3242, 4
        %v3244 = vadd.f32 %v3242, %v3243
        %v3245 = vrot.slane %v3244, 2
        %v3246 = vadd.f32 %v3244, %v3245
        %v3247 = vrot.slane %v3246, 1
        %v3248 = vadd.f32 %v3246, %v3247
        %v3249 = vadd.f32 %v2371, %v2377
        %v3250 = vadd.f32 %v3249, %v2383
        %v3251 = vadd.f32 %v3250, %v2389
        %v3252 = vadd.f32 %v3251, %v2395
        %v3253 = vadd.f32 %v3252, %v2401
        %v3254 = vadd.f32 %v3253, %v2407
        %v3255 = vadd.f32 %v3254, %v2413
        %v3256 = vadd.f32 %v3255, %v2419
        %v3257 = vadd.f32 %v3256, %v2425
        %v3258 = vadd.f32 %v3257, %v2431
        %v3259 = vadd.f32 %v3258, %v2437
        %v3260 = vadd.f32 %v3259, %v2443
        %v3261 = vadd.f32 %v3260, %v2449
        %v3262 = vadd.f32 %v3261, %v2455
        %v3263 = vadd.f32 %v3262, %v2461
        %v3264 = vrot.slane %v3263, 4
        %v3265 = vadd.f32 %v3263, %v3264
        %v3266 = vrot.slane %v3265, 2
        %v3267 = vadd.f32 %v3265, %v3266
        %v3268 = vrot.slane %v3267, 1
        %v3269 = vadd.f32 %v3267, %v3268
        %v3270 = vadd.f32 %v2372, %v2378
        %v3271 = vadd.f32 %v3270, %v2384
        %v3272 = vadd.f32 %v3271, %v2390
        %v3273 = vadd.f32 %v3272, %v2396
        %v3274 = vadd.f32 %v3273, %v2402
        %v3275 = vadd.f32 %v3274, %v2408
        %v3276 = vadd.f32 %v3275, %v2414
        %v3277 = vadd.f32 %v3276, %v2420
        %v3278 = vadd.f32 %v3277, %v2426
        %v3279 = vadd.f32 %v3278, %v2432
        %v3280 = vadd.f32 %v3279, %v2438
        %v3281 = vadd.f32 %v3280, %v2444
        %v3282 = vadd.f32 %v3281, %v2450
        %v3283 = vadd.f32 %v3282, %v2456
        %v3284 = vadd.f32 %v3283, %v2462
        %v3285 = vrot.slane %v3284, 4
        %v3286 = vadd.f32 %v3284, %v3285
        %v3287 = vrot.slane %v3286, 2
        %v3288 = vadd.f32 %v3286, %v3287
        %v3289 = vrot.slane %v3288, 1
        %v3290 = vadd.f32 %v3288, %v3289
        %v3291 = vadd.f32 %v2373, %v2379
        %v3292 = vadd.f32 %v3291, %v2385
        %v3293 = vadd.f32 %v3292, %v2391
        %v3294 = vadd.f32 %v3293, %v2397
        %v3295 = vadd.f32 %v3294, %v2403
        %v3296 = vadd.f32 %v3295, %v2409
        %v3297 = vadd.f32 %v3296, %v2415
        %v3298 = vadd.f32 %v3297, %v2421
        %v3299 = vadd.f32 %v3298, %v2427
        %v3300 = vadd.f32 %v3299, %v2433
        %v3301 = vadd.f32 %v3300, %v2439
        %v3302 = vadd.f32 %v3301, %v2445
        %v3303 = vadd.f32 %v3302, %v2451
        %v3304 = vadd.f32 %v3303, %v2457
        %v3305 = vadd.f32 %v3304, %v2463
        %v3306 = vrot.slane %v3305, 4
        %v3307 = vadd.f32 %v3305, %v3306
        %v3308 = vrot.slane %v3307, 2
        %v3309 = vadd.f32 %v3307, %v3308
        %v3310 = vrot.slane %v3309, 1
        %v3311 = vadd.f32 %v3309, %v3310
        %v3312 = vadd.f32 %v2374, %v2380
        %v3313 = vadd.f32 %v3312, %v2386
        %v3314 = vadd.f32 %v3313, %v2392
        %v3315 = vadd.f32 %v3314, %v2398
        %v3316 = vadd.f32 %v3315, %v2404
        %v3317 = vadd.f32 %v3316, %v2410
        %v3318 = vadd.f32 %v3317, %v2416
        %v3319 = vadd.f32 %v3318, %v2422
        %v3320 = vadd.f32 %v3319, %v2428
        %v3321 = vadd.f32 %v3320, %v2434
        %v3322 = vadd.f32 %v3321, %v2440
        %v3323 = vadd.f32 %v3322, %v2446
        %v3324 = vadd.f32 %v3323, %v2452
        %v3325 = vadd.f32 %v3324, %v2458
        %v3326 = vadd.f32 %v3325, %v2464
        %v3327 = vrot.slane %v3326, 4
        %v3328 = vadd.f32 %v3326, %v3327
        %v3329 = vrot.slane %v3328, 2
        %v3330 = vadd.f32 %v3328, %v3329
        %v3331 = vrot.slane %v3330, 1
        %v3332 = vadd.f32 %v3330, %v3331
        %v3333 = vadd.f32 %v2375, %v2381
        %v3334 = vadd.f32 %v3333, %v2387
        %v3335 = vadd.f32 %v3334, %v2393
        %v3336 = vadd.f32 %v3335, %v2399
        %v3337 = vadd.f32 %v3336, %v2405
        %v3338 = vadd.f32 %v3337, %v2411
        %v3339 = vadd.f32 %v3338, %v2417
        %v3340 = vadd.f32 %v3339, %v2423
        %v3341 = vadd.f32 %v3340, %v2429
        %v3342 = vadd.f32 %v3341, %v2435
        %v3343 = vadd.f32 %v3342, %v2441
        %v3344 = vadd.f32 %v3343, %v2447
        %v3345 = vadd.f32 %v3344, %v2453
        %v3346 = vadd.f32 %v3345, %v2459
        %v3347 = vadd.f32 %v3346, %v2465
        %v3348 = vrot.slane %v3347, 4
        %v3349 = vadd.f32 %v3347, %v3348
        %v3350 = vrot.slane %v3349, 2
        %v3351 = vadd.f32 %v3349, %v3350
        %v3352 = vrot.slane %v3351, 1
        %v3353 = vadd.f32 %v3351, %v3352
        %v3354 = vadd.f32 %v2466, %v2472
        %v3355 = vadd.f32 %v3354, %v2478
        %v3356 = vadd.f32 %v3355, %v2484
        %v3357 = vadd.f32 %v3356, %v2490
        %v3358 = vadd.f32 %v3357, %v2496
        %v3359 = vadd.f32 %v3358, %v2502
        %v3360 = vadd.f32 %v3359, %v2508
        %v3361 = vadd.f32 %v3360, %v2514
        %v3362 = vadd.f32 %v3361, %v2520
        %v3363 = vadd.f32 %v3362, %v2526
        %v3364 = vadd.f32 %v3363, %v2532
        %v3365 = vadd.f32 %v3364, %v2538
        %v3366 = vadd.f32 %v3365, %v2544
        %v3367 = vadd.f32 %v3366, %v2550
        %v3368 = vadd.f32 %v3367, %v2556
        %v3369 = vrot.slane %v3368, 4
        %v3370 = vadd.f32 %v3368, %v3369
        %v3371 = vrot.slane %v3370, 2
        %v3372 = vadd.f32 %v3370, %v3371
        %v3373 = vrot.slane %v3372, 1
        %v3374 = vadd.f32 %v3372, %v3373
        %v3375 = vadd.f32 %v2467, %v2473
        %v3376 = vadd.f32 %v3375, %v2479
        %v3377 = vadd.f32 %v3376, %v2485
        %v3378 = vadd.f32 %v3377, %v2491
        %v3379 = vadd.f32 %v3378, %v2497
        %v3380 = vadd.f32 %v3379, %v2503
        %v3381 = vadd.f32 %v3380, %v2509
        %v3382 = vadd.f32 %v3381, %v2515
        %v3383 = vadd.f32 %v3382, %v2521
        %v3384 = vadd.f32 %v3383, %v2527
        %v3385 = vadd.f32 %v3384, %v2533
        %v3386 = vadd.f32 %v3385, %v2539
        %v3387 = vadd.f32 %v3386, %v2545
        %v3388 = vadd.f32 %v3387, %v2551
        %v3389 = vadd.f32 %v3388, %v2557
        %v3390 = vrot.slane %v3389, 4
        %v3391 = vadd.f32 %v3389, %v3390
        %v3392 = vrot.slane %v3391, 2
        %v3393 = vadd.f32 %v3391, %v3392
        %v3394 = vrot.slane %v3393, 1
        %v3395 = vadd.f32 %v3393, %v3394
        %v3396 = vadd.f32 %v2468, %v2474
        %v3397 = vadd.f32 %v3396, %v2480
        %v3398 = vadd.f32 %v3397, %v2486
        %v3399 = vadd.f32 %v3398, %v2492
        %v3400 = vadd.f32 %v3399, %v2498
        %v3401 = vadd.f32 %v3400, %v2504
        %v3402 = vadd.f32 %v3401, %v2510
        %v3403 = vadd.f32 %v3402, %v2516
        %v3404 = vadd.f32 %v3403, %v2522
        %v3405 = vadd.f32 %v3404, %v2528
        %v3406 = vadd.f32 %v3405, %v2534
        %v3407 = vadd.f32 %v3406, %v2540
        %v3408 = vadd.f32 %v3407, %v2546
        %v3409 = vadd.f32 %v3408, %v2552
        %v3410 = vadd.f32 %v3409, %v2558
        %v3411 = vrot.slane %v3410, 4
        %v3412 = vadd.f32 %v3410, %v3411
        %v3413 = vrot.slane %v3412, 2
        %v3414 = vadd.f32 %v3412, %v3413
        %v3415 = vrot.slane %v3414, 1
        %v3416 = vadd.f32 %v3414, %v3415
        %v3417 = vadd.f32 %v2469, %v2475
        %v3418 = vadd.f32 %v3417, %v2481
        %v3419 = vadd.f32 %v3418, %v2487
        %v3420 = vadd.f32 %v3419, %v2493
        %v3421 = vadd.f32 %v3420, %v2499
        %v3422 = vadd.f32 %v3421, %v2505
        %v3423 = vadd.f32 %v3422, %v2511
        %v3424 = vadd.f32 %v3423, %v2517
        %v3425 = vadd.f32 %v3424, %v2523
        %v3426 = vadd.f32 %v3425, %v2529
        %v3427 = vadd.f32 %v3426, %v2535
        %v3428 = vadd.f32 %v3427, %v2541
        %v3429 = vadd.f32 %v3428, %v2547
        %v3430 = vadd.f32 %v3429, %v2553
        %v3431 = vadd.f32 %v3430, %v2559
        %v3432 = vrot.slane %v3431, 4
        %v3433 = vadd.f32 %v3431, %v3432
        %v3434 = vrot.slane %v3433, 2
        %v3435 = vadd.f32 %v3433, %v3434
        %v3436 = vrot.slane %v3435, 1
        %v3437 = vadd.f32 %v3435, %v3436
        %v3438 = vadd.f32 %v2470, %v2476
        %v3439 = vadd.f32 %v3438, %v2482
        %v3440 = vadd.f32 %v3439, %v2488
        %v3441 = vadd.f32 %v3440, %v2494
        %v3442 = vadd.f32 %v3441, %v2500
        %v3443 = vadd.f32 %v3442, %v2506
        %v3444 = vadd.f32 %v3443, %v2512
        %v3445 = vadd.f32 %v3444, %v2518
        %v3446 = vadd.f32 %v3445, %v2524
        %v3447 = vadd.f32 %v3446, %v2530
        %v3448 = vadd.f32 %v3447, %v2536
        %v3449 = vadd.f32 %v3448, %v2542
        %v3450 = vadd.f32 %v3449, %v2548
        %v3451 = vadd.f32 %v3450, %v2554
        %v3452 = vadd.f32 %v3451, %v2560
        %v3453 = vrot.slane %v3452, 4
        %v3454 = vadd.f32 %v3452, %v3453
        %v3455 = vrot.slane %v3454, 2
        %v3456 = vadd.f32 %v3454, %v3455
        %v3457 = vrot.slane %v3456, 1
        %v3458 = vadd.f32 %v3456, %v3457
        %v3459 = vadd.f32 %v2471, %v2477
        %v3460 = vadd.f32 %v3459, %v2483
        %v3461 = vadd.f32 %v3460, %v2489
        %v3462 = vadd.f32 %v3461, %v2495
        %v3463 = vadd.f32 %v3462, %v2501
        %v3464 = vadd.f32 %v3463, %v2507
        %v3465 = vadd.f32 %v3464, %v2513
        %v3466 = vadd.f32 %v3465, %v2519
        %v3467 = vadd.f32 %v3466, %v2525
        %v3468 = vadd.f32 %v3467, %v2531
        %v3469 = vadd.f32 %v3468, %v2537
        %v3470 = vadd.f32 %v3469, %v2543
        %v3471 = vadd.f32 %v3470, %v2549
        %v3472 = vadd.f32 %v3471, %v2555
        %v3473 = vadd.f32 %v3472, %v2561
        %v3474 = vrot.slane %v3473, 4
        %v3475 = vadd.f32 %v3473, %v3474
        %v3476 = vrot.slane %v3475, 2
        %v3477 = vadd.f32 %v3475, %v3476
        %v3478 = vrot.slane %v3477, 1
        %v3479 = vadd.f32 %v3477, %v3478
        %v3480 = vadd.f32 %v2562, %v2568
        %v3481 = vadd.f32 %v3480, %v2574
        %v3482 = vadd.f32 %v3481, %v2580
        %v3483 = vadd.f32 %v3482, %v2586
        %v3484 = vadd.f32 %v3483, %v2592
        %v3485 = vadd.f32 %v3484, %v2598
        %v3486 = vadd.f32 %v3485, %v2604
        %v3487 = vadd.f32 %v3486, %v2610
        %v3488 = vadd.f32 %v3487, %v2616
        %v3489 = vadd.f32 %v3488, %v2622
        %v3490 = vadd.f32 %v3489, %v2628
        %v3491 = vadd.f32 %v3490, %v2634
        %v3492 = vadd.f32 %v3491, %v2640
        %v3493 = vadd.f32 %v3492, %v2646
        %v3494 = vadd.f32 %v3493, %v2652
        %v3495 = vrot.slane %v3494, 4
        %v3496 = vadd.f32 %v3494, %v3495
        %v3497 = vrot.slane %v3496, 2
        %v3498 = vadd.f32 %v3496, %v3497
        %v3499 = vrot.slane %v3498, 1
        %v3500 = vadd.f32 %v3498, %v3499
        %v3501 = vadd.f32 %v2563, %v2569
        %v3502 = vadd.f32 %v3501, %v2575
        %v3503 = vadd.f32 %v3502, %v2581
        %v3504 = vadd.f32 %v3503, %v2587
        %v3505 = vadd.f32 %v3504, %v2593
        %v3506 = vadd.f32 %v3505, %v2599
        %v3507 = vadd.f32 %v3506, %v2605
        %v3508 = vadd.f32 %v3507, %v2611
        %v3509 = vadd.f32 %v3508, %v2617
        %v3510 = vadd.f32 %v3509, %v2623
        %v3511 = vadd.f32 %v3510, %v2629
        %v3512 = vadd.f32 %v3511, %v2635
        %v3513 = vadd.f32 %v3512, %v2641
        %v3514 = vadd.f32 %v3513, %v2647
        %v3515 = vadd.f32 %v3514, %v2653
        %v3516 = vrot.slane %v3515, 4
        %v3517 = vadd.f32 %v3515, %v3516
        %v3518 = vrot.slane %v3517, 2
        %v3519 = vadd.f32 %v3517, %v3518
        %v3520 = vrot.slane %v3519, 1
        %v3521 = vadd.f32 %v3519, %v3520
        %v3522 = vadd.f32 %v2564, %v2570
        %v3523 = vadd.f32 %v3522, %v2576
        %v3524 = vadd.f32 %v3523, %v2582
        %v3525 = vadd.f32 %v3524, %v2588
        %v3526 = vadd.f32 %v3525, %v2594
        %v3527 = vadd.f32 %v3526, %v2600
        %v3528 = vadd.f32 %v3527, %v2606
        %v3529 = vadd.f32 %v3528, %v2612
        %v3530 = vadd.f32 %v3529, %v2618
        %v3531 = vadd.f32 %v3530, %v2624
        %v3532 = vadd.f32 %v3531, %v2630
        %v3533 = vadd.f32 %v3532, %v2636
        %v3534 = vadd.f32 %v3533, %v2642
        %v3535 = vadd.f32 %v3534, %v2648
        %v3536 = vadd.f32 %v3535, %v2654
        %v3537 = vrot.slane %v3536, 4
        %v3538 = vadd.f32 %v3536, %v3537
        %v3539 = vrot.slane %v3538, 2
        %v3540 = vadd.f32 %v3538, %v3539
        %v3541 = vrot.slane %v3540, 1
        %v3542 = vadd.f32 %v3540, %v3541
        %v3543 = vadd.f32 %v2565, %v2571
        %v3544 = vadd.f32 %v3543, %v2577
        %v3545 = vadd.f32 %v3544, %v2583
        %v3546 = vadd.f32 %v3545, %v2589
        %v3547 = vadd.f32 %v3546, %v2595
        %v3548 = vadd.f32 %v3547, %v2601
        %v3549 = vadd.f32 %v3548, %v2607
        %v3550 = vadd.f32 %v3549, %v2613
        %v3551 = vadd.f32 %v3550, %v2619
        %v3552 = vadd.f32 %v3551, %v2625
        %v3553 = vadd.f32 %v3552, %v2631
        %v3554 = vadd.f32 %v3553, %v2637
        %v3555 = vadd.f32 %v3554, %v2643
        %v3556 = vadd.f32 %v3555, %v2649
        %v3557 = vadd.f32 %v3556, %v2655
        %v3558 = vrot.slane %v3557, 4
        %v3559 = vadd.f32 %v3557, %v3558
        %v3560 = vrot.slane %v3559, 2
        %v3561 = vadd.f32 %v3559, %v3560
        %v3562 = vrot.slane %v3561, 1
        %v3563 = vadd.f32 %v3561, %v3562
        %v3564 = vadd.f32 %v2566, %v2572
        %v3565 = vadd.f32 %v3564, %v2578
        %v3566 = vadd.f32 %v3565, %v2584
        %v3567 = vadd.f32 %v3566, %v2590
        %v3568 = vadd.f32 %v3567, %v2596
        %v3569 = vadd.f32 %v3568, %v2602
        %v3570 = vadd.f32 %v3569, %v2608
        %v3571 = vadd.f32 %v3570, %v2614
        %v3572 = vadd.f32 %v3571, %v2620
        %v3573 = vadd.f32 %v3572, %v2626
        %v3574 = vadd.f32 %v3573, %v2632
        %v3575 = vadd.f32 %v3574, %v2638
        %v3576 = vadd.f32 %v3575, %v2644
        %v3577 = vadd.f32 %v3576, %v2650
        %v3578 = vadd.f32 %v3577, %v2656
        %v3579 = vrot.slane %v3578, 4
        %v3580 = vadd.f32 %v3578, %v3579
        %v3581 = vrot.slane %v3580, 2
        %v3582 = vadd.f32 %v3580, %v3581
        %v3583 = vrot.slane %v3582, 1
        %v3584 = vadd.f32 %v3582, %v3583
        %v3585 = vadd.f32 %v2567, %v2573
        %v3586 = vadd.f32 %v3585, %v2579
        %v3587 = vadd.f32 %v3586, %v2585
        %v3588 = vadd.f32 %v3587, %v2591
        %v3589 = vadd.f32 %v3588, %v2597
        %v3590 = vadd.f32 %v3589, %v2603
        %v3591 = vadd.f32 %v3590, %v2609
        %v3592 = vadd.f32 %v3591, %v2615
        %v3593 = vadd.f32 %v3592, %v2621
        %v3594 = vadd.f32 %v3593, %v2627
        %v3595 = vadd.f32 %v3594, %v2633
        %v3596 = vadd.f32 %v3595, %v2639
        %v3597 = vadd.f32 %v3596, %v2645
        %v3598 = vadd.f32 %v3597, %v2651
        %v3599 = vadd.f32 %v3598, %v2657
        %v3600 = vrot.slane %v3599, 4
        %v3601 = vadd.f32 %v3599, %v3600
        %v3602 = vrot.slane %v3601, 2
        %v3603 = vadd.f32 %v3601, %v3602
        %v3604 = vrot.slane %v3603, 1
        %v3605 = vadd.f32 %v3603, %v3604
        %v3606 = vadd.f32 %v2658, %v2664
        %v3607 = vadd.f32 %v3606, %v2670
        %v3608 = vadd.f32 %v3607, %v2676
        %v3609 = vadd.f32 %v3608, %v2682
        %v3610 = vadd.f32 %v3609, %v2688
        %v3611 = vadd.f32 %v3610, %v2694
        %v3612 = vadd.f32 %v3611, %v2700
        %v3613 = vadd.f32 %v3612, %v2706
        %v3614 = vadd.f32 %v3613, %v2712
        %v3615 = vadd.f32 %v3614, %v2718
        %v3616 = vadd.f32 %v3615, %v2724
        %v3617 = vadd.f32 %v3616, %v2730
        %v3618 = vadd.f32 %v3617, %v2736
        %v3619 = vadd.f32 %v3618, %v2742
        %v3620 = vadd.f32 %v3619, %v2748
        %v3621 = vrot.slane %v3620, 4
        %v3622 = vadd.f32 %v3620, %v3621
        %v3623 = vrot.slane %v3622, 2
        %v3624 = vadd.f32 %v3622, %v3623
        %v3625 = vrot.slane %v3624, 1
        %v3626 = vadd.f32 %v3624, %v3625
        %v3627 = vadd.f32 %v2659, %v2665
        %v3628 = vadd.f32 %v3627, %v2671
        %v3629 = vadd.f32 %v3628, %v2677
        %v3630 = vadd.f32 %v3629, %v2683
        %v3631 = vadd.f32 %v3630, %v2689
        %v3632 = vadd.f32 %v3631, %v2695
        %v3633 = vadd.f32 %v3632, %v2701
        %v3634 = vadd.f32 %v3633, %v2707
        %v3635 = vadd.f32 %v3634, %v2713
        %v3636 = vadd.f32 %v3635, %v2719
        %v3637 = vadd.f32 %v3636, %v2725
        %v3638 = vadd.f32 %v3637, %v2731
        %v3639 = vadd.f32 %v3638, %v2737
        %v3640 = vadd.f32 %v3639, %v2743
        %v3641 = vadd.f32 %v3640, %v2749
        %v3642 = vrot.slane %v3641, 4
        %v3643 = vadd.f32 %v3641, %v3642
        %v3644 = vrot.slane %v3643, 2
        %v3645 = vadd.f32 %v3643, %v3644
        %v3646 = vrot.slane %v3645, 1
        %v3647 = vadd.f32 %v3645, %v3646
        %v3648 = vadd.f32 %v2660, %v2666
        %v3649 = vadd.f32 %v3648, %v2672
        %v3650 = vadd.f32 %v3649, %v2678
        %v3651 = vadd.f32 %v3650, %v2684
        %v3652 = vadd.f32 %v3651, %v2690
        %v3653 = vadd.f32 %v3652, %v2696
        %v3654 = vadd.f32 %v3653, %v2702
        %v3655 = vadd.f32 %v3654, %v2708
        %v3656 = vadd.f32 %v3655, %v2714
        %v3657 = vadd.f32 %v3656, %v2720
        %v3658 = vadd.f32 %v3657, %v2726
        %v3659 = vadd.f32 %v3658, %v2732
        %v3660 = vadd.f32 %v3659, %v2738
        %v3661 = vadd.f32 %v3660, %v2744
        %v3662 = vadd.f32 %v3661, %v2750
        %v3663 = vrot.slane %v3662, 4
        %v3664 = vadd.f32 %v3662, %v3663
        %v3665 = vrot.slane %v3664, 2
        %v3666 = vadd.f32 %v3664, %v3665
        %v3667 = vrot.slane %v3666, 1
        %v3668 = vadd.f32 %v3666, %v3667
        %v3669 = vadd.f32 %v2661, %v2667
        %v3670 = vadd.f32 %v3669, %v2673
        %v3671 = vadd.f32 %v3670, %v2679
        %v3672 = vadd.f32 %v3671, %v2685
        %v3673 = vadd.f32 %v3672, %v2691
        %v3674 = vadd.f32 %v3673, %v2697
        %v3675 = vadd.f32 %v3674, %v2703
        %v3676 = vadd.f32 %v3675, %v2709
        %v3677 = vadd.f32 %v3676, %v2715
        %v3678 = vadd.f32 %v3677, %v2721
        %v3679 = vadd.f32 %v3678, %v2727
        %v3680 = vadd.f32 %v3679, %v2733
        %v3681 = vadd.f32 %v3680, %v2739
        %v3682 = vadd.f32 %v3681, %v2745
        %v3683 = vadd.f32 %v3682, %v2751
        %v3684 = vrot.slane %v3683, 4
        %v3685 = vadd.f32 %v3683, %v3684
        %v3686 = vrot.slane %v3685, 2
        %v3687 = vadd.f32 %v3685, %v3686
        %v3688 = vrot.slane %v3687, 1
        %v3689 = vadd.f32 %v3687, %v3688
        %v3690 = vadd.f32 %v2662, %v2668
        %v3691 = vadd.f32 %v3690, %v2674
        %v3692 = vadd.f32 %v3691, %v2680
        %v3693 = vadd.f32 %v3692, %v2686
        %v3694 = vadd.f32 %v3693, %v2692
        %v3695 = vadd.f32 %v3694, %v2698
        %v3696 = vadd.f32 %v3695, %v2704
        %v3697 = vadd.f32 %v3696, %v2710
        %v3698 = vadd.f32 %v3697, %v2716
        %v3699 = vadd.f32 %v3698, %v2722
        %v3700 = vadd.f32 %v3699, %v2728
        %v3701 = vadd.f32 %v3700, %v2734
        %v3702 = vadd.f32 %v3701, %v2740
        %v3703 = vadd.f32 %v3702, %v2746
        %v3704 = vadd.f32 %v3703, %v2752
        %v3705 = vrot.slane %v3704, 4
        %v3706 = vadd.f32 %v3704, %v3705
        %v3707 = vrot.slane %v3706, 2
        %v3708 = vadd.f32 %v3706, %v3707
        %v3709 = vrot.slane %v3708, 1
        %v3710 = vadd.f32 %v3708, %v3709
        %v3711 = vadd.f32 %v2663, %v2669
        %v3712 = vadd.f32 %v3711, %v2675
        %v3713 = vadd.f32 %v3712, %v2681
        %v3714 = vadd.f32 %v3713, %v2687
        %v3715 = vadd.f32 %v3714, %v2693
        %v3716 = vadd.f32 %v3715, %v2699
        %v3717 = vadd.f32 %v3716, %v2705
        %v3718 = vadd.f32 %v3717, %v2711
        %v3719 = vadd.f32 %v3718, %v2717
        %v3720 = vadd.f32 %v3719, %v2723
        %v3721 = vadd.f32 %v3720, %v2729
        %v3722 = vadd.f32 %v3721, %v2735
        %v3723 = vadd.f32 %v3722, %v2741
        %v3724 = vadd.f32 %v3723, %v2747
        %v3725 = vadd.f32 %v3724, %v2753
        %v3726 = vrot.slane %v3725, 4
        %v3727 = vadd.f32 %v3725, %v3726
        %v3728 = vrot.slane %v3727, 2
        %v3729 = vadd.f32 %v3727, %v3728
        %v3730 = vrot.slane %v3729, 1
        %v3731 = vadd.f32 %v3729, %v3730
        %v3732 = vadd.f32 %v2754, %v2760
        %v3733 = vadd.f32 %v3732, %v2766
        %v3734 = vadd.f32 %v3733, %v2772
        %v3735 = vadd.f32 %v3734, %v2778
        %v3736 = vadd.f32 %v3735, %v2784
        %v3737 = vadd.f32 %v3736, %v2790
        %v3738 = vadd.f32 %v3737, %v2796
        %v3739 = vadd.f32 %v3738, %v2802
        %v3740 = vadd.f32 %v3739, %v2808
        %v3741 = vadd.f32 %v3740, %v2814
        %v3742 = vadd.f32 %v3741, %v2820
        %v3743 = vadd.f32 %v3742, %v2826
        %v3744 = vadd.f32 %v3743, %v2832
        %v3745 = vadd.f32 %v3744, %v2838
        %v3746 = vadd.f32 %v3745, %v2844
        %v3747 = vrot.slane %v3746, 4
        %v3748 = vadd.f32 %v3746, %v3747
        %v3749 = vrot.slane %v3748, 2
        %v3750 = vadd.f32 %v3748, %v3749
        %v3751 = vrot.slane %v3750, 1
        %v3752 = vadd.f32 %v3750, %v3751
        %v3753 = vadd.f32 %v2755, %v2761
        %v3754 = vadd.f32 %v3753, %v2767
        %v3755 = vadd.f32 %v3754, %v2773
        %v3756 = vadd.f32 %v3755, %v2779
        %v3757 = vadd.f32 %v3756, %v2785
        %v3758 = vadd.f32 %v3757, %v2791
        %v3759 = vadd.f32 %v3758, %v2797
        %v3760 = vadd.f32 %v3759, %v2803
        %v3761 = vadd.f32 %v3760, %v2809
        %v3762 = vadd.f32 %v3761, %v2815
        %v3763 = vadd.f32 %v3762, %v2821
        %v3764 = vadd.f32 %v3763, %v2827
        %v3765 = vadd.f32 %v3764, %v2833
        %v3766 = vadd.f32 %v3765, %v2839
        %v3767 = vadd.f32 %v3766, %v2845
        %v3768 = vrot.slane %v3767, 4
        %v3769 = vadd.f32 %v3767, %v3768
        %v3770 = vrot.slane %v3769, 2
        %v3771 = vadd.f32 %v3769, %v3770
        %v3772 = vrot.slane %v3771, 1
        %v3773 = vadd.f32 %v3771, %v3772
        %v3774 = vadd.f32 %v2756, %v2762
        %v3775 = vadd.f32 %v3774, %v2768
        %v3776 = vadd.f32 %v3775, %v2774
        %v3777 = vadd.f32 %v3776, %v2780
        %v3778 = vadd.f32 %v3777, %v2786
        %v3779 = vadd.f32 %v3778, %v2792
        %v3780 = vadd.f32 %v3779, %v2798
        %v3781 = vadd.f32 %v3780, %v2804
        %v3782 = vadd.f32 %v3781, %v2810
        %v3783 = vadd.f32 %v3782, %v2816
        %v3784 = vadd.f32 %v3783, %v2822
        %v3785 = vadd.f32 %v3784, %v2828
        %v3786 = vadd.f32 %v3785, %v2834
        %v3787 = vadd.f32 %v3786, %v2840
        %v3788 = vadd.f32 %v3787, %v2846
        %v3789 = vrot.slane %v3788, 4
        %v3790 = vadd.f32 %v3788, %v3789
        %v3791 = vrot.slane %v3790, 2
        %v3792 = vadd.f32 %v3790, %v3791
        %v3793 = vrot.slane %v3792, 1
        %v3794 = vadd.f32 %v3792, %v3793
        %v3795 = vadd.f32 %v2757, %v2763
        %v3796 = vadd.f32 %v3795, %v2769
        %v3797 = vadd.f32 %v3796, %v2775
        %v3798 = vadd.f32 %v3797, %v2781
        %v3799 = vadd.f32 %v3798, %v2787
        %v3800 = vadd.f32 %v3799, %v2793
        %v3801 = vadd.f32 %v3800, %v2799
        %v3802 = vadd.f32 %v3801, %v2805
        %v3803 = vadd.f32 %v3802, %v2811
        %v3804 = vadd.f32 %v3803, %v2817
        %v3805 = vadd.f32 %v3804, %v2823
        %v3806 = vadd.f32 %v3805, %v2829
        %v3807 = vadd.f32 %v3806, %v2835
        %v3808 = vadd.f32 %v3807, %v2841
        %v3809 = vadd.f32 %v3808, %v2847
        %v3810 = vrot.slane %v3809, 4
        %v3811 = vadd.f32 %v3809, %v3810
        %v3812 = vrot.slane %v3811, 2
        %v3813 = vadd.f32 %v3811, %v3812
        %v3814 = vrot.slane %v3813, 1
        %v3815 = vadd.f32 %v3813, %v3814
        %v3816 = vadd.f32 %v2758, %v2764
        %v3817 = vadd.f32 %v3816, %v2770
        %v3818 = vadd.f32 %v3817, %v2776
        %v3819 = vadd.f32 %v3818, %v2782
        %v3820 = vadd.f32 %v3819, %v2788
        %v3821 = vadd.f32 %v3820, %v2794
        %v3822 = vadd.f32 %v3821, %v2800
        %v3823 = vadd.f32 %v3822, %v2806
        %v3824 = vadd.f32 %v3823, %v2812
        %v3825 = vadd.f32 %v3824, %v2818
        %v3826 = vadd.f32 %v3825, %v2824
        %v3827 = vadd.f32 %v3826, %v2830
        %v3828 = vadd.f32 %v3827, %v2836
        %v3829 = vadd.f32 %v3828, %v2842
        %v3830 = vadd.f32 %v3829, %v2848
        %v3831 = vrot.slane %v3830, 4
        %v3832 = vadd.f32 %v3830, %v3831
        %v3833 = vrot.slane %v3832, 2
        %v3834 = vadd.f32 %v3832, %v3833
        %v3835 = vrot.slane %v3834, 1
        %v3836 = vadd.f32 %v3834, %v3835
        %v3837 = vadd.f32 %v2759, %v2765
        %v3838 = vadd.f32 %v3837, %v2771
        %v3839 = vadd.f32 %v3838, %v2777
        %v3840 = vadd.f32 %v3839, %v2783
        %v3841 = vadd.f32 %v3840, %v2789
        %v3842 = vadd.f32 %v3841, %v2795
        %v3843 = vadd.f32 %v3842, %v2801
        %v3844 = vadd.f32 %v3843, %v2807
        %v3845 = vadd.f32 %v3844, %v2813
        %v3846 = vadd.f32 %v3845, %v2819
        %v3847 = vadd.f32 %v3846, %v2825
        %v3848 = vadd.f32 %v3847, %v2831
        %v3849 = vadd.f32 %v3848, %v2837
        %v3850 = vadd.f32 %v3849, %v2843
        %v3851 = vadd.f32 %v3850, %v2849
        %v3852 = vrot.slane %v3851, 4
        %v3853 = vadd.f32 %v3851, %v3852
        %v3854 = vrot.slane %v3853, 2
        %v3855 = vadd.f32 %v3853, %v3854
        %v3856 = vrot.slane %v3855, 1
        %v3857 = vadd.f32 %v3855, %v3856
        %vm3906 = vcmask 1041409
        %v3907 = vsel %vm3906, %v2996, %v2870
        %vm3908 = vcmask 1042434
        %v3909 = vsel %vm3908, %v3122, %v3907
        %vm3910 = vcmask 1043459
        %v3911 = vsel %vm3910, %v3248, %v3909
        %vm3912 = vcmask 1044484
        %v3913 = vsel %vm3912, %v3374, %v3911
        %vm3914 = vcmask 1045509
        %v3915 = vsel %vm3914, %v3500, %v3913
        %vm3916 = vcmask 1046534
        %v3917 = vsel %vm3916, %v3626, %v3915
        %vm3918 = vcmask 1047559
        %v3919 = vsel %vm3918, %v3752, %v3917
        %v3920 = vsel %vm3906, %v3017, %v2891
        %v3921 = vsel %vm3908, %v3143, %v3920
        %v3922 = vsel %vm3910, %v3269, %v3921
        %v3923 = vsel %vm3912, %v3395, %v3922
        %v3924 = vsel %vm3914, %v3521, %v3923
        %v3925 = vsel %vm3916, %v3647, %v3924
        %v3926 = vsel %vm3918, %v3773, %v3925
        %v3927 = vsel %vm3906, %v3038, %v2912
        %v3928 = vsel %vm3908, %v3164, %v3927
        %v3929 = vsel %vm3910, %v3290, %v3928
        %v3930 = vsel %vm3912, %v3416, %v3929
        %v3931 = vsel %vm3914, %v3542, %v3930
        %v3932 = vsel %vm3916, %v3668, %v3931
        %v3933 = vsel %vm3918, %v3794, %v3932
        %v3934 = vsel %vm3906, %v3059, %v2933
        %v3935 = vsel %vm3908, %v3185, %v3934
        %v3936 = vsel %vm3910, %v3311, %v3935
        %v3937 = vsel %vm3912, %v3437, %v3936
        %v3938 = vsel %vm3914, %v3563, %v3937
        %v3939 = vsel %vm3916, %v3689, %v3938
        %v3940 = vsel %vm3918, %v3815, %v3939
        %v3941 = vsel %vm3906, %v3080, %v2954
        %v3942 = vsel %vm3908, %v3206, %v3941
        %v3943 = vsel %vm3910, %v3332, %v3942
        %v3944 = vsel %vm3912, %v3458, %v3943
        %v3945 = vsel %vm3914, %v3584, %v3944
        %v3946 = vsel %vm3916, %v3710, %v3945
        %v3947 = vsel %vm3918, %v3836, %v3946
        %v3948 = vsel %vm3906, %v3101, %v2975
        %v3949 = vsel %vm3908, %v3227, %v3948
        %v3950 = vsel %vm3910, %v3353, %v3949
        %v3951 = vsel %vm3912, %v3479, %v3950
        %v3952 = vsel %vm3914, %v3605, %v3951
        %v3953 = vsel %vm3916, %v3731, %v3952
        %v3954 = vsel %vm3918, %v3857, %v3953
        %v3961 = vadd.f32 %v1540, %v3919
        %v3962 = vadd.f32 %v1541, %v3926
        %v3963 = vadd.f32 %v1542, %v3933
        %v3964 = vadd.f32 %v1543, %v3940
        %v3965 = vadd.f32 %v1544, %v3947
        %v3966 = vadd.f32 %v1545, %v3954
        %3967 = vst [vmem:[#allocation2] sm:$0xff] %v3961
        %3968 = vst [vmem:[#allocation2 + $0x8] sm:$0xff] %v3962
        %3969 = vst [vmem:[#allocation2 + $0x10] sm:$0xff] %v3963
        %3970 = vst [vmem:[#allocation2 + $0x18] sm:$0xff] %v3964
        %3971 = vst [vmem:[#allocation2 + $0x20] sm:$0xff] %v3965
        %3972 = vst [vmem:[#allocation2 + $0x28] sm:$0xff] %v3966
        %v3973 = vld [vmem:[#allocation3] sm:$0xff]
        %3974 = vadd.xlane.f32.xlu0 %v387
        %v3975 = vpop.xlane.xlu0 %3974
        %v3976 = vadd.f32 %v3973, %v3975
        %3977 = vst [vmem:[#allocation3] sm:$0xff] %v3976
        %p3978 = scmp.eq.s32.totalorder %s26, 1
        // Predicated region
        $region73: #{tpu_custom_call.1} parent=43 // pred_check
          %p3979 = pneg %p3978
        $region74: #{tpu_custom_call.1} parent=43 // pred_check_branch
          %3981 = sbr.rel (%p3979) target = $region76
        $region75: #{tpu_custom_call.1} parent=43 // pred_region
          %v3982 = vld [vmem:[#allocation14] sm:$0xff]
          %v3983 = vld [vmem:[#allocation14 + $0x8] sm:$0xff]
          %v3984 = vld [vmem:[#allocation3] sm:$0xff]
          %v3985 = vmax.f32 %v3984, 1e-09
          %v3986 = vld [vmem:[#allocation2] sm:$0xff]
          %v3987 = vld [vmem:[#allocation2 + $0x8] sm:$0xff]
          %v3988 = vld [vmem:[#allocation2 + $0x10] sm:$0xff]
          %v3989 = vld [vmem:[#allocation2 + $0x18] sm:$0xff]
          %v3990 = vld [vmem:[#allocation2 + $0x20] sm:$0xff]
          %v3991 = vld [vmem:[#allocation2 + $0x28] sm:$0xff]
          %3993 = vset.pattern.permute.xlu0 0
          %3994 = vperm.xlu0 %3993, %v3985
          %v3995 = vpop.permute.xlu0 %3994
          %v3997 = vrcp.pop %v3995
          %v3998 = vmul.f32 %v3986, %v3997
          %v3999 = vmul.f32 %v3987, %v3997
          %v4000 = vmul.f32 %v3988, %v3997
          %v4001 = vmul.f32 %v3989, %v3997
          %v4002 = vmul.f32 %v3990, %v3997
          %v4003 = vmul.f32 %v3991, %v3997
          %v4004 = vld [vmem:[#allocation11] sm:$0xff]
          %v4005 = vld [vmem:[#allocation11 + $0x8] sm:$0xff]
          %v4006 = vld [vmem:[#allocation11 + $0x10] sm:$0xff]
          %v4007 = vld [vmem:[#allocation11 + $0x18] sm:$0xff]
          %v4008 = vld [vmem:[#allocation11 + $0x20] sm:$0xff]
          %v4009 = vld [vmem:[#allocation11 + $0x28] sm:$0xff]
          %v4010 = vld [vmem:[#allocation11 + $0x30] sm:$0xff]
          %v4011 = vld [vmem:[#allocation11 + $0x38] sm:$0xff]
          %v4012 = vld [vmem:[#allocation11 + $0x40] sm:$0xff]
          %v4013 = vld [vmem:[#allocation11 + $0x48] sm:$0xff]
          %v4014 = vld [vmem:[#allocation11 + $0x50] sm:$0xff]
          %v4015 = vld [vmem:[#allocation11 + $0x58] sm:$0xff]
          %v4016 = vld [vmem:[#allocation11 + $0x60] sm:$0xff]
          %v4017 = vld [vmem:[#allocation11 + $0x68] sm:$0xff]
          %v4018 = vld [vmem:[#allocation11 + $0x70] sm:$0xff]
          %v4019 = vld [vmem:[#allocation11 + $0x78] sm:$0xff]
          %v4020 = vld [vmem:[#allocation11 + $0x80] sm:$0xff]
          %v4021 = vld [vmem:[#allocation11 + $0x88] sm:$0xff]
          %v4022 = vld [vmem:[#allocation11 + $0x90] sm:$0xff]
          %v4023 = vld [vmem:[#allocation11 + $0x98] sm:$0xff]
          %v4024 = vld [vmem:[#allocation11 + $0xa0] sm:$0xff]
          %v4025 = vld [vmem:[#allocation11 + $0xa8] sm:$0xff]
          %v4026 = vld [vmem:[#allocation11 + $0xb0] sm:$0xff]
          %v4027 = vld [vmem:[#allocation11 + $0xb8] sm:$0xff]
          %v4028 = vld [vmem:[#allocation11 + $0xc0] sm:$0xff]
          %v4029 = vld [vmem:[#allocation11 + $0xc8] sm:$0xff]
          %v4030 = vld [vmem:[#allocation11 + $0xd0] sm:$0xff]
          %v4031 = vld [vmem:[#allocation11 + $0xd8] sm:$0xff]
          %v4032 = vld [vmem:[#allocation11 + $0xe0] sm:$0xff]
          %v4033 = vld [vmem:[#allocation11 + $0xe8] sm:$0xff]
          %v4034 = vld [vmem:[#allocation11 + $0xf0] sm:$0xff]
          %v4035 = vld [vmem:[#allocation11 + $0xf8] sm:$0xff]
          %v4036 = vld [vmem:[#allocation11 + $0x100] sm:$0xff]
          %v4037 = vld [vmem:[#allocation11 + $0x108] sm:$0xff]
          %v4038 = vld [vmem:[#allocation11 + $0x110] sm:$0xff]
          %v4039 = vld [vmem:[#allocation11 + $0x118] sm:$0xff]
          %v4040 = vld [vmem:[#allocation11 + $0x120] sm:$0xff]
          %v4041 = vld [vmem:[#allocation11 + $0x128] sm:$0xff]
          %v4042 = vld [vmem:[#allocation11 + $0x130] sm:$0xff]
          %v4043 = vld [vmem:[#allocation11 + $0x138] sm:$0xff]
          %v4044 = vld [vmem:[#allocation11 + $0x140] sm:$0xff]
          %v4045 = vld [vmem:[#allocation11 + $0x148] sm:$0xff]
          %v4046 = vld [vmem:[#allocation11 + $0x150] sm:$0xff]
          %v4047 = vld [vmem:[#allocation11 + $0x158] sm:$0xff]
          %v4048 = vld [vmem:[#allocation11 + $0x160] sm:$0xff]
          %v4049 = vld [vmem:[#allocation11 + $0x168] sm:$0xff]
          %v4050 = vld [vmem:[#allocation11 + $0x170] sm:$0xff]
          %v4051 = vld [vmem:[#allocation11 + $0x178] sm:$0xff]
          %v4052 = vld [vmem:[#allocation11 + $0x180] sm:$0xff]
          %v4053 = vld [vmem:[#allocation11 + $0x188] sm:$0xff]
          %v4054 = vld [vmem:[#allocation11 + $0x190] sm:$0xff]
          %v4055 = vld [vmem:[#allocation11 + $0x198] sm:$0xff]
          %v4056 = vld [vmem:[#allocation11 + $0x1a0] sm:$0xff]
          %v4057 = vld [vmem:[#allocation11 + $0x1a8] sm:$0xff]
          %v4058 = vld [vmem:[#allocation11 + $0x1b0] sm:$0xff]
          %v4059 = vld [vmem:[#allocation11 + $0x1b8] sm:$0xff]
          %v4060 = vld [vmem:[#allocation11 + $0x1c0] sm:$0xff]
          %v4061 = vld [vmem:[#allocation11 + $0x1c8] sm:$0xff]
          %v4062 = vld [vmem:[#allocation11 + $0x1d0] sm:$0xff]
          %v4063 = vld [vmem:[#allocation11 + $0x1d8] sm:$0xff]
          %v4064 = vld [vmem:[#allocation11 + $0x1e0] sm:$0xff]
          %v4065 = vld [vmem:[#allocation11 + $0x1e8] sm:$0xff]
          %v4066 = vld [vmem:[#allocation11 + $0x1f0] sm:$0xff]
          %v4067 = vld [vmem:[#allocation11 + $0x1f8] sm:$0xff]
          %v4068 = vld [vmem:[#allocation11 + $0x200] sm:$0xff]
          %v4069 = vld [vmem:[#allocation11 + $0x208] sm:$0xff]
          %v4070 = vld [vmem:[#allocation11 + $0x210] sm:$0xff]
          %v4071 = vld [vmem:[#allocation11 + $0x218] sm:$0xff]
          %v4072 = vld [vmem:[#allocation11 + $0x220] sm:$0xff]
          %v4073 = vld [vmem:[#allocation11 + $0x228] sm:$0xff]
          %v4074 = vld [vmem:[#allocation11 + $0x230] sm:$0xff]
          %v4075 = vld [vmem:[#allocation11 + $0x238] sm:$0xff]
          %v4076 = vld [vmem:[#allocation11 + $0x240] sm:$0xff]
          %v4077 = vld [vmem:[#allocation11 + $0x248] sm:$0xff]
          %v4078 = vld [vmem:[#allocation11 + $0x250] sm:$0xff]
          %v4079 = vld [vmem:[#allocation11 + $0x258] sm:$0xff]
          %v4080 = vld [vmem:[#allocation11 + $0x260] sm:$0xff]
          %v4081 = vld [vmem:[#allocation11 + $0x268] sm:$0xff]
          %v4082 = vld [vmem:[#allocation11 + $0x270] sm:$0xff]
          %v4083 = vld [vmem:[#allocation11 + $0x278] sm:$0xff]
          %v4084 = vld [vmem:[#allocation11 + $0x280] sm:$0xff]
          %v4085 = vld [vmem:[#allocation11 + $0x288] sm:$0xff]
          %v4086 = vld [vmem:[#allocation11 + $0x290] sm:$0xff]
          %v4087 = vld [vmem:[#allocation11 + $0x298] sm:$0xff]
          %v4088 = vld [vmem:[#allocation11 + $0x2a0] sm:$0xff]
          %v4089 = vld [vmem:[#allocation11 + $0x2a8] sm:$0xff]
          %v4090 = vld [vmem:[#allocation11 + $0x2b0] sm:$0xff]
          %v4091 = vld [vmem:[#allocation11 + $0x2b8] sm:$0xff]
          %v4092 = vld [vmem:[#allocation11 + $0x2c0] sm:$0xff]
          %v4093 = vld [vmem:[#allocation11 + $0x2c8] sm:$0xff]
          %v4094 = vld [vmem:[#allocation11 + $0x2d0] sm:$0xff]
          %v4095 = vld [vmem:[#allocation11 + $0x2d8] sm:$0xff]
          %v4096 = vld [vmem:[#allocation11 + $0x2e0] sm:$0xff]
          %v4097 = vld [vmem:[#allocation11 + $0x2e8] sm:$0xff]
          %v4098 = vld [vmem:[#allocation11 + $0x2f0] sm:$0xff]
          %v4099 = vld [vmem:[#allocation11 + $0x2f8] sm:$0xff]
          %v4100 = vlaneseq
          %v4101 = vshrl.u32 %v4100, 7
          %v4102 = vsub.s32 0, %v4101
          %v4103 = vrot.slane %v3982, %v4102
          %4104 = vmatprep.subr.mxu0 0.0
          %4105 = vmatpush1.msra.mxu0 %v4004
          %4106 = vmatprep.subr.mxu0 0.0
          %4107 = vmatpush1.msra.mxu0 %v4005
          %4108 = vmatprep.subr.mxu0 0.0
          %4109 = vmatpush1.msra.mxu0 %v4006
          %4110 = vmatprep.subr.mxu0 0.0
          %4111 = vmatpush1.msra.mxu0 %v4007
          %4112 = vmatprep.subr.mxu0 0.0
          %4113 = vmatpush1.msra.mxu0 %v4008
          %4114 = vmatprep.subr.mxu0 0.0
          %4115 = vmatpush1.msra.mxu0 %v4009
          %4116 = vmatprep.subr.mxu0 0.0
          %4117 = vmatpush1.msra.mxu0 %v4010
          %4118 = vmatprep.subr.mxu0 0.0
          %4119 = vmatpush1.msra.mxu0 %v4011
          %4120 = vmatprep.subr.mxu0 0.0
          %4121 = vmatpush1.msra.mxu0 %v4012
          %4122 = vmatprep.subr.mxu0 0.0
          %4123 = vmatpush1.msra.mxu0 %v4013
          %4124 = vmatprep.subr.mxu0 0.0
          %4125 = vmatpush1.msra.mxu0 %v4014
          %4126 = vmatprep.subr.mxu0 0.0
          %4127 = vmatpush1.msra.mxu0 %v4015
          %4128 = vmatprep.subr.mxu0 0.0
          %4129 = vmatpush1.msra.mxu0 %v4016
          %4130 = vmatprep.subr.mxu0 0.0
          %4131 = vmatpush1.msra.mxu0 %v4017
          %4132 = vmatprep.subr.mxu0 0.0
          %4133 = vmatpush1.msra.mxu0 %v4018
          %4134 = vmatprep.subr.mxu0 0.0
          %4135 = vmatpush1.msra.mxu0 %v4019
          %4136 = vmatprep.subr.mxu0 0.0
          %4137 = vmatpush1.msra.mxu0 %v4020
          %4138 = vmatprep.subr.mxu0 0.0
          %4139 = vmatpush1.msra.mxu0 %v4021
          %4140 = vmatprep.subr.mxu0 0.0
          %4141 = vmatpush1.msra.mxu0 %v4022
          %4142 = vmatprep.subr.mxu0 0.0
          %4143 = vmatpush1.msra.mxu0 %v4023
          %4144 = vmatprep.subr.mxu0 0.0
          %4145 = vmatpush1.msra.mxu0 %v4024
          %4146 = vmatprep.subr.mxu0 0.0
          %4147 = vmatpush1.msra.mxu0 %v4025
          %4148 = vmatprep.subr.mxu0 0.0
          %4149 = vmatpush1.msra.mxu0 %v4026
          %4150 = vmatprep.subr.mxu0 0.0
          %4151 = vmatpush1.msra.mxu0 %v4027
          %4152 = vmatprep.subr.mxu0 0.0
          %4153 = vmatpush1.msra.mxu0 %v4028
          %4154 = vmatprep.subr.mxu0 0.0
          %4155 = vmatpush1.msra.mxu0 %v4029
          %4156 = vmatprep.subr.mxu0 0.0
          %4157 = vmatpush1.msra.mxu0 %v4030
          %4158 = vmatprep.subr.mxu0 0.0
          %4159 = vmatpush1.msra.mxu0 %v4031
          %4160 = vmatprep.subr.mxu0 0.0
          %4161 = vmatpush1.msra.mxu0 %v4032
          %4162 = vmatprep.subr.mxu0 0.0
          %4163 = vmatpush1.msra.mxu0 %v4033
          %4164 = vmatprep.subr.mxu0 0.0
          %4165 = vmatpush1.msra.mxu0 %v4034
          %4166 = vmatprep.subr.mxu0 0.0
          %4167 = vmatpush1.msra.mxu0 %v4035
          %4168 = vmatprep.mubr.f32.mxu0 %v3999
          %4169 = vmatmul.mubr.f32.gmra.mrb[0].mxu0 %v3998
          %v4170 = vpop.f32.mrb[0].mxu0
          %v4171 = vadd.f32 %v4103, %v4170
          %v4172 = vpop.f32.mrb[0].mxu0
          %4173 = vdwg.mxu0
          %4174 = vmatprep.subr.mxu0 0.0
          %4175 = vmatpush1.msra.mxu0 %v4036
          %4176 = vmatprep.subr.mxu0 0.0
          %4177 = vmatpush1.msra.mxu0 %v4037
          %4178 = vmatprep.subr.mxu0 0.0
          %4179 = vmatpush1.msra.mxu0 %v4038
          %4180 = vmatprep.subr.mxu0 0.0
          %4181 = vmatpush1.msra.mxu0 %v4039
          %4182 = vmatprep.subr.mxu0 0.0
          %4183 = vmatpush1.msra.mxu0 %v4040
          %4184 = vmatprep.subr.mxu0 0.0
          %4185 = vmatpush1.msra.mxu0 %v4041
          %4186 = vmatprep.subr.mxu0 0.0
          %4187 = vmatpush1.msra.mxu0 %v4042
          %4188 = vmatprep.subr.mxu0 0.0
          %4189 = vmatpush1.msra.mxu0 %v4043
          %4190 = vmatprep.subr.mxu0 0.0
          %4191 = vmatpush1.msra.mxu0 %v4044
          %4192 = vmatprep.subr.mxu0 0.0
          %4193 = vmatpush1.msra.mxu0 %v4045
          %4194 = vmatprep.subr.mxu0 0.0
          %4195 = vmatpush1.msra.mxu0 %v4046
          %4196 = vmatprep.subr.mxu0 0.0
          %4197 = vmatpush1.msra.mxu0 %v4047
          %4198 = vmatprep.subr.mxu0 0.0
          %4199 = vmatpush1.msra.mxu0 %v4048
          %4200 = vmatprep.subr.mxu0 0.0
          %4201 = vmatpush1.msra.mxu0 %v4049
          %4202 = vmatprep.subr.mxu0 0.0
          %4203 = vmatpush1.msra.mxu0 %v4050
          %4204 = vmatprep.subr.mxu0 0.0
          %4205 = vmatpush1.msra.mxu0 %v4051
          %4206 = vmatprep.subr.mxu0 0.0
          %4207 = vmatpush1.msra.mxu0 %v4052
          %4208 = vmatprep.subr.mxu0 0.0
          %4209 = vmatpush1.msra.mxu0 %v4053
          %4210 = vmatprep.subr.mxu0 0.0
          %4211 = vmatpush1.msra.mxu0 %v4054
          %4212 = vmatprep.subr.mxu0 0.0
          %4213 = vmatpush1.msra.mxu0 %v4055
          %4214 = vmatprep.subr.mxu0 0.0
          %4215 = vmatpush1.msra.mxu0 %v4056
          %4216 = vmatprep.subr.mxu0 0.0
          %4217 = vmatpush1.msra.mxu0 %v4057
          %4218 = vmatprep.subr.mxu0 0.0
          %4219 = vmatpush1.msra.mxu0 %v4058
          %4220 = vmatprep.subr.mxu0 0.0
          %4221 = vmatpush1.msra.mxu0 %v4059
          %4222 = vmatprep.subr.mxu0 0.0
          %4223 = vmatpush1.msra.mxu0 %v4060
          %4224 = vmatprep.subr.mxu0 0.0
          %4225 = vmatpush1.msra.mxu0 %v4061
          %4226 = vmatprep.subr.mxu0 0.0
          %4227 = vmatpush1.msra.mxu0 %v4062
          %4228 = vmatprep.subr.mxu0 0.0
          %4229 = vmatpush1.msra.mxu0 %v4063
          %4230 = vmatprep.subr.mxu0 0.0
          %4231 = vmatpush1.msra.mxu0 %v4064
          %4232 = vmatprep.subr.mxu0 0.0
          %4233 = vmatpush1.msra.mxu0 %v4065
          %4234 = vmatprep.subr.mxu0 0.0
          %4235 = vmatpush1.msra.mxu0 %v4066
          %4236 = vmatprep.subr.mxu0 0.0
          %4237 = vmatpush1.msra.mxu0 %v4067
          %4238 = vmatprep.mubr.f32.mxu0 %v4001
          %4239 = vmatmul.mubr.f32.gmra.mrb[0].mxu0 %v4000
          %v4240 = vpop.f32.mrb[0].mxu0
          %v4241 = vadd.f32 %v4171, %v4240
          %v4242 = vpop.f32.mrb[0].mxu0
          %4243 = vdwg.mxu0
          %4244 = vmatprep.subr.mxu0 0.0
          %4245 = vmatpush1.msra.mxu0 %v4068
          %4246 = vmatprep.subr.mxu0 0.0
          %4247 = vmatpush1.msra.mxu0 %v4069
          %4248 = vmatprep.subr.mxu0 0.0
          %4249 = vmatpush1.msra.mxu0 %v4070
          %4250 = vmatprep.subr.mxu0 0.0
          %4251 = vmatpush1.msra.mxu0 %v4071
          %4252 = vmatprep.subr.mxu0 0.0
          %4253 = vmatpush1.msra.mxu0 %v4072
          %4254 = vmatprep.subr.mxu0 0.0
          %4255 = vmatpush1.msra.mxu0 %v4073
          %4256 = vmatprep.subr.mxu0 0.0
          %4257 = vmatpush1.msra.mxu0 %v4074
          %4258 = vmatprep.subr.mxu0 0.0
          %4259 = vmatpush1.msra.mxu0 %v4075
          %4260 = vmatprep.subr.mxu0 0.0
          %4261 = vmatpush1.msra.mxu0 %v4076
          %4262 = vmatprep.subr.mxu0 0.0
          %4263 = vmatpush1.msra.mxu0 %v4077
          %4264 = vmatprep.subr.mxu0 0.0
          %4265 = vmatpush1.msra.mxu0 %v4078
          %4266 = vmatprep.subr.mxu0 0.0
          %4267 = vmatpush1.msra.mxu0 %v4079
          %4268 = vmatprep.subr.mxu0 0.0
          %4269 = vmatpush1.msra.mxu0 %v4080
          %4270 = vmatprep.subr.mxu0 0.0
          %4271 = vmatpush1.msra.mxu0 %v4081
          %4272 = vmatprep.subr.mxu0 0.0
          %4273 = vmatpush1.msra.mxu0 %v4082
          %4274 = vmatprep.subr.mxu0 0.0
          %4275 = vmatpush1.msra.mxu0 %v4083
          %4276 = vmatprep.subr.mxu0 0.0
          %4277 = vmatpush1.msra.mxu0 %v4084
          %4278 = vmatprep.subr.mxu0 0.0
          %4279 = vmatpush1.msra.mxu0 %v4085
          %4280 = vmatprep.subr.mxu0 0.0
          %4281 = vmatpush1.msra.mxu0 %v4086
          %4282 = vmatprep.subr.mxu0 0.0
          %4283 = vmatpush1.msra.mxu0 %v4087
          %4284 = vmatprep.subr.mxu0 0.0
          %4285 = vmatpush1.msra.mxu0 %v4088
          %4286 = vmatprep.subr.mxu0 0.0
          %4287 = vmatpush1.msra.mxu0 %v4089
          %4288 = vmatprep.subr.mxu0 0.0
          %4289 = vmatpush1.msra.mxu0 %v4090
          %4290 = vmatprep.subr.mxu0 0.0
          %4291 = vmatpush1.msra.mxu0 %v4091
          %4292 = vmatprep.subr.mxu0 0.0
          %4293 = vmatpush1.msra.mxu0 %v4092
          %4294 = vmatprep.subr.mxu0 0.0
          %4295 = vmatpush1.msra.mxu0 %v4093
          %4296 = vmatprep.subr.mxu0 0.0
          %4297 = vmatpush1.msra.mxu0 %v4094
          %4298 = vmatprep.subr.mxu0 0.0
          %4299 = vmatpush1.msra.mxu0 %v4095
          %4300 = vmatprep.subr.mxu0 0.0
          %4301 = vmatpush1.msra.mxu0 %v4096
          %4302 = vmatprep.subr.mxu0 0.0
          %4303 = vmatpush1.msra.mxu0 %v4097
          %4304 = vmatprep.subr.mxu0 0.0
          %4305 = vmatpush1.msra.mxu0 %v4098
          %4306 = vmatprep.subr.mxu0 0.0
          %4307 = vmatpush1.msra.mxu0 %v4099
          %4308 = vmatprep.mubr.f32.mxu0 %v4003
          %4309 = vmatmul.mubr.f32.gmra.mrb[0].mxu0 %v4002
          %v4310 = vpop.f32.mrb[0].mxu0
          %v4311 = vadd.f32 %v4241, %v4310
          %v4312 = vpop.f32.mrb[0].mxu0
          %4313 = vdwg.mxu0
          %4314 = vst [vmem:[#allocation4] sm:$0xff] %v4311
          %v4315 = vld [vmem:[#allocation10] sm:$0xff]
          %v4316 = vld [vmem:[#allocation10 + $0x8] sm:$0xff]
          %v4317 = vld [vmem:[#allocation10 + $0x10] sm:$0xff]
          %v4318 = vld [vmem:[#allocation11 + $0x300] sm:$0xff]
          %v4319 = vld [vmem:[#allocation11 + $0x308] sm:$0xff]
          %v4320 = vld [vmem:[#allocation11 + $0x310] sm:$0xff]
          %v4321 = vld [vmem:[#allocation11 + $0x318] sm:$0xff]
          %v4322 = vld [vmem:[#allocation11 + $0x320] sm:$0xff]
          %v4323 = vld [vmem:[#allocation11 + $0x328] sm:$0xff]
          %v4324 = vld [vmem:[#allocation11 + $0x330] sm:$0xff]
          %v4325 = vld [vmem:[#allocation11 + $0x338] sm:$0xff]
          %v4326 = vld [vmem:[#allocation11 + $0x340] sm:$0xff]
          %v4327 = vld [vmem:[#allocation11 + $0x348] sm:$0xff]
          %v4328 = vld [vmem:[#allocation11 + $0x350] sm:$0xff]
          %v4329 = vld [vmem:[#allocation11 + $0x358] sm:$0xff]
          %v4330 = vld [vmem:[#allocation11 + $0x360] sm:$0xff]
          %v4331 = vld [vmem:[#allocation11 + $0x368] sm:$0xff]
          %v4332 = vld [vmem:[#allocation11 + $0x370] sm:$0xff]
          %v4333 = vld [vmem:[#allocation11 + $0x378] sm:$0xff]
          %v4334 = vld [vmem:[#allocation11 + $0x380] sm:$0xff]
          %v4335 = vld [vmem:[#allocation11 + $0x388] sm:$0xff]
          %v4336 = vld [vmem:[#allocation11 + $0x390] sm:$0xff]
          %v4337 = vld [vmem:[#allocation11 + $0x398] sm:$0xff]
          %v4338 = vld [vmem:[#allocation11 + $0x3a0] sm:$0xff]
          %v4339 = vld [vmem:[#allocation11 + $0x3a8] sm:$0xff]
          %v4340 = vld [vmem:[#allocation11 + $0x3b0] sm:$0xff]
          %v4341 = vld [vmem:[#allocation11 + $0x3b8] sm:$0xff]
          %v4342 = vld [vmem:[#allocation11 + $0x3c0] sm:$0xff]
          %v4343 = vld [vmem:[#allocation11 + $0x3c8] sm:$0xff]
          %v4344 = vld [vmem:[#allocation11 + $0x3d0] sm:$0xff]
          %v4345 = vld [vmem:[#allocation11 + $0x3d8] sm:$0xff]
          %v4346 = vld [vmem:[#allocation11 + $0x3e0] sm:$0xff]
          %v4347 = vld [vmem:[#allocation11 + $0x3e8] sm:$0xff]
          %v4348 = vld [vmem:[#allocation11 + $0x3f0] sm:$0xff]
          %v4349 = vld [vmem:[#allocation11 + $0x3f8] sm:$0xff]
          %v4350 = vld [vmem:[#allocation11 + $0x400] sm:$0xff]
          %v4351 = vld [vmem:[#allocation11 + $0x408] sm:$0xff]
          %v4352 = vld [vmem:[#allocation11 + $0x410] sm:$0xff]
          %v4353 = vld [vmem:[#allocation11 + $0x418] sm:$0xff]
          %v4354 = vld [vmem:[#allocation11 + $0x420] sm:$0xff]
          %v4355 = vld [vmem:[#allocation11 + $0x428] sm:$0xff]
          %v4356 = vld [vmem:[#allocation11 + $0x430] sm:$0xff]
          %v4357 = vld [vmem:[#allocation11 + $0x438] sm:$0xff]
          %v4358 = vld [vmem:[#allocation11 + $0x440] sm:$0xff]
          %v4359 = vld [vmem:[#allocation11 + $0x448] sm:$0xff]
          %v4360 = vld [vmem:[#allocation11 + $0x450] sm:$0xff]
          %v4361 = vld [vmem:[#allocation11 + $0x458] sm:$0xff]
          %v4362 = vld [vmem:[#allocation11 + $0x460] sm:$0xff]
          %v4363 = vld [vmem:[#allocation11 + $0x468] sm:$0xff]
          %v4364 = vld [vmem:[#allocation11 + $0x470] sm:$0xff]
          %v4365 = vld [vmem:[#allocation11 + $0x478] sm:$0xff]
          %v4366 = vlaneseq
          %v4367 = vshrl.u32 %v4366, 7
          %v4368 = vsub.s32 0, %v4367
          %v4369 = vrot.slane %v3983, %v4368
          %4370 = vmatprep.subr.mxu0 0.0
          %4371 = vmatpush1.msra.mxu0 %v4318
          %4372 = vmatprep.subr.mxu0 0.0
          %4373 = vmatpush1.msra.mxu0 %v4319
          %4374 = vmatprep.subr.mxu0 0.0
          %4375 = vmatpush1.msra.mxu0 %v4320
          %4376 = vmatprep.subr.mxu0 0.0
          %4377 = vmatpush1.msra.mxu0 %v4321
          %4378 = vmatprep.subr.mxu0 0.0
          %4379 = vmatpush1.msra.mxu0 %v4322
          %4380 = vmatprep.subr.mxu0 0.0
          %4381 = vmatpush1.msra.mxu0 %v4323
          %4382 = vmatprep.subr.mxu0 0.0
          %4383 = vmatpush1.msra.mxu0 %v4324
          %4384 = vmatprep.subr.mxu0 0.0
          %4385 = vmatpush1.msra.mxu0 %v4325
          %4386 = vmatprep.subr.mxu0 0.0
          %4387 = vmatpush1.msra.mxu0 %v4326
          %4388 = vmatprep.subr.mxu0 0.0
          %4389 = vmatpush1.msra.mxu0 %v4327
          %4390 = vmatprep.subr.mxu0 0.0
          %4391 = vmatpush1.msra.mxu0 %v4328
          %4392 = vmatprep.subr.mxu0 0.0
          %4393 = vmatpush1.msra.mxu0 %v4329
          %4394 = vmatprep.subr.mxu0 0.0
          %4395 = vmatpush1.msra.mxu0 %v4330
          %4396 = vmatprep.subr.mxu0 0.0
          %4397 = vmatpush1.msra.mxu0 %v4331
          %4398 = vmatprep.subr.mxu0 0.0
          %4399 = vmatpush1.msra.mxu0 %v4332
          %4400 = vmatprep.subr.mxu0 0.0
          %4401 = vmatpush1.msra.mxu0 %v4333
          %4402 = vmatprep.subr.mxu0 0.0
          %4403 = vmatpush1.msra.mxu0 %v4334
          %4404 = vmatprep.subr.mxu0 0.0
          %4405 = vmatpush1.msra.mxu0 %v4335
          %4406 = vmatprep.subr.mxu0 0.0
          %4407 = vmatpush1.msra.mxu0 %v4336
          %4408 = vmatprep.subr.mxu0 0.0
          %4409 = vmatpush1.msra.mxu0 %v4337
          %4410 = vmatprep.subr.mxu0 0.0
          %4411 = vmatpush1.msra.mxu0 %v4338
          %4412 = vmatprep.subr.mxu0 0.0
          %4413 = vmatpush1.msra.mxu0 %v4339
          %4414 = vmatprep.subr.mxu0 0.0
          %4415 = vmatpush1.msra.mxu0 %v4340
          %4416 = vmatprep.subr.mxu0 0.0
          %4417 = vmatpush1.msra.mxu0 %v4341
          %4418 = vmatprep.subr.mxu0 0.0
          %4419 = vmatpush1.msra.mxu0 %v4342
          %4420 = vmatprep.subr.mxu0 0.0
          %4421 = vmatpush1.msra.mxu0 %v4343
          %4422 = vmatprep.subr.mxu0 0.0
          %4423 = vmatpush1.msra.mxu0 %v4344
          %4424 = vmatprep.subr.mxu0 0.0
          %4425 = vmatpush1.msra.mxu0 %v4345
          %4426 = vmatprep.subr.mxu0 0.0
          %4427 = vmatpush1.msra.mxu0 %v4346
          %4428 = vmatprep.subr.mxu0 0.0
          %4429 = vmatpush1.msra.mxu0 %v4347
          %4430 = vmatprep.subr.mxu0 0.0
          %4431 = vmatpush1.msra.mxu0 %v4348
          %4432 = vmatprep.subr.mxu0 0.0
          %4433 = vmatpush1.msra.mxu0 %v4349
          %4434 = vmatprep.mubr.f32.mxu0 %v4316
          %4435 = vmatmul.mubr.f32.gmra.mrb[0].mxu0 %v4315
          %v4436 = vpop.f32.mrb[0].mxu0
          %v4437 = vadd.f32 %v4369, %v4436
          %v4438 = vpop.f32.mrb[0].mxu0
          %4439 = vdwg.mxu0
          %4440 = vmatprep.subr.mxu0 0.0
          %4441 = vmatpush1.msra.mxu0 %v4350
          %4442 = vmatprep.subr.mxu0 0.0
          %4443 = vmatpush1.msra.mxu0 %v4351
          %4444 = vmatprep.subr.mxu0 0.0
          %4445 = vmatpush1.msra.mxu0 %v4352
          %4446 = vmatprep.subr.mxu0 0.0
          %4447 = vmatpush1.msra.mxu0 %v4353
          %4448 = vmatprep.subr.mxu0 0.0
          %4449 = vmatpush1.msra.mxu0 %v4354
          %4450 = vmatprep.subr.mxu0 0.0
          %4451 = vmatpush1.msra.mxu0 %v4355
          %4452 = vmatprep.subr.mxu0 0.0
          %4453 = vmatpush1.msra.mxu0 %v4356
          %4454 = vmatprep.subr.mxu0 0.0
          %4455 = vmatpush1.msra.mxu0 %v4357
          %4456 = vmatprep.subr.mxu0 0.0
          %4457 = vmatpush1.msra.mxu0 %v4358
          %4458 = vmatprep.subr.mxu0 0.0
          %4459 = vmatpush1.msra.mxu0 %v4359
          %4460 = vmatprep.subr.mxu0 0.0
          %4461 = vmatpush1.msra.mxu0 %v4360
          %4462 = vmatprep.subr.mxu0 0.0
          %4463 = vmatpush1.msra.mxu0 %v4361
          %4464 = vmatprep.subr.mxu0 0.0
          %4465 = vmatpush1.msra.mxu0 %v4362
          %4466 = vmatprep.subr.mxu0 0.0
          %4467 = vmatpush1.msra.mxu0 %v4363
          %4468 = vmatprep.subr.mxu0 0.0
          %4469 = vmatpush1.msra.mxu0 %v4364
          %4470 = vmatprep.subr.mxu0 0.0
          %4471 = vmatpush1.msra.mxu0 %v4365
          %4472 = vmatprep.subr.mxu0 0.0
          %4473 = vmatpush1.msra.mxu0 0.0
          %4474 = vmatprep.subr.mxu0 0.0
          %4475 = vmatpush1.msra.mxu0 0.0
          %4476 = vmatprep.subr.mxu0 0.0
          %4477 = vmatpush1.msra.mxu0 0.0
          %4478 = vmatprep.subr.mxu0 0.0
          %4479 = vmatpush1.msra.mxu0 0.0
          %4480 = vmatprep.subr.mxu0 0.0
          %4481 = vmatpush1.msra.mxu0 0.0
          %4482 = vmatprep.subr.mxu0 0.0
          %4483 = vmatpush1.msra.mxu0 0.0
          %4484 = vmatprep.subr.mxu0 0.0
          %4485 = vmatpush1.msra.mxu0 0.0
          %4486 = vmatprep.subr.mxu0 0.0
          %4487 = vmatpush1.msra.mxu0 0.0
          %4488 = vmatprep.subr.mxu0 0.0
          %4489 = vmatpush1.msra.mxu0 0.0
          %4490 = vmatprep.subr.mxu0 0.0
          %4491 = vmatpush1.msra.mxu0 0.0
          %4492 = vmatprep.subr.mxu0 0.0
          %4493 = vmatpush1.msra.mxu0 0.0
          %4494 = vmatprep.subr.mxu0 0.0
          %4495 = vmatpush1.msra.mxu0 0.0
          %4496 = vmatprep.subr.mxu0 0.0
          %4497 = vmatpush1.msra.mxu0 0.0
          %4498 = vmatprep.subr.mxu0 0.0
          %4499 = vmatpush1.msra.mxu0 0.0
          %4500 = vmatprep.subr.mxu0 0.0
          %4501 = vmatpush1.msra.mxu0 0.0
          %4502 = vmatprep.subr.mxu0 0.0
          %4503 = vmatpush1.msra.mxu0 0.0
          %4504 = vmatprep.mubr.f32.mxu0 0.0
          %4505 = vmatmul.mubr.f32.gmra.mrb[0].mxu0 %v4317
          %v4506 = vpop.f32.mrb[0].mxu0
          %v4507 = vadd.f32 %v4437, %v4506
          %v4508 = vpop.f32.mrb[0].mxu0
          %4509 = vdwg.mxu0
          %4510 = vst [vmem:[#allocation4 + $0x8] sm:$0xff] %v4507
          %v4511 = vld [vmem:[#allocation4] sm:$0xff]
          %v4512 = vld [vmem:[#allocation4 + $0x8] sm:$0xff]
          %v4513 = vrot.slane %v4511, 4
          %v4514 = vadd.f32 %v4511, %v4513
          %v4515 = vrot.slane %v4514, 2
          %v4516 = vadd.f32 %v4514, %v4515
          %v4517 = vrot.slane %v4516, 1
          %v4518 = vadd.f32 %v4516, %v4517
          %v4519 = vrot.slane %v4512, 4
          %v4520 = vadd.f32 %v4512, %v4519
          %v4521 = vrot.slane %v4520, 2
          %v4522 = vadd.f32 %v4520, %v4521
          %v4523 = vrot.slane %v4522, 1
          %v4524 = vadd.f32 %v4522, %v4523
          %v4525 = vrcp.pop 8.0
          %v4526 = vmul.f32 %v4518, %v4525
          %v4527 = vmul.f32 %v4524, %v4525
          %v4528 = vsub.f32 %v4511, %v4526
          %v4529 = vsub.f32 %v4512, %v4527
          %v4530 = vmul.f32 %v4528, %v4528
          %v4531 = vmul.f32 %v4529, %v4529
          %v4532 = vrot.slane %v4530, 4
          %v4533 = vadd.f32 %v4530, %v4532
          %v4534 = vrot.slane %v4533, 2
          %v4535 = vadd.f32 %v4533, %v4534
          %v4536 = vrot.slane %v4535, 1
          %v4537 = vadd.f32 %v4535, %v4536
          %v4538 = vrot.slane %v4531, 4
          %v4539 = vadd.f32 %v4531, %v4538
          %v4540 = vrot.slane %v4539, 2
          %v4541 = vadd.f32 %v4539, %v4540
          %v4542 = vrot.slane %v4541, 1
          %v4543 = vadd.f32 %v4541, %v4542
          %v4544 = vmul.f32 %v4537, %v4525
          %v4545 = vmul.f32 %v4543, %v4525
          %v4546 = vadd.f32 %v4544, 1e-05
          %v4547 = vadd.f32 %v4545, 1e-05
          %v4548 = vrsqrt.pop %v4546
          %v4549 = vrsqrt.pop %v4547
          %v4550 = vmul.f32 %v4528, %v4548
          %v4551 = vmul.f32 %v4529, %v4549
          %v4552 = vlaneseq
          %v4553 = vshrl.u32 %v4552, 7
          %v4554 = vsub.s32 1, %v4553
          %v4555 = vrot.slane %v3982, %v4554
          %v4556 = vlaneseq
          %v4557 = vshrl.u32 %v4556, 7
          %v4558 = vsub.s32 1, %v4557
          %v4559 = vrot.slane %v3983, %v4558
          %v4560 = vmul.f32 %v4550, %v4555
          %v4561 = vmul.f32 %v4551, %v4559
          %v4562 = vlaneseq
          %v4563 = vshrl.u32 %v4562, 7
          %v4564 = vsub.s32 2, %v4563
          %v4565 = vrot.slane %v3982, %v4564
          %v4566 = vlaneseq
          %v4567 = vshrl.u32 %v4566, 7
          %v4568 = vsub.s32 2, %v4567
          %v4569 = vrot.slane %v3983, %v4568
          %v4570 = vadd.f32 %v4560, %v4565
          %v4571 = vadd.f32 %v4561, %v4569
          %v4572 = vrot.slane %v4570, 4
          %v4573 = vadd.f32 %v4570, %v4572
          %v4574 = vrot.slane %v4573, 2
          %v4575 = vadd.f32 %v4573, %v4574
          %v4576 = vrot.slane %v4575, 1
          %v4577 = vadd.f32 %v4575, %v4576
          %v4578 = vrot.slane %v4571, 4
          %v4579 = vadd.f32 %v4571, %v4578
          %v4580 = vrot.slane %v4579, 2
          %v4581 = vadd.f32 %v4579, %v4580
          %v4582 = vrot.slane %v4581, 1
          %v4583 = vadd.f32 %v4581, %v4582
          %v4584 = vmul.f32 %v4577, %v4525
          %v4585 = vmul.f32 %v4583, %v4525
          %v4586 = vsub.f32 %v4570, %v4584
          %v4587 = vsub.f32 %v4571, %v4585
          %v4588 = vmul.f32 %v4586, %v4586
          %v4589 = vmul.f32 %v4587, %v4587
          %v4590 = vrot.slane %v4588, 4
          %v4591 = vadd.f32 %v4588, %v4590
          %v4592 = vrot.slane %v4591, 2
          %v4593 = vadd.f32 %v4591, %v4592
          %v4594 = vrot.slane %v4593, 1
          %v4595 = vadd.f32 %v4593, %v4594
          %v4596 = vrot.slane %v4589, 4
          %v4597 = vadd.f32 %v4589, %v4596
          %v4598 = vrot.slane %v4597, 2
          %v4599 = vadd.f32 %v4597, %v4598
          %v4600 = vrot.slane %v4599, 1
          %v4601 = vadd.f32 %v4599, %v4600
          %v4602 = vmul.f32 %v4595, %v4525
          %v4603 = vmul.f32 %v4601, %v4525
          %v4604 = vadd.f32 %v4602, 1e-05
          %v4605 = vadd.f32 %v4603, 1e-05
          %v4606 = vrsqrt.pop %v4604
          %v4607 = vrsqrt.pop %v4605
          %v4608 = vmul.f32 %v4586, %v4606
          %v4609 = vmul.f32 %v4587, %v4607
          %v4610 = vlaneseq
          %v4611 = vshrl.u32 %v4610, 7
          %v4612 = vsub.s32 3, %v4611
          %v4613 = vrot.slane %v3982, %v4612
          %v4614 = vlaneseq
          %v4615 = vshrl.u32 %v4614, 7
          %v4616 = vsub.s32 3, %v4615
          %v4617 = vrot.slane %v3983, %v4616
          %v4618 = vmul.f32 %v4608, %v4613
          %v4619 = vmul.f32 %v4609, %v4617
          %v4620 = vlaneseq
          %v4621 = vshrl.u32 %v4620, 7
          %v4622 = vsub.s32 4, %v4621
          %v4623 = vrot.slane %v3982, %v4622
          %v4624 = vlaneseq
          %v4625 = vshrl.u32 %v4624, 7
          %v4626 = vsub.s32 4, %v4625
          %v4627 = vrot.slane %v3983, %v4626
          %v4628 = vadd.f32 %v4618, %v4623
          %v4629 = vadd.f32 %v4619, %v4627
          %v4630 = vld [vmem:[#allocation13] sm:$0xff]
          %v4631 = vld [vmem:[#allocation13 + $0x8] sm:$0xff]
          %v4632 = vld [vmem:[#allocation13 + $0x10] sm:$0xff]
          %v4633 = vld [vmem:[#allocation13 + $0x18] sm:$0xff]
          %v4634 = vld [vmem:[#allocation13 + $0x20] sm:$0xff]
          %v4635 = vld [vmem:[#allocation13 + $0x28] sm:$0xff]
          %v4636 = vld [vmem:[#allocation13 + $0x30] sm:$0xff]
          %v4637 = vld [vmem:[#allocation13 + $0x38] sm:$0xff]
          %v4638 = vld [vmem:[#allocation13 + $0x40] sm:$0xff]
          %v4639 = vld [vmem:[#allocation13 + $0x48] sm:$0xff]
          %v4640 = vld [vmem:[#allocation13 + $0x50] sm:$0xff]
          %v4641 = vld [vmem:[#allocation13 + $0x58] sm:$0xff]
          %v4642 = vld [vmem:[#allocation13 + $0x60] sm:$0xff]
          %v4643 = vld [vmem:[#allocation13 + $0x68] sm:$0xff]
          %v4644 = vld [vmem:[#allocation13 + $0x70] sm:$0xff]
          %v4645 = vld [vmem:[#allocation13 + $0x78] sm:$0xff]
          %v4646 = vld [vmem:[#allocation13 + $0x80] sm:$0xff]
          %v4647 = vld [vmem:[#allocation13 + $0x88] sm:$0xff]
          %v4648 = vld [vmem:[#allocation13 + $0x90] sm:$0xff]
          %v4649 = vld [vmem:[#allocation13 + $0x98] sm:$0xff]
          %v4650 = vld [vmem:[#allocation13 + $0xa0] sm:$0xff]
          %v4651 = vld [vmem:[#allocation13 + $0xa8] sm:$0xff]
          %v4652 = vld [vmem:[#allocation13 + $0xb0] sm:$0xff]
          %v4653 = vld [vmem:[#allocation13 + $0xb8] sm:$0xff]
          %v4654 = vld [vmem:[#allocation13 + $0xc0] sm:$0xff]
          %v4655 = vld [vmem:[#allocation13 + $0xc8] sm:$0xff]
          %v4656 = vld [vmem:[#allocation13 + $0xd0] sm:$0xff]
          %v4657 = vld [vmem:[#allocation13 + $0xd8] sm:$0xff]
          %v4658 = vld [vmem:[#allocation13 + $0xe0] sm:$0xff]
          %v4659 = vld [vmem:[#allocation13 + $0xe8] sm:$0xff]
          %v4660 = vld [vmem:[#allocation13 + $0xf0] sm:$0xff]
          %v4661 = vld [vmem:[#allocation13 + $0xf8] sm:$0xff]
          %v4662 = vlaneseq
          %v4663 = vshrl.u32 %v4662, 7
          %v4664 = vsub.s32 5, %v4663
          %v4665 = vrot.slane %v3982, %v4664
          %4666 = vmatprep.subr.mxu0 0.0
          %4667 = vmatpush1.msra.mxu0 %v4630
          %4668 = vmatprep.subr.mxu0 0.0
          %4669 = vmatpush1.msra.mxu0 %v4631
          %4670 = vmatprep.subr.mxu0 0.0
          %4671 = vmatpush1.msra.mxu0 %v4632
          %4672 = vmatprep.subr.mxu0 0.0
          %4673 = vmatpush1.msra.mxu0 %v4633
          %4674 = vmatprep.subr.mxu0 0.0
          %4675 = vmatpush1.msra.mxu0 %v4634
          %4676 = vmatprep.subr.mxu0 0.0
          %4677 = vmatpush1.msra.mxu0 %v4635
          %4678 = vmatprep.subr.mxu0 0.0
          %4679 = vmatpush1.msra.mxu0 %v4636
          %4680 = vmatprep.subr.mxu0 0.0
          %4681 = vmatpush1.msra.mxu0 %v4637
          %4682 = vmatprep.subr.mxu0 0.0
          %4683 = vmatpush1.msra.mxu0 %v4638
          %4684 = vmatprep.subr.mxu0 0.0
          %4685 = vmatpush1.msra.mxu0 %v4639
          %4686 = vmatprep.subr.mxu0 0.0
          %4687 = vmatpush1.msra.mxu0 %v4640
          %4688 = vmatprep.subr.mxu0 0.0
          %4689 = vmatpush1.msra.mxu0 %v4641
          %4690 = vmatprep.subr.mxu0 0.0
          %4691 = vmatpush1.msra.mxu0 %v4642
          %4692 = vmatprep.subr.mxu0 0.0
          %4693 = vmatpush1.msra.mxu0 %v4643
          %4694 = vmatprep.subr.mxu0 0.0
          %4695 = vmatpush1.msra.mxu0 %v4644
          %4696 = vmatprep.subr.mxu0 0.0
          %4697 = vmatpush1.msra.mxu0 %v4645
          %4698 = vmatprep.subr.mxu0 0.0
          %4699 = vmatpush1.msra.mxu0 %v4646
          %4700 = vmatprep.subr.mxu0 0.0
          %4701 = vmatpush1.msra.mxu0 %v4647
          %4702 = vmatprep.subr.mxu0 0.0
          %4703 = vmatpush1.msra.mxu0 %v4648
          %4704 = vmatprep.subr.mxu0 0.0
          %4705 = vmatpush1.msra.mxu0 %v4649
          %4706 = vmatprep.subr.mxu0 0.0
          %4707 = vmatpush1.msra.mxu0 %v4650
          %4708 = vmatprep.subr.mxu0 0.0
          %4709 = vmatpush1.msra.mxu0 %v4651
          %4710 = vmatprep.subr.mxu0 0.0
          %4711 = vmatpush1.msra.mxu0 %v4652
          %4712 = vmatprep.subr.mxu0 0.0
          %4713 = vmatpush1.msra.mxu0 %v4653
          %4714 = vmatprep.subr.mxu0 0.0
          %4715 = vmatpush1.msra.mxu0 %v4654
          %4716 = vmatprep.subr.mxu0 0.0
          %4717 = vmatpush1.msra.mxu0 %v4655
          %4718 = vmatprep.subr.mxu0 0.0
          %4719 = vmatpush1.msra.mxu0 %v4656
          %4720 = vmatprep.subr.mxu0 0.0
          %4721 = vmatpush1.msra.mxu0 %v4657
          %4722 = vmatprep.subr.mxu0 0.0
          %4723 = vmatpush1.msra.mxu0 %v4658
          %4724 = vmatprep.subr.mxu0 0.0
          %4725 = vmatpush1.msra.mxu0 %v4659
          %4726 = vmatprep.subr.mxu0 0.0
          %4727 = vmatpush1.msra.mxu0 %v4660
          %4728 = vmatprep.subr.mxu0 0.0
          %4729 = vmatpush1.msra.mxu0 %v4661
          %4730 = vmatprep.mubr.f32.mxu0 %v4629
          %4731 = vmatmul.mubr.f32.gmra.mrb[0].mxu0 %v4628
          %v4732 = vpop.f32.mrb[0].mxu0
          %v4733 = vadd.f32 %v4665, %v4732
          %v4734 = vpop.f32.mrb[0].mxu0
          %4735 = vdwg.mxu0
          %v4736 = vrot.slane %v4733, 4
          %v4737 = vadd.f32 %v4733, %v4736
          %v4738 = vrot.slane %v4737, 2
          %v4739 = vadd.f32 %v4737, %v4738
          %v4740 = vrot.slane %v4739, 1
          %v4741 = vadd.f32 %v4739, %v4740
          %v4742 = vmul.f32 %v4741, %v4525
          %v4743 = vsub.f32 %v4733, %v4742
          %v4744 = vmul.f32 %v4743, %v4743
          %v4745 = vrot.slane %v4744, 4
          %v4746 = vadd.f32 %v4744, %v4745
          %v4747 = vrot.slane %v4746, 2
          %v4748 = vadd.f32 %v4746, %v4747
          %v4749 = vrot.slane %v4748, 1
          %v4750 = vadd.f32 %v4748, %v4749
          %v4751 = vmul.f32 %v4750, %v4525
          %v4752 = vadd.f32 %v4751, 1e-05
          %v4753 = vrsqrt.pop %v4752
          %v4754 = vmul.f32 %v4743, %v4753
          %v4755 = vlaneseq
          %v4756 = vshrl.u32 %v4755, 7
          %v4757 = vsub.s32 5, %v4756
          %v4758 = vrot.slane %v3983, %v4757
          %v4759 = vmul.f32 %v4754, %v4758
          %v4760 = vlaneseq
          %v4761 = vshrl.u32 %v4760, 7
          %v4762 = vsub.s32 6, %v4761
          %v4763 = vrot.slane %v3982, %v4762
          %v4764 = vadd.f32 %v4759, %v4763
          %v4765 = vmax.f32 %v4764, 0.0
          %v4766 = vld [vmem:[#allocation13 + $0x100] sm:$0xff]
          %v4767 = vld [vmem:[#allocation13 + $0x108] sm:$0xff]
          %v4768 = vld [vmem:[#allocation13 + $0x110] sm:$0xff]
          %v4769 = vld [vmem:[#allocation13 + $0x118] sm:$0xff]
          %v4770 = vld [vmem:[#allocation13 + $0x120] sm:$0xff]
          %v4771 = vld [vmem:[#allocation13 + $0x128] sm:$0xff]
          %v4772 = vld [vmem:[#allocation13 + $0x130] sm:$0xff]
          %v4773 = vld [vmem:[#allocation13 + $0x138] sm:$0xff]
          %v4774 = vld [vmem:[#allocation13 + $0x140] sm:$0xff]
          %v4775 = vld [vmem:[#allocation13 + $0x148] sm:$0xff]
          %v4776 = vld [vmem:[#allocation13 + $0x150] sm:$0xff]
          %v4777 = vld [vmem:[#allocation13 + $0x158] sm:$0xff]
          %v4778 = vld [vmem:[#allocation13 + $0x160] sm:$0xff]
          %v4779 = vld [vmem:[#allocation13 + $0x168] sm:$0xff]
          %v4780 = vld [vmem:[#allocation13 + $0x170] sm:$0xff]
          %v4781 = vld [vmem:[#allocation13 + $0x178] sm:$0xff]
          %v4782 = vlaneseq
          %v4783 = vshrl.u32 %v4782, 7
          %v4784 = vsub.s32 6, %v4783
          %v4785 = vrot.slane %v3983, %v4784
          %4786 = vmatprep.subr.mxu0 0.0
          %4787 = vmatpush1.msra.mxu0 %v4766
          %4788 = vmatprep.subr.mxu0 0.0
          %4789 = vmatpush1.msra.mxu0 %v4767
          %4790 = vmatprep.subr.mxu0 0.0
          %4791 = vmatpush1.msra.mxu0 %v4768
          %4792 = vmatprep.subr.mxu0 0.0
          %4793 = vmatpush1.msra.mxu0 %v4769
          %4794 = vmatprep.subr.mxu0 0.0
          %4795 = vmatpush1.msra.mxu0 %v4770
          %4796 = vmatprep.subr.mxu0 0.0
          %4797 = vmatpush1.msra.mxu0 %v4771
          %4798 = vmatprep.subr.mxu0 0.0
          %4799 = vmatpush1.msra.mxu0 %v4772
          %4800 = vmatprep.subr.mxu0 0.0
          %4801 = vmatpush1.msra.mxu0 %v4773
          %4802 = vmatprep.subr.mxu0 0.0
          %4803 = vmatpush1.msra.mxu0 %v4774
          %4804 = vmatprep.subr.mxu0 0.0
          %4805 = vmatpush1.msra.mxu0 %v4775
          %4806 = vmatprep.subr.mxu0 0.0
          %4807 = vmatpush1.msra.mxu0 %v4776
          %4808 = vmatprep.subr.mxu0 0.0
          %4809 = vmatpush1.msra.mxu0 %v4777
          %4810 = vmatprep.subr.mxu0 0.0
          %4811 = vmatpush1.msra.mxu0 %v4778
          %4812 = vmatprep.subr.mxu0 0.0
          %4813 = vmatpush1.msra.mxu0 %v4779
          %4814 = vmatprep.subr.mxu0 0.0
          %4815 = vmatpush1.msra.mxu0 %v4780
          %4816 = vmatprep.subr.mxu0 0.0
          %4817 = vmatpush1.msra.mxu0 %v4781
          %4818 = vmatprep.subr.mxu0 0.0
          %4819 = vmatpush1.msra.mxu0 0.0
          %4820 = vmatprep.subr.mxu0 0.0
          %4821 = vmatpush1.msra.mxu0 0.0
          %4822 = vmatprep.subr.mxu0 0.0
          %4823 = vmatpush1.msra.mxu0 0.0
          %4824 = vmatprep.subr.mxu0 0.0
          %4825 = vmatpush1.msra.mxu0 0.0
          %4826 = vmatprep.subr.mxu0 0.0
          %4827 = vmatpush1.msra.mxu0 0.0
          %4828 = vmatprep.subr.mxu0 0.0
          %4829 = vmatpush1.msra.mxu0 0.0
          %4830 = vmatprep.subr.mxu0 0.0
          %4831 = vmatpush1.msra.mxu0 0.0
          %4832 = vmatprep.subr.mxu0 0.0
          %4833 = vmatpush1.msra.mxu0 0.0
          %4834 = vmatprep.subr.mxu0 0.0
          %4835 = vmatpush1.msra.mxu0 0.0
          %4836 = vmatprep.subr.mxu0 0.0
          %4837 = vmatpush1.msra.mxu0 0.0
          %4838 = vmatprep.subr.mxu0 0.0
          %4839 = vmatpush1.msra.mxu0 0.0
          %4840 = vmatprep.subr.mxu0 0.0
          %4841 = vmatpush1.msra.mxu0 0.0
          %4842 = vmatprep.subr.mxu0 0.0
          %4843 = vmatpush1.msra.mxu0 0.0
          %4844 = vmatprep.subr.mxu0 0.0
          %4845 = vmatpush1.msra.mxu0 0.0
          %4846 = vmatprep.subr.mxu0 0.0
          %4847 = vmatpush1.msra.mxu0 0.0
          %4848 = vmatprep.subr.mxu0 0.0
          %4849 = vmatpush1.msra.mxu0 0.0
          %4850 = vmatprep.mubr.f32.mxu0 0.0
          %4851 = vmatmul.mubr.f32.gmra.mrb[0].mxu0 %v4765
          %v4852 = vpop.f32.mrb[0].mxu0
          %v4853 = vadd.f32 %v4785, %v4852
          %v4854 = vpop.f32.mrb[0].mxu0
          %4855 = vdwg.mxu0
          %v4856 = vxor.u32 %v4853, 2147483648
          %v4857 = vmul.f32 %v4856, 1.442695
          %v4858 = vpow.pop %v4857
          %v4859 = vadd.f32 %v4858, 1.0
          %v4860 = vrcp.pop %v4859
          %v4861 = vmul.f32 1.0, %v4860
          %4862 = vst [vmem:[#allocation16] sm:$0xff] %v4861
        $region76: #{tpu_custom_call.1} parent=43 // pred_fallthru
          _
        // Predicated region
        $region77: #{tpu_custom_call.1} parent=43 // pred_check
          %p4863 = pneg %p175
        $region78: #{tpu_custom_call.1} parent=43 // pred_check_branch
          %4865 = sbr.rel (%p4863) target = $region80
        $region79: #{tpu_custom_call.1} parent=43 // pred_region
          %s4867 = ssub.s32 128, 128
          %4868 = vsyncadd [#allocation7], %s4867
          %s4870 = sshll.u32 [#allocation16], 4
          %s4871 = int_to_ptr.vmem [resolvable:$true] %s4870
          %4873 = dma.vmem_to_hbm [thread:$0]  %s4871, 128, %s6, [#allocation7]
        $region80: #{tpu_custom_call.1} parent=43 // pred_fallthru
          _
        // Predicated region
        $region81: #{tpu_custom_call.1} parent=43 // pred_check
          %p4874 = pneg %p175
        $region82: #{tpu_custom_call.1} parent=43 // pred_check_branch
          %4876 = sbr.rel (%p4874) target = $region84
        $region83: #{tpu_custom_call.1} parent=43 // pred_region
          %4877 = dma.done [#allocation7], 128
        $region84: #{tpu_custom_call.1} parent=43 // pred_fallthru
          _
      $region44: #{tpu_custom_call.1} parent=5 // pred_fallthru
        _
      %p4878 = scmp.le.s32.totalorder 2, %s21
      // Predicated region
      $region85: #{tpu_custom_call.1} parent=5 // pred_check
        %p4879 = pneg %p4878
      $region86: #{tpu_custom_call.1} parent=5 // pred_check_branch
        %4881 = sbr.rel (%p4879) target = $region88
      $region87: #{tpu_custom_call.1} parent=5 // pred_region
        %s4882 = ssub.s32 %s21, 2
      $region88: #{tpu_custom_call.1} parent=5 // pred_fallthru
        _
    $region6: #{tpu_custom_call.1} parent=1 // loop_footer
      %s25 = sadd.s32 1, %s21
    $region7: #{tpu_custom_call.1} parent=1 // loop_footer_branch
      %20 = sbr.rel target = $region3
    $region8: #{tpu_custom_call.1} parent=1 // loop_exit
      _
    %4883 = vsyncpa [#allocation6], 1
    %s4884 = scalar_lea.sflag [#allocation6], 1
    %4885 = vsyncpa %s4884, 1
    %4886 = vsyncpa [#allocation9], 1
    %s4887 = scalar_lea.sflag [#allocation9], 1
    %4888 = vsyncpa %s4887, 1
    %4889 = vsyncpa [#allocation12], 1
    %4890 = vsyncpa [#allocation15], 1
    %4891 = vsyncpa [#allocation7], 1
    %s4892 = scalar_lea.sflag [#allocation7], 1
    %4893 = vsyncpa %s4892, 1

</llo_original>
